<compile_context>
chip_gen: v7x
topology: tpu7x:2x2x1
jax: 0.10.0
libtpu: 0.0.40
codegen_flags: <defaults>
</compile_context>

<pallas_src>
import numpy as np
import jax
import jax.numpy as jnp
from jax.experimental import pallas as pl
from jax.experimental.pallas import tpu as pltpu

LANE = 128
SUBLANE = 8


def _round_up(v, m):
    return (v + m - 1) // m * m


# ----------------------------- fused Pallas kernel ---------------------------------

def _fused_cae_kernel(x_ref, *refs):
    # refs = 8 weight refs, 8 bias refs, enc_ref, dec_ref
    w_refs = refs[0:8]
    b_refs = refs[8:16]
    enc_ref = refs[16]
    dec_ref = refs[17]

    def linear_relu(h, w_ref, b_ref):
        y = jnp.dot(h, w_ref[...], preferred_element_type=jnp.float32)
        y = y + b_ref[...]
        return jnp.maximum(y, 0.0)

    h = x_ref[...]
    # encoder convs + fc1 (layers 0..3); layer 3 output is `encoded`
    for li in range(4):
        h = linear_relu(h, w_refs[li], b_refs[li])
    enc_ref[...] = h.astype(enc_ref.dtype)
    # fc2 + decoder deconvs (layers 4..7); layer 7 output is `decoded`
    for li in range(4, 8):
        h = linear_relu(h, w_refs[li], b_refs[li])
    dec_ref[...] = h.astype(dec_ref.dtype)


# ----------------------- conv -> dense-matrix expansion (init-time only) ----------------------

def conv1d_out_len(L, k, s, p):
    return (L + 2 * p - k) // s + 1


def conv1d_as_dense(w, L_in, stride, pad):
    # w: (C_out, C_in, K) numpy.  Returns M with y_flat = M @ x_flat (channel-major).
    C_out, C_in, K = w.shape
    L_out = conv1d_out_len(L_in, K, stride, pad)
    M = np.zeros((C_out * L_out, C_in * L_in), np.float32)
    for co in range(C_out):
        for l in range(L_out):
            for ci in range(C_in):
                for k in range(K):
                    i = l * stride + k - pad
                    if 0 <= i < L_in:
                        M[co * L_out + l, ci * L_in + i] += w[co, ci, k]
    return M, L_out


def convtranspose1d_as_dense(w, L_in, stride, pad):
    # w: (C_in, C_out, K) numpy (PyTorch ConvTranspose1d layout).
    C_in, C_out, K = w.shape
    L_out = (L_in - 1) * stride - 2 * pad + K
    M = np.zeros((C_out * L_out, C_in * L_in), np.float32)
    for ci in range(C_in):
        for co in range(C_out):
            for l in range(L_in):
                for k in range(K):
                    j = l * stride + k - pad
                    if 0 <= j < L_out:
                        M[co * L_out + j, ci * L_in + l] += w[ci, co, k]
    return M, L_out


# ----------------------------- parameter setup --------------------------------

def _uniform(key, shape, scale):
    return np.asarray(jax.random.uniform(key, shape, jnp.float32, -scale, scale))


def init_layers(hidden_1, key):
    """Build 8 dense (W (K,N), b (N,)) layer maps; return lane-padded kernel params and
    unpadded matrices for the plain-JAX reference."""
    ks = jax.random.split(key, 16)
    raw = []  # list of (W: (K, N) np.float32, b_flat: (N,) np.float32)
    ki = 0

    # --- encoder: Conv1d(1,8,3,3,15) -> Conv1d(8,16,3,3,15) -> Conv1d(16,16,3,3,15)
    L = 200
    for (ci, co, k, s, p) in [(1, 8, 3, 3, 15), (8, 16, 3, 3, 15), (16, 16, 3, 3, 15)]:
        sc = 1.0 / np.sqrt(ci * k)
        w = _uniform(ks[ki], (co, ci, k), sc); ki += 1
        b = _uniform(ks[ki], (co,), sc); ki += 1
        M, L = conv1d_as_dense(w, L, s, p)
        raw.append((np.ascontiguousarray(M.T), np.repeat(b, L)))
    assert L == 21

    # --- fc1: Linear(16*21 -> hidden_1) ; fc2: Linear(hidden_1 -> 16*21)
    sc = 1.0 / np.sqrt(16 * 21)
    w_fc1 = _uniform(ks[ki], (hidden_1, 16 * 21), sc); ki += 1
    b_fc1 = _uniform(ks[ki], (hidden_1,), sc); ki += 1
    raw.append((np.ascontiguousarray(w_fc1.T), b_fc1))

    sc = 1.0 / np.sqrt(hidden_1)
    w_fc2 = _uniform(ks[ki], (16 * 21, hidden_1), sc); ki += 1
    b_fc2 = _uniform(ks[ki], (16 * 21,), sc); ki += 1
    raw.append((np.ascontiguousarray(w_fc2.T), b_fc2))

    # --- decoder: ConvT(16,16,3,3,14) -> ConvT(16,8,4,3,15) -> ConvT(8,1,3,3,14)
    L = 21
    for (ci, co, k, s, p) in [(16, 16, 3, 3, 14), (16, 8, 4, 3, 15), (8, 1, 3, 3, 14)]:
        sc = 1.0 / np.sqrt(co * k)  # PyTorch fan_in for ConvTranspose weight (Cin,Cout,K)
        w = _uniform(ks[ki], (ci, co, k), sc); ki += 1
        b = _uniform(ks[ki], (co,), sc); ki += 1
        M, L = convtranspose1d_as_dense(w, L, s, p)
        raw.append((np.ascontiguousarray(M.T), np.repeat(b, L)))
    assert L == 200

    # --- lane-pad to multiples of 128 (zeros -> exact results preserved through ReLU)
    Ws_pad, bs_pad = [], []
    for (W, b) in raw:
        K, N = W.shape
        Kp, Np = _round_up(K, LANE), _round_up(N, LANE)
        Wp = np.zeros((Kp, Np), np.float32); Wp[:K, :N] = W
        bp = np.zeros((1, Np), np.float32); bp[0, :N] = b
        Ws_pad.append(jnp.asarray(Wp))
        bs_pad.append(jnp.asarray(bp))

    layers_ref = [(jnp.asarray(W), jnp.asarray(b[None, :])) for (W, b) in raw]
    return Ws_pad, bs_pad, layers_ref


# ------------------------------- forward pass ---------------------------------

def cae1_forward(x, Ws, bs, hidden_1):
    """x: (B, 1, 200) or (B, 200). Returns (encoded (B, hidden_1), decoded (B, 200))."""
    B = x.shape[0]
    x2 = x.reshape(B, -1).astype(jnp.float32)
    assert x2.shape[1] == 200

    K0p = Ws[0].shape[0]      # 256 (padded input width)
    enc_np = Ws[3].shape[1]   # 128-padded hidden_1
    dec_np = Ws[7].shape[1]   # 256 (padded output width)

    # Pad batch to a sublane multiple; tile large batches at 128 rows per grid step.
    m_pad8 = _round_up(max(B, 1), SUBLANE)
    tile_m = min(128, m_pad8)
    m_pad = _round_up(m_pad8, tile_m)
    grid_m = m_pad // tile_m

    xp = jnp.zeros((m_pad, K0p), jnp.float32).at[:B, :200].set(x2)

    in_specs = [pl.BlockSpec((tile_m, K0p), lambda i: (i, 0))]
    for W in Ws:
        in_specs.append(pl.BlockSpec(W.shape, lambda i: (0, 0)))   # weights resident
    for b in bs:
        in_specs.append(pl.BlockSpec(b.shape, lambda i: (0, 0)))
    out_specs = (
        pl.BlockSpec((tile_m, enc_np), lambda i: (i, 0)),
        pl.BlockSpec((tile_m, dec_np), lambda i: (i, 0)),
    )

    flops = 2 * m_pad * int(sum(W.shape[0] * W.shape[1] for W in Ws))
    bytes_accessed = 4 * int(
        xp.size + sum(int(W.size) for W in Ws) + sum(int(b.size) for b in bs)
        + m_pad * (enc_np + dec_np)
    )

    enc_p, dec_p = pl.pallas_call(
        _fused_cae_kernel,
        out_shape=(
            jax.ShapeDtypeStruct((m_pad, enc_np), jnp.float32),
            jax.ShapeDtypeStruct((m_pad, dec_np), jnp.float32),
        ),
        grid=(grid_m,),
        in_specs=in_specs,
        out_specs=out_specs,
        compiler_params=pltpu.CompilerParams(
            dimension_semantics=("parallel",),       # shards batch tiles across TCs on v7x
            vmem_limit_bytes=32 * 1024 * 1024,       # ~7 MB f32 weights (x2 buffered) + tiles
        ),
        cost_estimate=pl.CostEstimate(
            flops=flops, transcendentals=0, bytes_accessed=bytes_accessed),
    )(xp, *Ws, *bs)

    encoded = enc_p[:B, :hidden_1]
    decoded = dec_p[:B, :200]
    return encoded, decoded


def cae1_reference(x, layers_ref):
    """Plain-JAX reference using the same (unpadded) dense matrices."""
    h = x.reshape(x.shape[0], -1).astype(jnp.float32)
    enc = None
    for idx, (W, b) in enumerate(layers_ref):
        h = jnp.maximum(
            jnp.dot(h, W, precision=jax.lax.Precision.HIGHEST) + b, 0.0)
        if idx == 3:
            enc = h
    return enc, h


# ----------------------------------- main --------------------------------------

if __name__ == "__main__":
    hidden_1 = 16
    batch = 2

    key = jax.random.PRNGKey(0)
    k_x, k_p, k_x2 = jax.random.split(key, 3)
    Ws, bs, layers_ref = init_layers(hidden_1, k_p)

    # --- small batch (latency path, grid=(1,))
    x = jax.random.normal(k_x, (batch, 1, 200), dtype=jnp.float32)
    encoded, decoded = cae1_forward(x, Ws, bs, hidden_1)
    encoded = jax.block_until_ready(encoded)
    decoded = jax.block_until_ready(decoded)
    assert encoded.shape == (batch, hidden_1)
    assert decoded.shape == (batch, 200)

    enc_ref, dec_ref = cae1_reference(x, layers_ref)
    np.testing.assert_allclose(np.asarray(encoded), np.asarray(enc_ref), rtol=1e-4, atol=1e-4)
    np.testing.assert_allclose(np.asarray(decoded), np.asarray(dec_ref), rtol=1e-4, atol=1e-4)

    # --- larger batch exercises the tiled/parallel grid path (grid=(3,))
    big_b = 260
    xb = jax.random.normal(k_x2, (big_b, 1, 200), dtype=jnp.float32)
    enc_b, dec_b = cae1_forward(xb, Ws, bs, hidden_1)
    enc_b = jax.block_until_ready(enc_b)
    dec_b = jax.block_until_ready(dec_b)
    enc_br, dec_br = cae1_reference(xb, layers_ref)
    np.testing.assert_allclose(np.asarray(enc_b), np.asarray(enc_br), rtol=1e-4, atol=1e-4)
    np.testing.assert_allclose(np.asarray(dec_b), np.asarray(dec_br), rtol=1e-4, atol=1e-4)

    print("KERNEL_OK")
</pallas_src>

<mosaic_0001>
module attributes {stable_mosaic.version = 11 : i64} {
  func.func @_fused_cae_kernel(%arg0: i32, %arg1: memref<8x256xf32, #tpu.memory_space<vmem>>, %arg2: memref<256x640xf32, #tpu.memory_space<vmem>>, %arg3: memref<640x640xf32, #tpu.memory_space<vmem>>, %arg4: memref<640x384xf32, #tpu.memory_space<vmem>>, %arg5: memref<384x128xf32, #tpu.memory_space<vmem>>, %arg6: memref<128x384xf32, #tpu.memory_space<vmem>>, %arg7: memref<384x640xf32, #tpu.memory_space<vmem>>, %arg8: memref<640x640xf32, #tpu.memory_space<vmem>>, %arg9: memref<640x256xf32, #tpu.memory_space<vmem>>, %arg10: memref<1x640xf32, #tpu.memory_space<vmem>>, %arg11: memref<1x640xf32, #tpu.memory_space<vmem>>, %arg12: memref<1x384xf32, #tpu.memory_space<vmem>>, %arg13: memref<1x128xf32, #tpu.memory_space<vmem>>, %arg14: memref<1x384xf32, #tpu.memory_space<vmem>>, %arg15: memref<1x640xf32, #tpu.memory_space<vmem>>, %arg16: memref<1x640xf32, #tpu.memory_space<vmem>>, %arg17: memref<1x256xf32, #tpu.memory_space<vmem>>, %arg18: memref<8x128xf32, #tpu.memory_space<vmem>>, %arg19: memref<8x256xf32, #tpu.memory_space<vmem>>) attributes {dimension_semantics = [#tpu.dimension_semantics<parallel>], iteration_bounds = array<i64: 1>, scalar_prefetch = 0 : i64, scratch_operands = 0 : i64, tpu.core_type = #tpu.core_type<tc>, window_params = [{transform_indices = @transform_0, window_bounds = array<i64: 8, 256>}, {pipeline_mode = #tpu.pipeline_mode<synchronous>, transform_indices = @transform_1, window_bounds = array<i64: 256, 640>}, {pipeline_mode = #tpu.pipeline_mode<synchronous>, transform_indices = @transform_2, window_bounds = array<i64: 640, 640>}, {pipeline_mode = #tpu.pipeline_mode<synchronous>, transform_indices = @transform_3, window_bounds = array<i64: 640, 384>}, {pipeline_mode = #tpu.pipeline_mode<synchronous>, transform_indices = @transform_4, window_bounds = array<i64: 384, 128>}, {pipeline_mode = #tpu.pipeline_mode<synchronous>, transform_indices = @transform_5, window_bounds = array<i64: 128, 384>}, {pipeline_mode = #tpu.pipeline_mode<synchronous>, transform_indices = @transform_6, window_bounds = array<i64: 384, 640>}, {pipeline_mode = #tpu.pipeline_mode<synchronous>, transform_indices = @transform_7, window_bounds = array<i64: 640, 640>}, {pipeline_mode = #tpu.pipeline_mode<synchronous>, transform_indices = @transform_8, window_bounds = array<i64: 640, 256>}, {pipeline_mode = #tpu.pipeline_mode<synchronous>, transform_indices = @transform_9, window_bounds = array<i64: 1, 640>}, {pipeline_mode = #tpu.pipeline_mode<synchronous>, transform_indices = @transform_10, window_bounds = array<i64: 1, 640>}, {pipeline_mode = #tpu.pipeline_mode<synchronous>, transform_indices = @transform_11, window_bounds = array<i64: 1, 384>}, {pipeline_mode = #tpu.pipeline_mode<synchronous>, transform_indices = @transform_12, window_bounds = array<i64: 1, 128>}, {pipeline_mode = #tpu.pipeline_mode<synchronous>, transform_indices = @transform_13, window_bounds = array<i64: 1, 384>}, {pipeline_mode = #tpu.pipeline_mode<synchronous>, transform_indices = @transform_14, window_bounds = array<i64: 1, 640>}, {pipeline_mode = #tpu.pipeline_mode<synchronous>, transform_indices = @transform_15, window_bounds = array<i64: 1, 640>}, {pipeline_mode = #tpu.pipeline_mode<synchronous>, transform_indices = @transform_16, window_bounds = array<i64: 1, 256>}, {transform_indices = @transform_17, window_bounds = array<i64: 8, 128>}, {transform_indices = @transform_18, window_bounds = array<i64: 8, 256>}]} {
    %c0 = arith.constant 0 : index
    %c0_0 = arith.constant 0 : index
    %0 = vector.load %arg1[%c0, %c0_0] : memref<8x256xf32, #tpu.memory_space<vmem>>, vector<8x256xf32>
    %c0_1 = arith.constant 0 : index
    %c0_2 = arith.constant 0 : index
    %1 = vector.load %arg2[%c0_1, %c0_2] : memref<256x640xf32, #tpu.memory_space<vmem>>, vector<256x640xf32>
    %cst = arith.constant dense<0.000000e+00> : vector<8x640xf32>
    %2 = tpu.matmul %0, %1, %cst {dimension_numbers = #tpu.dot_dimension_numbers<[1], [0], [0], [1], [0, 0, 1, 1], [], []>} : vector<8x256xf32>, vector<256x640xf32>, vector<8x640xf32> -> vector<8x640xf32>
    %c0_3 = arith.constant 0 : index
    %c0_4 = arith.constant 0 : index
    %3 = vector.load %arg10[%c0_3, %c0_4] : memref<1x640xf32, #tpu.memory_space<vmem>>, vector<1x640xf32>
    %4 = vector.broadcast %3 : vector<1x640xf32> to vector<8x640xf32>
    %5 = arith.addf %2, %4 : vector<8x640xf32>
    %cst_5 = arith.constant 0.000000e+00 : f32
    %6 = vector.broadcast %cst_5 : f32 to vector<8x640xf32>
    %7 = arith.maximumf %5, %6 : vector<8x640xf32>
    %c0_6 = arith.constant 0 : index
    %c0_7 = arith.constant 0 : index
    %8 = vector.load %arg3[%c0_6, %c0_7] : memref<640x640xf32, #tpu.memory_space<vmem>>, vector<640x640xf32>
    %cst_8 = arith.constant dense<0.000000e+00> : vector<8x640xf32>
    %9 = tpu.matmul %7, %8, %cst_8 {dimension_numbers = #tpu.dot_dimension_numbers<[1], [0], [0], [1], [0, 0, 1, 1], [], []>} : vector<8x640xf32>, vector<640x640xf32>, vector<8x640xf32> -> vector<8x640xf32>
    %c0_9 = arith.constant 0 : index
    %c0_10 = arith.constant 0 : index
    %10 = vector.load %arg11[%c0_9, %c0_10] : memref<1x640xf32, #tpu.memory_space<vmem>>, vector<1x640xf32>
    %11 = vector.broadcast %10 : vector<1x640xf32> to vector<8x640xf32>
    %12 = arith.addf %9, %11 : vector<8x640xf32>
    %cst_11 = arith.constant 0.000000e+00 : f32
    %13 = vector.broadcast %cst_11 : f32 to vector<8x640xf32>
    %14 = arith.maximumf %12, %13 : vector<8x640xf32>
    %c0_12 = arith.constant 0 : index
    %c0_13 = arith.constant 0 : index
    %15 = vector.load %arg4[%c0_12, %c0_13] : memref<640x384xf32, #tpu.memory_space<vmem>>, vector<640x384xf32>
    %cst_14 = arith.constant dense<0.000000e+00> : vector<8x384xf32>
    %16 = tpu.matmul %14, %15, %cst_14 {dimension_numbers = #tpu.dot_dimension_numbers<[1], [0], [0], [1], [0, 0, 1, 1], [], []>} : vector<8x640xf32>, vector<640x384xf32>, vector<8x384xf32> -> vector<8x384xf32>
    %c0_15 = arith.constant 0 : index
    %c0_16 = arith.constant 0 : index
    %17 = vector.load %arg12[%c0_15, %c0_16] : memref<1x384xf32, #tpu.memory_space<vmem>>, vector<1x384xf32>
    %18 = vector.broadcast %17 : vector<1x384xf32> to vector<8x384xf32>
    %19 = arith.addf %16, %18 : vector<8x384xf32>
    %cst_17 = arith.constant 0.000000e+00 : f32
    %20 = vector.broadcast %cst_17 : f32 to vector<8x384xf32>
    %21 = arith.maximumf %19, %20 : vector<8x384xf32>
    %c0_18 = arith.constant 0 : index
    %c0_19 = arith.constant 0 : index
    %22 = vector.load %arg5[%c0_18, %c0_19] : memref<384x128xf32, #tpu.memory_space<vmem>>, vector<384x128xf32>
    %cst_20 = arith.constant dense<0.000000e+00> : vector<8x128xf32>
    %23 = tpu.matmul %21, %22, %cst_20 {dimension_numbers = #tpu.dot_dimension_numbers<[1], [0], [0], [1], [0, 0, 1, 1], [], []>} : vector<8x384xf32>, vector<384x128xf32>, vector<8x128xf32> -> vector<8x128xf32>
    %c0_21 = arith.constant 0 : index
    %c0_22 = arith.constant 0 : index
    %24 = vector.load %arg13[%c0_21, %c0_22] : memref<1x128xf32, #tpu.memory_space<vmem>>, vector<1x128xf32>
    %25 = vector.broadcast %24 : vector<1x128xf32> to vector<8x128xf32>
    %26 = arith.addf %23, %25 : vector<8x128xf32>
    %cst_23 = arith.constant 0.000000e+00 : f32
    %27 = vector.broadcast %cst_23 : f32 to vector<8x128xf32>
    %28 = arith.maximumf %26, %27 : vector<8x128xf32>
    %c0_24 = arith.constant 0 : index
    %c0_25 = arith.constant 0 : index
    %29 = vector.load %arg18[%c0_24, %c0_25] : memref<8x128xf32, #tpu.memory_space<vmem>>, vector<8x128xf32>
    tpu.vector_store %arg18[%c0_24, %c0_25], %28 {strides = array<i32>} : memref<8x128xf32, #tpu.memory_space<vmem>>, vector<8x128xf32>,
    %c0_26 = arith.constant 0 : index
    %c0_27 = arith.constant 0 : index
    %30 = vector.load %arg6[%c0_26, %c0_27] : memref<128x384xf32, #tpu.memory_space<vmem>>, vector<128x384xf32>
    %cst_28 = arith.constant dense<0.000000e+00> : vector<8x384xf32>
    %31 = tpu.matmul %28, %30, %cst_28 {dimension_numbers = #tpu.dot_dimension_numbers<[1], [0], [0], [1], [0, 0, 1, 1], [], []>} : vector<8x128xf32>, vector<128x384xf32>, vector<8x384xf32> -> vector<8x384xf32>
    %c0_29 = arith.constant 0 : index
    %c0_30 = arith.constant 0 : index
    %32 = vector.load %arg14[%c0_29, %c0_30] : memref<1x384xf32, #tpu.memory_space<vmem>>, vector<1x384xf32>
    %33 = vector.broadcast %32 : vector<1x384xf32> to vector<8x384xf32>
    %34 = arith.addf %31, %33 : vector<8x384xf32>
    %cst_31 = arith.constant 0.000000e+00 : f32
    %35 = vector.broadcast %cst_31 : f32 to vector<8x384xf32>
    %36 = arith.maximumf %34, %35 : vector<8x384xf32>
    %c0_32 = arith.constant 0 : index
    %c0_33 = arith.constant 0 : index
    %37 = vector.load %arg7[%c0_32, %c0_33] : memref<384x640xf32, #tpu.memory_space<vmem>>, vector<384x640xf32>
    %cst_34 = arith.constant dense<0.000000e+00> : vector<8x640xf32>
    %38 = tpu.matmul %36, %37, %cst_34 {dimension_numbers = #tpu.dot_dimension_numbers<[1], [0], [0], [1], [0, 0, 1, 1], [], []>} : vector<8x384xf32>, vector<384x640xf32>, vector<8x640xf32> -> vector<8x640xf32>
    %c0_35 = arith.constant 0 : index
    %c0_36 = arith.constant 0 : index
    %39 = vector.load %arg15[%c0_35, %c0_36] : memref<1x640xf32, #tpu.memory_space<vmem>>, vector<1x640xf32>
    %40 = vector.broadcast %39 : vector<1x640xf32> to vector<8x640xf32>
    %41 = arith.addf %38, %40 : vector<8x640xf32>
    %cst_37 = arith.constant 0.000000e+00 : f32
    %42 = vector.broadcast %cst_37 : f32 to vector<8x640xf32>
    %43 = arith.maximumf %41, %42 : vector<8x640xf32>
    %c0_38 = arith.constant 0 : index
    %c0_39 = arith.constant 0 : index
    %44 = vector.load %arg8[%c0_38, %c0_39] : memref<640x640xf32, #tpu.memory_space<vmem>>, vector<640x640xf32>
    %cst_40 = arith.constant dense<0.000000e+00> : vector<8x640xf32>
    %45 = tpu.matmul %43, %44, %cst_40 {dimension_numbers = #tpu.dot_dimension_numbers<[1], [0], [0], [1], [0, 0, 1, 1], [], []>} : vector<8x640xf32>, vector<640x640xf32>, vector<8x640xf32> -> vector<8x640xf32>
    %c0_41 = arith.constant 0 : index
    %c0_42 = arith.constant 0 : index
    %46 = vector.load %arg16[%c0_41, %c0_42] : memref<1x640xf32, #tpu.memory_space<vmem>>, vector<1x640xf32>
    %47 = vector.broadcast %46 : vector<1x640xf32> to vector<8x640xf32>
    %48 = arith.addf %45, %47 : vector<8x640xf32>
    %cst_43 = arith.constant 0.000000e+00 : f32
    %49 = vector.broadcast %cst_43 : f32 to vector<8x640xf32>
    %50 = arith.maximumf %48, %49 : vector<8x640xf32>
    %c0_44 = arith.constant 0 : index
    %c0_45 = arith.constant 0 : index
    %51 = vector.load %arg9[%c0_44, %c0_45] : memref<640x256xf32, #tpu.memory_space<vmem>>, vector<640x256xf32>
    %cst_46 = arith.constant dense<0.000000e+00> : vector<8x256xf32>
    %52 = tpu.matmul %50, %51, %cst_46 {dimension_numbers = #tpu.dot_dimension_numbers<[1], [0], [0], [1], [0, 0, 1, 1], [], []>} : vector<8x640xf32>, vector<640x256xf32>, vector<8x256xf32> -> vector<8x256xf32>
    %c0_47 = arith.constant 0 : index
    %c0_48 = arith.constant 0 : index
    %53 = vector.load %arg17[%c0_47, %c0_48] : memref<1x256xf32, #tpu.memory_space<vmem>>, vector<1x256xf32>
    %54 = vector.broadcast %53 : vector<1x256xf32> to vector<8x256xf32>
    %55 = arith.addf %52, %54 : vector<8x256xf32>
    %cst_49 = arith.constant 0.000000e+00 : f32
    %56 = vector.broadcast %cst_49 : f32 to vector<8x256xf32>
    %57 = arith.maximumf %55, %56 : vector<8x256xf32>
    %c0_50 = arith.constant 0 : index
    %c0_51 = arith.constant 0 : index
    %58 = vector.load %arg19[%c0_50, %c0_51] : memref<8x256xf32, #tpu.memory_space<vmem>>, vector<8x256xf32>
    tpu.vector_store %arg19[%c0_50, %c0_51], %57 {strides = array<i32>} : memref<8x256xf32, #tpu.memory_space<vmem>>, vector<8x256xf32>,
    return
  }
  func.func @transform_0(%arg0: i32) -> (i32, i32) {
    %c0_i32 = arith.constant 0 : i32
    %c0_i32_0 = arith.constant 0 : i32
    return %arg0, %c0_i32 : i32, i32
  }
  func.func @transform_1(%arg0: i32) -> (i32, i32) {
    %c0_i32 = arith.constant 0 : i32
    %c0_i32_0 = arith.constant 0 : i32
    %c0_i32_1 = arith.constant 0 : i32
    return %c0_i32, %c0_i32_0 : i32, i32
  }
  func.func @transform_2(%arg0: i32) -> (i32, i32) {
    %c0_i32 = arith.constant 0 : i32
    %c0_i32_0 = arith.constant 0 : i32
    %c0_i32_1 = arith.constant 0 : i32
    return %c0_i32, %c0_i32_0 : i32, i32
  }
  func.func @transform_3(%arg0: i32) -> (i32, i32) {
    %c0_i32 = arith.constant 0 : i32
    %c0_i32_0 = arith.constant 0 : i32
    %c0_i32_1 = arith.constant 0 : i32
    return %c0_i32, %c0_i32_0 : i32, i32
  }
  func.func @transform_4(%arg0: i32) -> (i32, i32) {
    %c0_i32 = arith.constant 0 : i32
    %c0_i32_0 = arith.constant 0 : i32
    %c0_i32_1 = arith.constant 0 : i32
    return %c0_i32, %c0_i32_0 : i32, i32
  }
  func.func @transform_5(%arg0: i32) -> (i32, i32) {
    %c0_i32 = arith.constant 0 : i32
    %c0_i32_0 = arith.constant 0 : i32
    %c0_i32_1 = arith.constant 0 : i32
    return %c0_i32, %c0_i32_0 : i32, i32
  }
  func.func @transform_6(%arg0: i32) -> (i32, i32) {
    %c0_i32 = arith.constant 0 : i32
    %c0_i32_0 = arith.constant 0 : i32
    %c0_i32_1 = arith.constant 0 : i32
    return %c0_i32, %c0_i32_0 : i32, i32
  }
  func.func @transform_7(%arg0: i32) -> (i32, i32) {
    %c0_i32 = arith.constant 0 : i32
    %c0_i32_0 = arith.constant 0 : i32
    %c0_i32_1 = arith.constant 0 : i32
    return %c0_i32, %c0_i32_0 : i32, i32
  }
  func.func @transform_8(%arg0: i32) -> (i32, i32) {
    %c0_i32 = arith.constant 0 : i32
    %c0_i32_0 = arith.constant 0 : i32
    %c0_i32_1 = arith.constant 0 : i32
    return %c0_i32, %c0_i32_0 : i32, i32
  }
  func.func @transform_9(%arg0: i32) -> (i32, i32) {
    %c0_i32 = arith.constant 0 : i32
    %c0_i32_0 = arith.constant 0 : i32
    %c0_i32_1 = arith.constant 0 : i32
    return %c0_i32, %c0_i32_0 : i32, i32
  }
  func.func @transform_10(%arg0: i32) -> (i32, i32) {
    %c0_i32 = arith.constant 0 : i32
    %c0_i32_0 = arith.constant 0 : i32
    %c0_i32_1 = arith.constant 0 : i32
    return %c0_i32, %c0_i32_0 : i32, i32
  }
  func.func @transform_11(%arg0: i32) -> (i32, i32) {
    %c0_i32 = arith.constant 0 : i32
    %c0_i32_0 = arith.constant 0 : i32
    %c0_i32_1 = arith.constant 0 : i32
    return %c0_i32, %c0_i32_0 : i32, i32
  }
  func.func @transform_12(%arg0: i32) -> (i32, i32) {
    %c0_i32 = arith.constant 0 : i32
    %c0_i32_0 = arith.constant 0 : i32
    %c0_i32_1 = arith.constant 0 : i32
    return %c0_i32, %c0_i32_0 : i32, i32
  }
  func.func @transform_13(%arg0: i32) -> (i32, i32) {
    %c0_i32 = arith.constant 0 : i32
    %c0_i32_0 = arith.constant 0 : i32
    %c0_i32_1 = arith.constant 0 : i32
    return %c0_i32, %c0_i32_0 : i32, i32
  }
  func.func @transform_14(%arg0: i32) -> (i32, i32) {
    %c0_i32 = arith.constant 0 : i32
    %c0_i32_0 = arith.constant 0 : i32
    %c0_i32_1 = arith.constant 0 : i32
    return %c0_i32, %c0_i32_0 : i32, i32
  }
  func.func @transform_15(%arg0: i32) -> (i32, i32) {
    %c0_i32 = arith.constant 0 : i32
    %c0_i32_0 = arith.constant 0 : i32
    %c0_i32_1 = arith.constant 0 : i32
    return %c0_i32, %c0_i32_0 : i32, i32
  }
  func.func @transform_16(%arg0: i32) -> (i32, i32) {
    %c0_i32 = arith.constant 0 : i32
    %c0_i32_0 = arith.constant 0 : i32
    %c0_i32_1 = arith.constant 0 : i32
    return %c0_i32, %c0_i32_0 : i32, i32
  }
  func.func @transform_17(%arg0: i32) -> (i32, i32) {
    %c0_i32 = arith.constant 0 : i32
    %c0_i32_0 = arith.constant 0 : i32
    return %arg0, %c0_i32 : i32, i32
  }
  func.func @transform_18(%arg0: i32) -> (i32, i32) {
    %c0_i32 = arith.constant 0 : i32
    %c0_i32_0 = arith.constant 0 : i32
    return %arg0, %c0_i32 : i32, i32
  }
}

</mosaic_0001>

<llo_original>
// kernel: tpu_custom_call.1
$region0: #{tpu_custom_call.1}
  #allocation0 [shape = 'u32[]', space=smem, size = 0x4, offset = 0x4, fixed_abs, tag = 'smem constant byte address 0x4 - core index']
  #allocation1 [shape = 'u32[144,128]{1,0:T(1,128)}', space=vmem, size = 0x12000, scoped, tag = 'internal scratch']
  %s0 = inlined_call_operand.hbm [shape: f32[8,256], index: 0, kind: input, shape index: {}]
  %s1 = inlined_call_operand.hbm [shape: f32[256,640], index: 1, kind: input, shape index: {}]
  %s2 = inlined_call_operand.hbm [shape: f32[640,640], index: 2, kind: input, shape index: {}]
  %s3 = inlined_call_operand.hbm [shape: f32[640,384], index: 3, kind: input, shape index: {}]
  %s4 = inlined_call_operand.hbm [shape: f32[384,128], index: 4, kind: input, shape index: {}]
  %s5 = inlined_call_operand.hbm [shape: f32[128,384], index: 5, kind: input, shape index: {}]
  %s6 = inlined_call_operand.hbm [shape: f32[384,640], index: 6, kind: input, shape index: {}]
  %s7 = inlined_call_operand.hbm [shape: f32[640,640], index: 7, kind: input, shape index: {}]
  %s8 = inlined_call_operand.hbm [shape: f32[640,256], index: 8, kind: input, shape index: {}]
  %s9 = inlined_call_operand.hbm [shape: f32[1,640], index: 9, kind: input, shape index: {}]
  %s10 = inlined_call_operand.hbm [shape: f32[1,640], index: 10, kind: input, shape index: {}]
  %s11 = inlined_call_operand.hbm [shape: f32[1,384], index: 11, kind: input, shape index: {}]
  %s12 = inlined_call_operand.hbm [shape: f32[1,128], index: 12, kind: input, shape index: {}]
  %s13 = inlined_call_operand.hbm [shape: f32[1,384], index: 13, kind: input, shape index: {}]
  %s14 = inlined_call_operand.hbm [shape: f32[1,640], index: 14, kind: input, shape index: {}]
  %s15 = inlined_call_operand.hbm [shape: f32[1,640], index: 15, kind: input, shape index: {}]
  %s16 = inlined_call_operand.hbm [shape: f32[1,256], index: 16, kind: input, shape index: {}]
  %s17 = inlined_call_operand.hbm [shape: f32[8,128], index: 17, kind: output, shape index: {0}]
  %s18 = inlined_call_operand.hbm [shape: f32[8,256], index: 18, kind: output, shape index: {1}]
  %19 = xla_tuple %s17, %s18
  %s20 = sld [smem:[#allocation0]]
  $region154: #{tpu_custom_call.1} parent=0
    _
  %s22 = ssub.s32 1, %s20
  %s23 = scalar_select 0, %s22, %s20
  $region1: #{tpu_custom_call.1} parent=0
    #allocation2 [shape = 'u8[8192]{0}', space=vmem, size = 0x2000, scoped, tag = 'input window, operand 0, single buffered']
    #allocation3 [shape = 's32[1]{0}', space=sflag, size = 0x4, scoped, tag = 'scoped memory for tpu_custom_call.1']
    #allocation4 [shape = 's32[1]{0}', space=sflag, size = 0x4, scoped, tag = 'scoped memory for tpu_custom_call.1']
    #allocation5 [shape = 'u8[655360]{0}', space=vmem, size = 0xa0000, scoped, tag = 'input window, operand 1, single buffered']
    #allocation6 [shape = 's32[1]{0}', space=sflag, size = 0x4, scoped, tag = 'scoped memory for tpu_custom_call.1']
    #allocation7 [shape = 'u8[1638400]{0}', space=vmem, size = 0x190000, scoped, tag = 'input window, operand 2, single buffered']
    #allocation8 [shape = 'u8[983040]{0}', space=vmem, size = 0xf0000, scoped, tag = 'input window, operand 3, single buffered']
    #allocation9 [shape = 's32[1]{0}', space=sflag, size = 0x4, scoped, tag = 'scoped memory for tpu_custom_call.1']
    #allocation10 [shape = 'u8[196608]{0}', space=vmem, size = 0x30000, scoped, tag = 'input window, operand 4, single buffered']
    #allocation11 [shape = 'u8[196608]{0}', space=vmem, size = 0x30000, scoped, tag = 'input window, operand 5, single buffered']
    #allocation12 [shape = 's32[1]{0}', space=sflag, size = 0x4, scoped, tag = 'scoped memory for tpu_custom_call.1']
    #allocation13 [shape = 'u8[983040]{0}', space=vmem, size = 0xf0000, scoped, tag = 'input window, operand 6, single buffered']
    #allocation14 [shape = 'u8[1638400]{0}', space=vmem, size = 0x190000, scoped, tag = 'input window, operand 7, single buffered']
    #allocation15 [shape = 's32[1]{0}', space=sflag, size = 0x4, scoped, tag = 'scoped memory for tpu_custom_call.1']
    #allocation16 [shape = 'u8[655360]{0}', space=vmem, size = 0xa0000, scoped, tag = 'input window, operand 8, single buffered']
    #allocation17 [shape = 'u8[2560]{0}', space=vmem, size = 0xc00, scoped, tag = 'input window, operand 9, single buffered']
    #allocation18 [shape = 's32[1]{0}', space=sflag, size = 0x4, scoped, tag = 'scoped memory for tpu_custom_call.1']
    #allocation19 [shape = 'u8[2560]{0}', space=vmem, size = 0xc00, scoped, tag = 'input window, operand 10, single buffered']
    #allocation20 [shape = 'u8[1536]{0}', space=vmem, size = 0x800, scoped, tag = 'input window, operand 11, single buffered']
    #allocation21 [shape = 's32[1]{0}', space=sflag, size = 0x4, scoped, tag = 'scoped memory for tpu_custom_call.1']
    #allocation22 [shape = 'u8[512]{0}', space=vmem, size = 0x400, scoped, tag = 'input window, operand 12, single buffered']
    #allocation23 [shape = 'u8[1536]{0}', space=vmem, size = 0x800, scoped, tag = 'input window, operand 13, single buffered']
    #allocation24 [shape = 's32[1]{0}', space=sflag, size = 0x4, scoped, tag = 'scoped memory for tpu_custom_call.1']
    #allocation25 [shape = 'u8[2560]{0}', space=vmem, size = 0xc00, scoped, tag = 'input window, operand 14, single buffered']
    #allocation26 [shape = 'u8[2560]{0}', space=vmem, size = 0xc00, scoped, tag = 'input window, operand 15, single buffered']
    #allocation27 [shape = 's32[1]{0}', space=sflag, size = 0x4, scoped, tag = 'scoped memory for tpu_custom_call.1']
    #allocation28 [shape = 'u8[1024]{0}', space=vmem, size = 0x400, scoped, tag = 'input window, operand 16, single buffered']
    #allocation29 [shape = 'u8[4096]{0}', space=vmem, size = 0x1000, scoped, tag = 'output window, operand 0, single buffered']
    #allocation30 [shape = 'u8[8192]{0}', space=vmem, size = 0x2000, scoped, tag = 'output window, operand 1, single buffered']
    #allocation31 [shape = 's32[1]{0}', space=sflag, size = 0x4, scoped, tag = 'scoped memory for tpu_custom_call.1']
    %24 = vsyncpa [#allocation3], 0
    %25 = vsyncpa [#allocation6], 0
    %26 = vsyncpa [#allocation9], 0
    %27 = vsyncpa [#allocation12], 0
    %28 = vsyncpa [#allocation15], 0
    %29 = vsyncpa [#allocation18], 0
    %30 = vsyncpa [#allocation21], 0
    %31 = vsyncpa [#allocation24], 0
    %32 = vsyncpa [#allocation27], 0
    %33 = vsyncpa [#allocation4], 0
    %34 = vsyncpa [#allocation31], 0
    // Predicated region
    $region2: #{tpu_custom_call.1} parent=1 // pred_check
      _
    $region3: #{tpu_custom_call.1} parent=1 // pred_check_branch
      %36 = sbr.rel (0) target = $region5
    $region4: #{tpu_custom_call.1} parent=1 // pred_region
      %s38 = ssub.s32 256, 256
      %39 = vsyncadd [#allocation3], %s38
      %s41 = sshll.u32 [#allocation2], 4
      %s42 = int_to_ptr.vmem [resolvable:$true] %s41
      %44 = dma.hbm_to_vmem [thread:$0]  %s0, 256, %s42, [#allocation3]
    $region5: #{tpu_custom_call.1} parent=1 // pred_fallthru
      _
    // Predicated region
    $region6: #{tpu_custom_call.1} parent=1 // pred_check
      _
    $region7: #{tpu_custom_call.1} parent=1 // pred_check_branch
      %46 = sbr.rel (0) target = $region9
    $region8: #{tpu_custom_call.1} parent=1 // pred_region
      %s48 = ssub.s32 20480, 20480
      %49 = vsyncadd [#allocation6], %s48
      %s50 = sshll.u32 [#allocation5], 4
      %s51 = int_to_ptr.vmem [resolvable:$true] %s50
      %56 = dma.hbm_to_vmem [thread:$0]  %s1, 20480, %s51, [#allocation6], 640, 640, 40
    $region9: #{tpu_custom_call.1} parent=1 // pred_fallthru
      _
    // Predicated region
    $region10: #{tpu_custom_call.1} parent=1 // pred_check
      _
    $region11: #{tpu_custom_call.1} parent=1 // pred_check_branch
      %58 = sbr.rel (0) target = $region13
    $region12: #{tpu_custom_call.1} parent=1 // pred_region
      %s60 = ssub.s32 51200, 51200
      %61 = vsyncadd [#allocation6], %s60
      %s62 = sshll.u32 [#allocation7], 4
      %s63 = int_to_ptr.vmem [resolvable:$true] %s62
      %68 = dma.hbm_to_vmem [thread:$0]  %s2, 51200, %s63, [#allocation6], 640, 640, 40
    $region13: #{tpu_custom_call.1} parent=1 // pred_fallthru
      _
    // Predicated region
    $region14: #{tpu_custom_call.1} parent=1 // pred_check
      _
    $region15: #{tpu_custom_call.1} parent=1 // pred_check_branch
      %70 = sbr.rel (0) target = $region17
    $region16: #{tpu_custom_call.1} parent=1 // pred_region
      %s72 = ssub.s32 30720, 30720
      %73 = vsyncadd [#allocation9], %s72
      %s74 = sshll.u32 [#allocation8], 4
      %s75 = int_to_ptr.vmem [resolvable:$true] %s74
      %80 = dma.hbm_to_vmem [thread:$0]  %s3, 30720, %s75, [#allocation9], 384, 384, 24
    $region17: #{tpu_custom_call.1} parent=1 // pred_fallthru
      _
    // Predicated region
    $region18: #{tpu_custom_call.1} parent=1 // pred_check
      _
    $region19: #{tpu_custom_call.1} parent=1 // pred_check_branch
      %82 = sbr.rel (0) target = $region21
    $region20: #{tpu_custom_call.1} parent=1 // pred_region
      %s84 = ssub.s32 6144, 6144
      %85 = vsyncadd [#allocation9], %s84
      %s86 = sshll.u32 [#allocation10], 4
      %s87 = int_to_ptr.vmem [resolvable:$true] %s86
      %92 = dma.hbm_to_vmem [thread:$0]  %s4, 6144, %s87, [#allocation9], 128, 128, 8
    $region21: #{tpu_custom_call.1} parent=1 // pred_fallthru
      _
    // Predicated region
    $region22: #{tpu_custom_call.1} parent=1 // pred_check
      _
    $region23: #{tpu_custom_call.1} parent=1 // pred_check_branch
      %94 = sbr.rel (0) target = $region25
    $region24: #{tpu_custom_call.1} parent=1 // pred_region
      %s96 = ssub.s32 6144, 6144
      %97 = vsyncadd [#allocation12], %s96
      %s98 = sshll.u32 [#allocation11], 4
      %s99 = int_to_ptr.vmem [resolvable:$true] %s98
      %104 = dma.hbm_to_vmem [thread:$0]  %s5, 6144, %s99, [#allocation12], 384, 384, 24
    $region25: #{tpu_custom_call.1} parent=1 // pred_fallthru
      _
    // Predicated region
    $region26: #{tpu_custom_call.1} parent=1 // pred_check
      _
    $region27: #{tpu_custom_call.1} parent=1 // pred_check_branch
      %106 = sbr.rel (0) target = $region29
    $region28: #{tpu_custom_call.1} parent=1 // pred_region
      %s108 = ssub.s32 30720, 30720
      %109 = vsyncadd [#allocation12], %s108
      %s110 = sshll.u32 [#allocation13], 4
      %s111 = int_to_ptr.vmem [resolvable:$true] %s110
      %116 = dma.hbm_to_vmem [thread:$0]  %s6, 30720, %s111, [#allocation12], 640, 640, 40
    $region29: #{tpu_custom_call.1} parent=1 // pred_fallthru
      _
    // Predicated region
    $region30: #{tpu_custom_call.1} parent=1 // pred_check
      _
    $region31: #{tpu_custom_call.1} parent=1 // pred_check_branch
      %118 = sbr.rel (0) target = $region33
    $region32: #{tpu_custom_call.1} parent=1 // pred_region
      %s120 = ssub.s32 51200, 51200
      %121 = vsyncadd [#allocation15], %s120
      %s122 = sshll.u32 [#allocation14], 4
      %s123 = int_to_ptr.vmem [resolvable:$true] %s122
      %128 = dma.hbm_to_vmem [thread:$0]  %s7, 51200, %s123, [#allocation15], 640, 640, 40
    $region33: #{tpu_custom_call.1} parent=1 // pred_fallthru
      _
    // Predicated region
    $region34: #{tpu_custom_call.1} parent=1 // pred_check
      _
    $region35: #{tpu_custom_call.1} parent=1 // pred_check_branch
      %130 = sbr.rel (0) target = $region37
    $region36: #{tpu_custom_call.1} parent=1 // pred_region
      %s132 = ssub.s32 20480, 20480
      %133 = vsyncadd [#allocation15], %s132
      %s134 = sshll.u32 [#allocation16], 4
      %s135 = int_to_ptr.vmem [resolvable:$true] %s134
      %140 = dma.hbm_to_vmem [thread:$0]  %s8, 20480, %s135, [#allocation15], 256, 256, 16
    $region37: #{tpu_custom_call.1} parent=1 // pred_fallthru
      _
    // Predicated region
    $region38: #{tpu_custom_call.1} parent=1 // pred_check
      _
    $region39: #{tpu_custom_call.1} parent=1 // pred_check_branch
      %142 = sbr.rel (0) target = $region41
    $region40: #{tpu_custom_call.1} parent=1 // pred_region
      %s144 = ssub.s32 80, 80
      %145 = vsyncadd [#allocation18], %s144
      %s147 = sshll.u32 [#allocation17], 4
      %s148 = int_to_ptr.vmem [resolvable:$true] %s147
      %150 = dma.hbm_to_vmem [thread:$0]  %s9, 80, %s148, [#allocation18]
    $region41: #{tpu_custom_call.1} parent=1 // pred_fallthru
      _
    // Predicated region
    $region42: #{tpu_custom_call.1} parent=1 // pred_check
      _
    $region43: #{tpu_custom_call.1} parent=1 // pred_check_branch
      %152 = sbr.rel (0) target = $region45
    $region44: #{tpu_custom_call.1} parent=1 // pred_region
      %s154 = ssub.s32 80, 80
      %155 = vsyncadd [#allocation18], %s154
      %s157 = sshll.u32 [#allocation19], 4
      %s158 = int_to_ptr.vmem [resolvable:$true] %s157
      %160 = dma.hbm_to_vmem [thread:$0]  %s10, 80, %s158, [#allocation18]
    $region45: #{tpu_custom_call.1} parent=1 // pred_fallthru
      _
    // Predicated region
    $region46: #{tpu_custom_call.1} parent=1 // pred_check
      _
    $region47: #{tpu_custom_call.1} parent=1 // pred_check_branch
      %162 = sbr.rel (0) target = $region49
    $region48: #{tpu_custom_call.1} parent=1 // pred_region
      %s164 = ssub.s32 48, 48
      %165 = vsyncadd [#allocation21], %s164
      %s167 = sshll.u32 [#allocation20], 4
      %s168 = int_to_ptr.vmem [resolvable:$true] %s167
      %170 = dma.hbm_to_vmem [thread:$0]  %s11, 48, %s168, [#allocation21]
    $region49: #{tpu_custom_call.1} parent=1 // pred_fallthru
      _
    // Predicated region
    $region50: #{tpu_custom_call.1} parent=1 // pred_check
      _
    $region51: #{tpu_custom_call.1} parent=1 // pred_check_branch
      %172 = sbr.rel (0) target = $region53
    $region52: #{tpu_custom_call.1} parent=1 // pred_region
      %s174 = ssub.s32 16, 16
      %175 = vsyncadd [#allocation21], %s174
      %s177 = sshll.u32 [#allocation22], 4
      %s178 = int_to_ptr.vmem [resolvable:$true] %s177
      %180 = dma.hbm_to_vmem [thread:$0]  %s12, 16, %s178, [#allocation21]
    $region53: #{tpu_custom_call.1} parent=1 // pred_fallthru
      _
    // Predicated region
    $region54: #{tpu_custom_call.1} parent=1 // pred_check
      _
    $region55: #{tpu_custom_call.1} parent=1 // pred_check_branch
      %182 = sbr.rel (0) target = $region57
    $region56: #{tpu_custom_call.1} parent=1 // pred_region
      %s184 = ssub.s32 48, 48
      %185 = vsyncadd [#allocation24], %s184
      %s187 = sshll.u32 [#allocation23], 4
      %s188 = int_to_ptr.vmem [resolvable:$true] %s187
      %190 = dma.hbm_to_vmem [thread:$0]  %s13, 48, %s188, [#allocation24]
    $region57: #{tpu_custom_call.1} parent=1 // pred_fallthru
      _
    // Predicated region
    $region58: #{tpu_custom_call.1} parent=1 // pred_check
      _
    $region59: #{tpu_custom_call.1} parent=1 // pred_check_branch
      %192 = sbr.rel (0) target = $region61
    $region60: #{tpu_custom_call.1} parent=1 // pred_region
      %s194 = ssub.s32 80, 80
      %195 = vsyncadd [#allocation24], %s194
      %s197 = sshll.u32 [#allocation25], 4
      %s198 = int_to_ptr.vmem [resolvable:$true] %s197
      %200 = dma.hbm_to_vmem [thread:$0]  %s14, 80, %s198, [#allocation24]
    $region61: #{tpu_custom_call.1} parent=1 // pred_fallthru
      _
    // Predicated region
    $region62: #{tpu_custom_call.1} parent=1 // pred_check
      _
    $region63: #{tpu_custom_call.1} parent=1 // pred_check_branch
      %202 = sbr.rel (0) target = $region65
    $region64: #{tpu_custom_call.1} parent=1 // pred_region
      %s204 = ssub.s32 80, 80
      %205 = vsyncadd [#allocation27], %s204
      %s207 = sshll.u32 [#allocation26], 4
      %s208 = int_to_ptr.vmem [resolvable:$true] %s207
      %210 = dma.hbm_to_vmem [thread:$0]  %s15, 80, %s208, [#allocation27]
    $region65: #{tpu_custom_call.1} parent=1 // pred_fallthru
      _
    // Predicated region
    $region66: #{tpu_custom_call.1} parent=1 // pred_check
      _
    $region67: #{tpu_custom_call.1} parent=1 // pred_check_branch
      %212 = sbr.rel (0) target = $region69
    $region68: #{tpu_custom_call.1} parent=1 // pred_region
      %s214 = ssub.s32 32, 32
      %215 = vsyncadd [#allocation27], %s214
      %s217 = sshll.u32 [#allocation28], 4
      %s218 = int_to_ptr.vmem [resolvable:$true] %s217
      %220 = dma.hbm_to_vmem [thread:$0]  %s16, 32, %s218, [#allocation27]
    $region69: #{tpu_custom_call.1} parent=1 // pred_fallthru
      _
    // Predicated region
    $region70: #{tpu_custom_call.1} parent=1 // pred_check
      _
    $region71: #{tpu_custom_call.1} parent=1 // pred_check_branch
      %222 = sbr.rel (0) target = $region73
    $region72: #{tpu_custom_call.1} parent=1 // pred_region
      %223 = dma.done [#allocation3], 256
    $region73: #{tpu_custom_call.1} parent=1 // pred_fallthru
      _
    // Predicated region
    $region74: #{tpu_custom_call.1} parent=1 // pred_check
      _
    $region75: #{tpu_custom_call.1} parent=1 // pred_check_branch
      %225 = sbr.rel (0) target = $region77
    $region76: #{tpu_custom_call.1} parent=1 // pred_region
      %226 = dma.done [#allocation6], 20480
    $region77: #{tpu_custom_call.1} parent=1 // pred_fallthru
      _
    // Predicated region
    $region78: #{tpu_custom_call.1} parent=1 // pred_check
      _
    $region79: #{tpu_custom_call.1} parent=1 // pred_check_branch
      %228 = sbr.rel (0) target = $region81
    $region80: #{tpu_custom_call.1} parent=1 // pred_region
      %229 = dma.done [#allocation6], 51200
    $region81: #{tpu_custom_call.1} parent=1 // pred_fallthru
      _
    // Predicated region
    $region82: #{tpu_custom_call.1} parent=1 // pred_check
      _
    $region83: #{tpu_custom_call.1} parent=1 // pred_check_branch
      %231 = sbr.rel (0) target = $region85
    $region84: #{tpu_custom_call.1} parent=1 // pred_region
      %232 = dma.done [#allocation9], 30720
    $region85: #{tpu_custom_call.1} parent=1 // pred_fallthru
      _
    // Predicated region
    $region86: #{tpu_custom_call.1} parent=1 // pred_check
      _
    $region87: #{tpu_custom_call.1} parent=1 // pred_check_branch
      %234 = sbr.rel (0) target = $region89
    $region88: #{tpu_custom_call.1} parent=1 // pred_region
      %235 = dma.done [#allocation9], 6144
    $region89: #{tpu_custom_call.1} parent=1 // pred_fallthru
      _
    // Predicated region
    $region90: #{tpu_custom_call.1} parent=1 // pred_check
      _
    $region91: #{tpu_custom_call.1} parent=1 // pred_check_branch
      %237 = sbr.rel (0) target = $region93
    $region92: #{tpu_custom_call.1} parent=1 // pred_region
      %238 = dma.done [#allocation12], 6144
    $region93: #{tpu_custom_call.1} parent=1 // pred_fallthru
      _
    // Predicated region
    $region94: #{tpu_custom_call.1} parent=1 // pred_check
      _
    $region95: #{tpu_custom_call.1} parent=1 // pred_check_branch
      %240 = sbr.rel (0) target = $region97
    $region96: #{tpu_custom_call.1} parent=1 // pred_region
      %241 = dma.done [#allocation12], 30720
    $region97: #{tpu_custom_call.1} parent=1 // pred_fallthru
      _
    // Predicated region
    $region98: #{tpu_custom_call.1} parent=1 // pred_check
      _
    $region99: #{tpu_custom_call.1} parent=1 // pred_check_branch
      %243 = sbr.rel (0) target = $region101
    $region100: #{tpu_custom_call.1} parent=1 // pred_region
      %244 = dma.done [#allocation15], 51200
    $region101: #{tpu_custom_call.1} parent=1 // pred_fallthru
      _
    // Predicated region
    $region102: #{tpu_custom_call.1} parent=1 // pred_check
      _
    $region103: #{tpu_custom_call.1} parent=1 // pred_check_branch
      %246 = sbr.rel (0) target = $region105
    $region104: #{tpu_custom_call.1} parent=1 // pred_region
      %247 = dma.done [#allocation15], 20480
    $region105: #{tpu_custom_call.1} parent=1 // pred_fallthru
      _
    // Predicated region
    $region106: #{tpu_custom_call.1} parent=1 // pred_check
      _
    $region107: #{tpu_custom_call.1} parent=1 // pred_check_branch
      %249 = sbr.rel (0) target = $region109
    $region108: #{tpu_custom_call.1} parent=1 // pred_region
      %250 = dma.done [#allocation18], 80
    $region109: #{tpu_custom_call.1} parent=1 // pred_fallthru
      _
    // Predicated region
    $region110: #{tpu_custom_call.1} parent=1 // pred_check
      _
    $region111: #{tpu_custom_call.1} parent=1 // pred_check_branch
      %252 = sbr.rel (0) target = $region113
    $region112: #{tpu_custom_call.1} parent=1 // pred_region
      %253 = dma.done [#allocation18], 80
    $region113: #{tpu_custom_call.1} parent=1 // pred_fallthru
      _
    // Predicated region
    $region114: #{tpu_custom_call.1} parent=1 // pred_check
      _
    $region115: #{tpu_custom_call.1} parent=1 // pred_check_branch
      %255 = sbr.rel (0) target = $region117
    $region116: #{tpu_custom_call.1} parent=1 // pred_region
      %256 = dma.done [#allocation21], 48
    $region117: #{tpu_custom_call.1} parent=1 // pred_fallthru
      _
    // Predicated region
    $region118: #{tpu_custom_call.1} parent=1 // pred_check
      _
    $region119: #{tpu_custom_call.1} parent=1 // pred_check_branch
      %258 = sbr.rel (0) target = $region121
    $region120: #{tpu_custom_call.1} parent=1 // pred_region
      %259 = dma.done [#allocation21], 16
    $region121: #{tpu_custom_call.1} parent=1 // pred_fallthru
      _
    // Predicated region
    $region122: #{tpu_custom_call.1} parent=1 // pred_check
      _
    $region123: #{tpu_custom_call.1} parent=1 // pred_check_branch
      %261 = sbr.rel (0) target = $region125
    $region124: #{tpu_custom_call.1} parent=1 // pred_region
      %262 = dma.done [#allocation24], 48
    $region125: #{tpu_custom_call.1} parent=1 // pred_fallthru
      _
    // Predicated region
    $region126: #{tpu_custom_call.1} parent=1 // pred_check
      _
    $region127: #{tpu_custom_call.1} parent=1 // pred_check_branch
      %264 = sbr.rel (0) target = $region129
    $region128: #{tpu_custom_call.1} parent=1 // pred_region
      %265 = dma.done [#allocation24], 80
    $region129: #{tpu_custom_call.1} parent=1 // pred_fallthru
      _
    // Predicated region
    $region130: #{tpu_custom_call.1} parent=1 // pred_check
      _
    $region131: #{tpu_custom_call.1} parent=1 // pred_check_branch
      %267 = sbr.rel (0) target = $region133
    $region132: #{tpu_custom_call.1} parent=1 // pred_region
      %268 = dma.done [#allocation27], 80
    $region133: #{tpu_custom_call.1} parent=1 // pred_fallthru
      _
    // Predicated region
    $region134: #{tpu_custom_call.1} parent=1 // pred_check
      _
    $region135: #{tpu_custom_call.1} parent=1 // pred_check_branch
      %270 = sbr.rel (0) target = $region137
    $region136: #{tpu_custom_call.1} parent=1 // pred_region
      %271 = dma.done [#allocation27], 32
    $region137: #{tpu_custom_call.1} parent=1 // pred_fallthru
      _
    %v272 = vld [vmem:[#allocation2] sm:$0xff]
    %v273 = vld [vmem:[#allocation2 + $0x8] sm:$0xff]
    %v274 = vld [vmem:[#allocation5] sm:$0xff]
    %v275 = vld [vmem:[#allocation5 + $0x8] sm:$0xff]
    %v276 = vld [vmem:[#allocation5 + $0x10] sm:$0xff]
    %v277 = vld [vmem:[#allocation5 + $0x18] sm:$0xff]
    %v278 = vld [vmem:[#allocation5 + $0x20] sm:$0xff]
    %v279 = vld [vmem:[#allocation5 + $0x28] sm:$0xff]
    %v280 = vld [vmem:[#allocation5 + $0x30] sm:$0xff]
    %v281 = vld [vmem:[#allocation5 + $0x38] sm:$0xff]
    %v282 = vld [vmem:[#allocation5 + $0x40] sm:$0xff]
    %v283 = vld [vmem:[#allocation5 + $0x48] sm:$0xff]
    %v284 = vld [vmem:[#allocation5 + $0x50] sm:$0xff]
    %v285 = vld [vmem:[#allocation5 + $0x58] sm:$0xff]
    %v286 = vld [vmem:[#allocation5 + $0x60] sm:$0xff]
    %v287 = vld [vmem:[#allocation5 + $0x68] sm:$0xff]
    %v288 = vld [vmem:[#allocation5 + $0x70] sm:$0xff]
    %v289 = vld [vmem:[#allocation5 + $0x78] sm:$0xff]
    %v290 = vld [vmem:[#allocation5 + $0x80] sm:$0xff]
    %v291 = vld [vmem:[#allocation5 + $0x88] sm:$0xff]
    %v292 = vld [vmem:[#allocation5 + $0x90] sm:$0xff]
    %v293 = vld [vmem:[#allocation5 + $0x98] sm:$0xff]
    %v294 = vld [vmem:[#allocation5 + $0xa0] sm:$0xff]
    %v295 = vld [vmem:[#allocation5 + $0xa8] sm:$0xff]
    %v296 = vld [vmem:[#allocation5 + $0xb0] sm:$0xff]
    %v297 = vld [vmem:[#allocation5 + $0xb8] sm:$0xff]
    %v298 = vld [vmem:[#allocation5 + $0xc0] sm:$0xff]
    %v299 = vld [vmem:[#allocation5 + $0xc8] sm:$0xff]
    %v300 = vld [vmem:[#allocation5 + $0xd0] sm:$0xff]
    %v301 = vld [vmem:[#allocation5 + $0xd8] sm:$0xff]
    %v302 = vld [vmem:[#allocation5 + $0xe0] sm:$0xff]
    %v303 = vld [vmem:[#allocation5 + $0xe8] sm:$0xff]
    %v304 = vld [vmem:[#allocation5 + $0xf0] sm:$0xff]
    %v305 = vld [vmem:[#allocation5 + $0xf8] sm:$0xff]
    %v306 = vld [vmem:[#allocation5 + $0x100] sm:$0xff]
    %v307 = vld [vmem:[#allocation5 + $0x108] sm:$0xff]
    %v308 = vld [vmem:[#allocation5 + $0x110] sm:$0xff]
    %v309 = vld [vmem:[#allocation5 + $0x118] sm:$0xff]
    %v310 = vld [vmem:[#allocation5 + $0x120] sm:$0xff]
    %v311 = vld [vmem:[#allocation5 + $0x128] sm:$0xff]
    %v312 = vld [vmem:[#allocation5 + $0x130] sm:$0xff]
    %v313 = vld [vmem:[#allocation5 + $0x138] sm:$0xff]
    %v314 = vld [vmem:[#allocation5 + $0x140] sm:$0xff]
    %v315 = vld [vmem:[#allocation5 + $0x148] sm:$0xff]
    %v316 = vld [vmem:[#allocation5 + $0x150] sm:$0xff]
    %v317 = vld [vmem:[#allocation5 + $0x158] sm:$0xff]
    %v318 = vld [vmem:[#allocation5 + $0x160] sm:$0xff]
    %v319 = vld [vmem:[#allocation5 + $0x168] sm:$0xff]
    %v320 = vld [vmem:[#allocation5 + $0x170] sm:$0xff]
    %v321 = vld [vmem:[#allocation5 + $0x178] sm:$0xff]
    %v322 = vld [vmem:[#allocation5 + $0x180] sm:$0xff]
    %v323 = vld [vmem:[#allocation5 + $0x188] sm:$0xff]
    %v324 = vld [vmem:[#allocation5 + $0x190] sm:$0xff]
    %v325 = vld [vmem:[#allocation5 + $0x198] sm:$0xff]
    %v326 = vld [vmem:[#allocation5 + $0x1a0] sm:$0xff]
    %v327 = vld [vmem:[#allocation5 + $0x1a8] sm:$0xff]
    %v328 = vld [vmem:[#allocation5 + $0x1b0] sm:$0xff]
    %v329 = vld [vmem:[#allocation5 + $0x1b8] sm:$0xff]
    %v330 = vld [vmem:[#allocation5 + $0x1c0] sm:$0xff]
    %v331 = vld [vmem:[#allocation5 + $0x1c8] sm:$0xff]
    %v332 = vld [vmem:[#allocation5 + $0x1d0] sm:$0xff]
    %v333 = vld [vmem:[#allocation5 + $0x1d8] sm:$0xff]
    %v334 = vld [vmem:[#allocation5 + $0x1e0] sm:$0xff]
    %v335 = vld [vmem:[#allocation5 + $0x1e8] sm:$0xff]
    %v336 = vld [vmem:[#allocation5 + $0x1f0] sm:$0xff]
    %v337 = vld [vmem:[#allocation5 + $0x1f8] sm:$0xff]
    %v338 = vld [vmem:[#allocation5 + $0x200] sm:$0xff]
    %v339 = vld [vmem:[#allocation5 + $0x208] sm:$0xff]
    %v340 = vld [vmem:[#allocation5 + $0x210] sm:$0xff]
    %v341 = vld [vmem:[#allocation5 + $0x218] sm:$0xff]
    %v342 = vld [vmem:[#allocation5 + $0x220] sm:$0xff]
    %v343 = vld [vmem:[#allocation5 + $0x228] sm:$0xff]
    %v344 = vld [vmem:[#allocation5 + $0x230] sm:$0xff]
    %v345 = vld [vmem:[#allocation5 + $0x238] sm:$0xff]
    %v346 = vld [vmem:[#allocation5 + $0x240] sm:$0xff]
    %v347 = vld [vmem:[#allocation5 + $0x248] sm:$0xff]
    %v348 = vld [vmem:[#allocation5 + $0x250] sm:$0xff]
    %v349 = vld [vmem:[#allocation5 + $0x258] sm:$0xff]
    %v350 = vld [vmem:[#allocation5 + $0x260] sm:$0xff]
    %v351 = vld [vmem:[#allocation5 + $0x268] sm:$0xff]
    %v352 = vld [vmem:[#allocation5 + $0x270] sm:$0xff]
    %v353 = vld [vmem:[#allocation5 + $0x278] sm:$0xff]
    %v354 = vld [vmem:[#allocation5 + $0x280] sm:$0xff]
    %v355 = vld [vmem:[#allocation5 + $0x288] sm:$0xff]
    %v356 = vld [vmem:[#allocation5 + $0x290] sm:$0xff]
    %v357 = vld [vmem:[#allocation5 + $0x298] sm:$0xff]
    %v358 = vld [vmem:[#allocation5 + $0x2a0] sm:$0xff]
    %v359 = vld [vmem:[#allocation5 + $0x2a8] sm:$0xff]
    %v360 = vld [vmem:[#allocation5 + $0x2b0] sm:$0xff]
    %v361 = vld [vmem:[#allocation5 + $0x2b8] sm:$0xff]
    %v362 = vld [vmem:[#allocation5 + $0x2c0] sm:$0xff]
    %v363 = vld [vmem:[#allocation5 + $0x2c8] sm:$0xff]
    %v364 = vld [vmem:[#allocation5 + $0x2d0] sm:$0xff]
    %v365 = vld [vmem:[#allocation5 + $0x2d8] sm:$0xff]
    %v366 = vld [vmem:[#allocation5 + $0x2e0] sm:$0xff]
    %v367 = vld [vmem:[#allocation5 + $0x2e8] sm:$0xff]
    %v368 = vld [vmem:[#allocation5 + $0x2f0] sm:$0xff]
    %v369 = vld [vmem:[#allocation5 + $0x2f8] sm:$0xff]
    %v370 = vld [vmem:[#allocation5 + $0x300] sm:$0xff]
    %v371 = vld [vmem:[#allocation5 + $0x308] sm:$0xff]
    %v372 = vld [vmem:[#allocation5 + $0x310] sm:$0xff]
    %v373 = vld [vmem:[#allocation5 + $0x318] sm:$0xff]
    %v374 = vld [vmem:[#allocation5 + $0x320] sm:$0xff]
    %v375 = vld [vmem:[#allocation5 + $0x328] sm:$0xff]
    %v376 = vld [vmem:[#allocation5 + $0x330] sm:$0xff]
    %v377 = vld [vmem:[#allocation5 + $0x338] sm:$0xff]
    %v378 = vld [vmem:[#allocation5 + $0x340] sm:$0xff]
    %v379 = vld [vmem:[#allocation5 + $0x348] sm:$0xff]
    %v380 = vld [vmem:[#allocation5 + $0x350] sm:$0xff]
    %v381 = vld [vmem:[#allocation5 + $0x358] sm:$0xff]
    %v382 = vld [vmem:[#allocation5 + $0x360] sm:$0xff]
    %v383 = vld [vmem:[#allocation5 + $0x368] sm:$0xff]
    %v384 = vld [vmem:[#allocation5 + $0x370] sm:$0xff]
    %v385 = vld [vmem:[#allocation5 + $0x378] sm:$0xff]
    %v386 = vld [vmem:[#allocation5 + $0x380] sm:$0xff]
    %v387 = vld [vmem:[#allocation5 + $0x388] sm:$0xff]
    %v388 = vld [vmem:[#allocation5 + $0x390] sm:$0xff]
    %v389 = vld [vmem:[#allocation5 + $0x398] sm:$0xff]
    %v390 = vld [vmem:[#allocation5 + $0x3a0] sm:$0xff]
    %v391 = vld [vmem:[#allocation5 + $0x3a8] sm:$0xff]
    %v392 = vld [vmem:[#allocation5 + $0x3b0] sm:$0xff]
    %v393 = vld [vmem:[#allocation5 + $0x3b8] sm:$0xff]
    %v394 = vld [vmem:[#allocation5 + $0x3c0] sm:$0xff]
    %v395 = vld [vmem:[#allocation5 + $0x3c8] sm:$0xff]
    %v396 = vld [vmem:[#allocation5 + $0x3d0] sm:$0xff]
    %v397 = vld [vmem:[#allocation5 + $0x3d8] sm:$0xff]
    %v398 = vld [vmem:[#allocation5 + $0x3e0] sm:$0xff]
    %v399 = vld [vmem:[#allocation5 + $0x3e8] sm:$0xff]
    %v400 = vld [vmem:[#allocation5 + $0x3f0] sm:$0xff]
    %v401 = vld [vmem:[#allocation5 + $0x3f8] sm:$0xff]
    %v402 = vld [vmem:[#allocation5 + $0x400] sm:$0xff]
    %v403 = vld [vmem:[#allocation5 + $0x408] sm:$0xff]
    %v404 = vld [vmem:[#allocation5 + $0x410] sm:$0xff]
    %v405 = vld [vmem:[#allocation5 + $0x418] sm:$0xff]
    %v406 = vld [vmem:[#allocation5 + $0x420] sm:$0xff]
    %v407 = vld [vmem:[#allocation5 + $0x428] sm:$0xff]
    %v408 = vld [vmem:[#allocation5 + $0x430] sm:$0xff]
    %v409 = vld [vmem:[#allocation5 + $0x438] sm:$0xff]
    %v410 = vld [vmem:[#allocation5 + $0x440] sm:$0xff]
    %v411 = vld [vmem:[#allocation5 + $0x448] sm:$0xff]
    %v412 = vld [vmem:[#allocation5 + $0x450] sm:$0xff]
    %v413 = vld [vmem:[#allocation5 + $0x458] sm:$0xff]
    %v414 = vld [vmem:[#allocation5 + $0x460] sm:$0xff]
    %v415 = vld [vmem:[#allocation5 + $0x468] sm:$0xff]
    %v416 = vld [vmem:[#allocation5 + $0x470] sm:$0xff]
    %v417 = vld [vmem:[#allocation5 + $0x478] sm:$0xff]
    %v418 = vld [vmem:[#allocation5 + $0x480] sm:$0xff]
    %v419 = vld [vmem:[#allocation5 + $0x488] sm:$0xff]
    %v420 = vld [vmem:[#allocation5 + $0x490] sm:$0xff]
    %v421 = vld [vmem:[#allocation5 + $0x498] sm:$0xff]
    %v422 = vld [vmem:[#allocation5 + $0x4a0] sm:$0xff]
    %v423 = vld [vmem:[#allocation5 + $0x4a8] sm:$0xff]
    %v424 = vld [vmem:[#allocation5 + $0x4b0] sm:$0xff]
    %v425 = vld [vmem:[#allocation5 + $0x4b8] sm:$0xff]
    %v426 = vld [vmem:[#allocation5 + $0x4c0] sm:$0xff]
    %v427 = vld [vmem:[#allocation5 + $0x4c8] sm:$0xff]
    %v428 = vld [vmem:[#allocation5 + $0x4d0] sm:$0xff]
    %v429 = vld [vmem:[#allocation5 + $0x4d8] sm:$0xff]
    %v430 = vld [vmem:[#allocation5 + $0x4e0] sm:$0xff]
    %v431 = vld [vmem:[#allocation5 + $0x4e8] sm:$0xff]
    %v432 = vld [vmem:[#allocation5 + $0x4f0] sm:$0xff]
    %v433 = vld [vmem:[#allocation5 + $0x4f8] sm:$0xff]
    %v434 = vld [vmem:[#allocation17] sm:$0x1f]
    %v436 = vlaneseq
    %v437 = vshrl.u32 %v436, 7
    %v438 = vsub.s32 0, %v437
    %v439 = vrot.slane %v434, %v438
    %v440 = vlaneseq
    %v441 = vshrl.u32 %v440, 7
    %v442 = vsub.s32 1, %v441
    %v443 = vrot.slane %v434, %v442
    %v444 = vlaneseq
    %v445 = vshrl.u32 %v444, 7
    %v446 = vsub.s32 2, %v445
    %v447 = vrot.slane %v434, %v446
    %v448 = vlaneseq
    %v449 = vshrl.u32 %v448, 7
    %v450 = vsub.s32 3, %v449
    %v451 = vrot.slane %v434, %v450
    %v452 = vlaneseq
    %v453 = vshrl.u32 %v452, 7
    %v454 = vsub.s32 4, %v453
    %v455 = vrot.slane %v434, %v454
    %461 = vmatprep.subr.mxu0 %v275
    %462 = vmatpush1.msra.mxu0 %v274
    %463 = vmatprep.subr.mxu0 %v280
    %464 = vmatpush1.msra.mxu0 %v279
    %465 = vmatprep.subr.mxu0 %v285
    %466 = vmatpush1.msra.mxu0 %v284
    %467 = vmatprep.subr.mxu0 %v290
    %468 = vmatpush1.msra.mxu0 %v289
    %469 = vmatprep.subr.mxu0 %v295
    %470 = vmatpush1.msra.mxu0 %v294
    %471 = vmatprep.subr.mxu0 %v300
    %472 = vmatpush1.msra.mxu0 %v299
    %473 = vmatprep.subr.mxu0 %v305
    %474 = vmatpush1.msra.mxu0 %v304
    %475 = vmatprep.subr.mxu0 %v310
    %476 = vmatpush1.msra.mxu0 %v309
    %477 = vmatprep.subr.mxu0 %v315
    %478 = vmatpush1.msra.mxu0 %v314
    %479 = vmatprep.subr.mxu0 %v320
    %480 = vmatpush1.msra.mxu0 %v319
    %481 = vmatprep.subr.mxu0 %v325
    %482 = vmatpush1.msra.mxu0 %v324
    %483 = vmatprep.subr.mxu0 %v330
    %484 = vmatpush1.msra.mxu0 %v329
    %485 = vmatprep.subr.mxu0 %v335
    %486 = vmatpush1.msra.mxu0 %v334
    %487 = vmatprep.subr.mxu0 %v340
    %488 = vmatpush1.msra.mxu0 %v339
    %489 = vmatprep.subr.mxu0 %v345
    %490 = vmatpush1.msra.mxu0 %v344
    %491 = vmatprep.subr.mxu0 %v350
    %492 = vmatpush1.msra.mxu0 %v349
    %493 = vmatprep.subr.mxu0 %v355
    %494 = vmatpush1.msra.mxu0 %v354
    %495 = vmatprep.subr.mxu0 %v360
    %496 = vmatpush1.msra.mxu0 %v359
    %497 = vmatprep.subr.mxu0 %v365
    %498 = vmatpush1.msra.mxu0 %v364
    %499 = vmatprep.subr.mxu0 %v370
    %500 = vmatpush1.msra.mxu0 %v369
    %501 = vmatprep.subr.mxu0 %v375
    %502 = vmatpush1.msra.mxu0 %v374
    %503 = vmatprep.subr.mxu0 %v380
    %504 = vmatpush1.msra.mxu0 %v379
    %505 = vmatprep.subr.mxu0 %v385
    %506 = vmatpush1.msra.mxu0 %v384
    %507 = vmatprep.subr.mxu0 %v390
    %508 = vmatpush1.msra.mxu0 %v389
    %509 = vmatprep.subr.mxu0 %v395
    %510 = vmatpush1.msra.mxu0 %v394
    %511 = vmatprep.subr.mxu0 %v400
    %512 = vmatpush1.msra.mxu0 %v399
    %513 = vmatprep.subr.mxu0 %v405
    %514 = vmatpush1.msra.mxu0 %v404
    %515 = vmatprep.subr.mxu0 %v410
    %516 = vmatpush1.msra.mxu0 %v409
    %517 = vmatprep.subr.mxu0 %v415
    %518 = vmatpush1.msra.mxu0 %v414
    %519 = vmatprep.subr.mxu0 %v420
    %520 = vmatpush1.msra.mxu0 %v419
    %521 = vmatprep.subr.mxu0 %v425
    %522 = vmatpush1.msra.mxu0 %v424
    %523 = vmatprep.subr.mxu0 %v430
    %524 = vmatpush1.msra.mxu0 %v429
    %525 = vmatprep.mubr.f32.mxu0 %v273
    %526 = vmatmul.mubr.f32.gmra.mrb[0].mxu0 %v272
    %v527 = vpop.f32.mrb[0].mxu0
    %v528 = vadd.f32 %v439, %v527
    %v529 = vpop.f32.mrb[0].mxu0
    %v530 = vadd.f32 %v443, %v529
    %531 = vdwg.mxu0
    %532 = vmatprep.subr.mxu0 %v277
    %533 = vmatpush1.msra.mxu0 %v276
    %534 = vmatprep.subr.mxu0 %v282
    %535 = vmatpush1.msra.mxu0 %v281
    %536 = vmatprep.subr.mxu0 %v287
    %537 = vmatpush1.msra.mxu0 %v286
    %538 = vmatprep.subr.mxu0 %v292
    %539 = vmatpush1.msra.mxu0 %v291
    %540 = vmatprep.subr.mxu0 %v297
    %541 = vmatpush1.msra.mxu0 %v296
    %542 = vmatprep.subr.mxu0 %v302
    %543 = vmatpush1.msra.mxu0 %v301
    %544 = vmatprep.subr.mxu0 %v307
    %545 = vmatpush1.msra.mxu0 %v306
    %546 = vmatprep.subr.mxu0 %v312
    %547 = vmatpush1.msra.mxu0 %v311
    %548 = vmatprep.subr.mxu0 %v317
    %549 = vmatpush1.msra.mxu0 %v316
    %550 = vmatprep.subr.mxu0 %v322
    %551 = vmatpush1.msra.mxu0 %v321
    %552 = vmatprep.subr.mxu0 %v327
    %553 = vmatpush1.msra.mxu0 %v326
    %554 = vmatprep.subr.mxu0 %v332
    %555 = vmatpush1.msra.mxu0 %v331
    %556 = vmatprep.subr.mxu0 %v337
    %557 = vmatpush1.msra.mxu0 %v336
    %558 = vmatprep.subr.mxu0 %v342
    %559 = vmatpush1.msra.mxu0 %v341
    %560 = vmatprep.subr.mxu0 %v347
    %561 = vmatpush1.msra.mxu0 %v346
    %562 = vmatprep.subr.mxu0 %v352
    %563 = vmatpush1.msra.mxu0 %v351
    %564 = vmatprep.subr.mxu0 %v357
    %565 = vmatpush1.msra.mxu0 %v356
    %566 = vmatprep.subr.mxu0 %v362
    %567 = vmatpush1.msra.mxu0 %v361
    %568 = vmatprep.subr.mxu0 %v367
    %569 = vmatpush1.msra.mxu0 %v366
    %570 = vmatprep.subr.mxu0 %v372
    %571 = vmatpush1.msra.mxu0 %v371
    %572 = vmatprep.subr.mxu0 %v377
    %573 = vmatpush1.msra.mxu0 %v376
    %574 = vmatprep.subr.mxu0 %v382
    %575 = vmatpush1.msra.mxu0 %v381
    %576 = vmatprep.subr.mxu0 %v387
    %577 = vmatpush1.msra.mxu0 %v386
    %578 = vmatprep.subr.mxu0 %v392
    %579 = vmatpush1.msra.mxu0 %v391
    %580 = vmatprep.subr.mxu0 %v397
    %581 = vmatpush1.msra.mxu0 %v396
    %582 = vmatprep.subr.mxu0 %v402
    %583 = vmatpush1.msra.mxu0 %v401
    %584 = vmatprep.subr.mxu0 %v407
    %585 = vmatpush1.msra.mxu0 %v406
    %586 = vmatprep.subr.mxu0 %v412
    %587 = vmatpush1.msra.mxu0 %v411
    %588 = vmatprep.subr.mxu0 %v417
    %589 = vmatpush1.msra.mxu0 %v416
    %590 = vmatprep.subr.mxu0 %v422
    %591 = vmatpush1.msra.mxu0 %v421
    %592 = vmatprep.subr.mxu0 %v427
    %593 = vmatpush1.msra.mxu0 %v426
    %594 = vmatprep.subr.mxu0 %v432
    %595 = vmatpush1.msra.mxu0 %v431
    %596 = vmatprep.mubr.f32.mxu0 %v273
    %597 = vmatmul.mubr.f32.gmra.mrb[0].mxu0 %v272
    %v598 = vpop.f32.mrb[0].mxu0
    %v599 = vadd.f32 %v447, %v598
    %v600 = vpop.f32.mrb[0].mxu0
    %v601 = vadd.f32 %v451, %v600
    %602 = vdwg.mxu0
    %603 = vmatprep.subr.mxu0 0.0
    %604 = vmatpush1.msra.mxu0 %v278
    %605 = vmatprep.subr.mxu0 0.0
    %606 = vmatpush1.msra.mxu0 %v283
    %607 = vmatprep.subr.mxu0 0.0
    %608 = vmatpush1.msra.mxu0 %v288
    %609 = vmatprep.subr.mxu0 0.0
    %610 = vmatpush1.msra.mxu0 %v293
    %611 = vmatprep.subr.mxu0 0.0
    %612 = vmatpush1.msra.mxu0 %v298
    %613 = vmatprep.subr.mxu0 0.0
    %614 = vmatpush1.msra.mxu0 %v303
    %615 = vmatprep.subr.mxu0 0.0
    %616 = vmatpush1.msra.mxu0 %v308
    %617 = vmatprep.subr.mxu0 0.0
    %618 = vmatpush1.msra.mxu0 %v313
    %619 = vmatprep.subr.mxu0 0.0
    %620 = vmatpush1.msra.mxu0 %v318
    %621 = vmatprep.subr.mxu0 0.0
    %622 = vmatpush1.msra.mxu0 %v323
    %623 = vmatprep.subr.mxu0 0.0
    %624 = vmatpush1.msra.mxu0 %v328
    %625 = vmatprep.subr.mxu0 0.0
    %626 = vmatpush1.msra.mxu0 %v333
    %627 = vmatprep.subr.mxu0 0.0
    %628 = vmatpush1.msra.mxu0 %v338
    %629 = vmatprep.subr.mxu0 0.0
    %630 = vmatpush1.msra.mxu0 %v343
    %631 = vmatprep.subr.mxu0 0.0
    %632 = vmatpush1.msra.mxu0 %v348
    %633 = vmatprep.subr.mxu0 0.0
    %634 = vmatpush1.msra.mxu0 %v353
    %635 = vmatprep.subr.mxu0 0.0
    %636 = vmatpush1.msra.mxu0 %v358
    %637 = vmatprep.subr.mxu0 0.0
    %638 = vmatpush1.msra.mxu0 %v363
    %639 = vmatprep.subr.mxu0 0.0
    %640 = vmatpush1.msra.mxu0 %v368
    %641 = vmatprep.subr.mxu0 0.0
    %642 = vmatpush1.msra.mxu0 %v373
    %643 = vmatprep.subr.mxu0 0.0
    %644 = vmatpush1.msra.mxu0 %v378
    %645 = vmatprep.subr.mxu0 0.0
    %646 = vmatpush1.msra.mxu0 %v383
    %647 = vmatprep.subr.mxu0 0.0
    %648 = vmatpush1.msra.mxu0 %v388
    %649 = vmatprep.subr.mxu0 0.0
    %650 = vmatpush1.msra.mxu0 %v393
    %651 = vmatprep.subr.mxu0 0.0
    %652 = vmatpush1.msra.mxu0 %v398
    %653 = vmatprep.subr.mxu0 0.0
    %654 = vmatpush1.msra.mxu0 %v403
    %655 = vmatprep.subr.mxu0 0.0
    %656 = vmatpush1.msra.mxu0 %v408
    %657 = vmatprep.subr.mxu0 0.0
    %658 = vmatpush1.msra.mxu0 %v413
    %659 = vmatprep.subr.mxu0 0.0
    %660 = vmatpush1.msra.mxu0 %v418
    %661 = vmatprep.subr.mxu0 0.0
    %662 = vmatpush1.msra.mxu0 %v423
    %663 = vmatprep.subr.mxu0 0.0
    %664 = vmatpush1.msra.mxu0 %v428
    %665 = vmatprep.subr.mxu0 0.0
    %666 = vmatpush1.msra.mxu0 %v433
    %667 = vmatprep.mubr.f32.mxu0 %v273
    %668 = vmatmul.mubr.f32.gmra.mrb[0].mxu0 %v272
    %v669 = vpop.f32.mrb[0].mxu0
    %v670 = vadd.f32 %v455, %v669
    %v671 = vpop.f32.mrb[0].mxu0
    %672 = vdwg.mxu0
    %v673 = vmax.f32 %v528, 0.0
    %v674 = vmax.f32 %v530, 0.0
    %v675 = vmax.f32 %v599, 0.0
    %v676 = vmax.f32 %v601, 0.0
    %v677 = vmax.f32 %v670, 0.0
    %v678 = vld [vmem:[#allocation7] sm:$0xff]
    %v679 = vld [vmem:[#allocation7 + $0x8] sm:$0xff]
    %v680 = vld [vmem:[#allocation7 + $0x10] sm:$0xff]
    %v681 = vld [vmem:[#allocation7 + $0x18] sm:$0xff]
    %v682 = vld [vmem:[#allocation7 + $0x20] sm:$0xff]
    %v683 = vld [vmem:[#allocation7 + $0x28] sm:$0xff]
    %v684 = vld [vmem:[#allocation7 + $0x30] sm:$0xff]
    %v685 = vld [vmem:[#allocation7 + $0x38] sm:$0xff]
    %v686 = vld [vmem:[#allocation7 + $0x40] sm:$0xff]
    %v687 = vld [vmem:[#allocation7 + $0x48] sm:$0xff]
    %v688 = vld [vmem:[#allocation7 + $0x50] sm:$0xff]
    %v689 = vld [vmem:[#allocation7 + $0x58] sm:$0xff]
    %v690 = vld [vmem:[#allocation7 + $0x60] sm:$0xff]
    %v691 = vld [vmem:[#allocation7 + $0x68] sm:$0xff]
    %v692 = vld [vmem:[#allocation7 + $0x70] sm:$0xff]
    %v693 = vld [vmem:[#allocation7 + $0x78] sm:$0xff]
    %v694 = vld [vmem:[#allocation7 + $0x80] sm:$0xff]
    %v695 = vld [vmem:[#allocation7 + $0x88] sm:$0xff]
    %v696 = vld [vmem:[#allocation7 + $0x90] sm:$0xff]
    %v697 = vld [vmem:[#allocation7 + $0x98] sm:$0xff]
    %v698 = vld [vmem:[#allocation7 + $0xa0] sm:$0xff]
    %v699 = vld [vmem:[#allocation7 + $0xa8] sm:$0xff]
    %v700 = vld [vmem:[#allocation7 + $0xb0] sm:$0xff]
    %v701 = vld [vmem:[#allocation7 + $0xb8] sm:$0xff]
    %v702 = vld [vmem:[#allocation7 + $0xc0] sm:$0xff]
    %v703 = vld [vmem:[#allocation7 + $0xc8] sm:$0xff]
    %v704 = vld [vmem:[#allocation7 + $0xd0] sm:$0xff]
    %v705 = vld [vmem:[#allocation7 + $0xd8] sm:$0xff]
    %v706 = vld [vmem:[#allocation7 + $0xe0] sm:$0xff]
    %v707 = vld [vmem:[#allocation7 + $0xe8] sm:$0xff]
    %v708 = vld [vmem:[#allocation7 + $0xf0] sm:$0xff]
    %v709 = vld [vmem:[#allocation7 + $0xf8] sm:$0xff]
    %v710 = vld [vmem:[#allocation7 + $0x100] sm:$0xff]
    %v711 = vld [vmem:[#allocation7 + $0x108] sm:$0xff]
    %v712 = vld [vmem:[#allocation7 + $0x110] sm:$0xff]
    %v713 = vld [vmem:[#allocation7 + $0x118] sm:$0xff]
    %v714 = vld [vmem:[#allocation7 + $0x120] sm:$0xff]
    %v715 = vld [vmem:[#allocation7 + $0x128] sm:$0xff]
    %v716 = vld [vmem:[#allocation7 + $0x130] sm:$0xff]
    %v717 = vld [vmem:[#allocation7 + $0x138] sm:$0xff]
    %v718 = vld [vmem:[#allocation7 + $0x140] sm:$0xff]
    %v719 = vld [vmem:[#allocation7 + $0x148] sm:$0xff]
    %v720 = vld [vmem:[#allocation7 + $0x150] sm:$0xff]
    %v721 = vld [vmem:[#allocation7 + $0x158] sm:$0xff]
    %v722 = vld [vmem:[#allocation7 + $0x160] sm:$0xff]
    %v723 = vld [vmem:[#allocation7 + $0x168] sm:$0xff]
    %v724 = vld [vmem:[#allocation7 + $0x170] sm:$0xff]
    %v725 = vld [vmem:[#allocation7 + $0x178] sm:$0xff]
    %v726 = vld [vmem:[#allocation7 + $0x180] sm:$0xff]
    %v727 = vld [vmem:[#allocation7 + $0x188] sm:$0xff]
    %v728 = vld [vmem:[#allocation7 + $0x190] sm:$0xff]
    %v729 = vld [vmem:[#allocation7 + $0x198] sm:$0xff]
    %v730 = vld [vmem:[#allocation7 + $0x1a0] sm:$0xff]
    %v731 = vld [vmem:[#allocation7 + $0x1a8] sm:$0xff]
    %v732 = vld [vmem:[#allocation7 + $0x1b0] sm:$0xff]
    %v733 = vld [vmem:[#allocation7 + $0x1b8] sm:$0xff]
    %v734 = vld [vmem:[#allocation7 + $0x1c0] sm:$0xff]
    %v735 = vld [vmem:[#allocation7 + $0x1c8] sm:$0xff]
    %v736 = vld [vmem:[#allocation7 + $0x1d0] sm:$0xff]
    %v737 = vld [vmem:[#allocation7 + $0x1d8] sm:$0xff]
    %v738 = vld [vmem:[#allocation7 + $0x1e0] sm:$0xff]
    %v739 = vld [vmem:[#allocation7 + $0x1e8] sm:$0xff]
    %v740 = vld [vmem:[#allocation7 + $0x1f0] sm:$0xff]
    %v741 = vld [vmem:[#allocation7 + $0x1f8] sm:$0xff]
    %v742 = vld [vmem:[#allocation7 + $0x200] sm:$0xff]
    %v743 = vld [vmem:[#allocation7 + $0x208] sm:$0xff]
    %v744 = vld [vmem:[#allocation7 + $0x210] sm:$0xff]
    %v745 = vld [vmem:[#allocation7 + $0x218] sm:$0xff]
    %v746 = vld [vmem:[#allocation7 + $0x220] sm:$0xff]
    %v747 = vld [vmem:[#allocation7 + $0x228] sm:$0xff]
    %v748 = vld [vmem:[#allocation7 + $0x230] sm:$0xff]
    %v749 = vld [vmem:[#allocation7 + $0x238] sm:$0xff]
    %v750 = vld [vmem:[#allocation7 + $0x240] sm:$0xff]
    %v751 = vld [vmem:[#allocation7 + $0x248] sm:$0xff]
    %v752 = vld [vmem:[#allocation7 + $0x250] sm:$0xff]
    %v753 = vld [vmem:[#allocation7 + $0x258] sm:$0xff]
    %v754 = vld [vmem:[#allocation7 + $0x260] sm:$0xff]
    %v755 = vld [vmem:[#allocation7 + $0x268] sm:$0xff]
    %v756 = vld [vmem:[#allocation7 + $0x270] sm:$0xff]
    %v757 = vld [vmem:[#allocation7 + $0x278] sm:$0xff]
    %v758 = vld [vmem:[#allocation7 + $0x280] sm:$0xff]
    %v759 = vld [vmem:[#allocation7 + $0x288] sm:$0xff]
    %v760 = vld [vmem:[#allocation7 + $0x290] sm:$0xff]
    %v761 = vld [vmem:[#allocation7 + $0x298] sm:$0xff]
    %v762 = vld [vmem:[#allocation7 + $0x2a0] sm:$0xff]
    %v763 = vld [vmem:[#allocation7 + $0x2a8] sm:$0xff]
    %v764 = vld [vmem:[#allocation7 + $0x2b0] sm:$0xff]
    %v765 = vld [vmem:[#allocation7 + $0x2b8] sm:$0xff]
    %v766 = vld [vmem:[#allocation7 + $0x2c0] sm:$0xff]
    %v767 = vld [vmem:[#allocation7 + $0x2c8] sm:$0xff]
    %v768 = vld [vmem:[#allocation7 + $0x2d0] sm:$0xff]
    %v769 = vld [vmem:[#allocation7 + $0x2d8] sm:$0xff]
    %v770 = vld [vmem:[#allocation7 + $0x2e0] sm:$0xff]
    %v771 = vld [vmem:[#allocation7 + $0x2e8] sm:$0xff]
    %v772 = vld [vmem:[#allocation7 + $0x2f0] sm:$0xff]
    %v773 = vld [vmem:[#allocation7 + $0x2f8] sm:$0xff]
    %v774 = vld [vmem:[#allocation7 + $0x300] sm:$0xff]
    %v775 = vld [vmem:[#allocation7 + $0x308] sm:$0xff]
    %v776 = vld [vmem:[#allocation7 + $0x310] sm:$0xff]
    %v777 = vld [vmem:[#allocation7 + $0x318] sm:$0xff]
    %v778 = vld [vmem:[#allocation7 + $0x320] sm:$0xff]
    %v779 = vld [vmem:[#allocation7 + $0x328] sm:$0xff]
    %v780 = vld [vmem:[#allocation7 + $0x330] sm:$0xff]
    %v781 = vld [vmem:[#allocation7 + $0x338] sm:$0xff]
    %v782 = vld [vmem:[#allocation7 + $0x340] sm:$0xff]
    %v783 = vld [vmem:[#allocation7 + $0x348] sm:$0xff]
    %v784 = vld [vmem:[#allocation7 + $0x350] sm:$0xff]
    %v785 = vld [vmem:[#allocation7 + $0x358] sm:$0xff]
    %v786 = vld [vmem:[#allocation7 + $0x360] sm:$0xff]
    %v787 = vld [vmem:[#allocation7 + $0x368] sm:$0xff]
    %v788 = vld [vmem:[#allocation7 + $0x370] sm:$0xff]
    %v789 = vld [vmem:[#allocation7 + $0x378] sm:$0xff]
    %v790 = vld [vmem:[#allocation7 + $0x380] sm:$0xff]
    %v791 = vld [vmem:[#allocation7 + $0x388] sm:$0xff]
    %v792 = vld [vmem:[#allocation7 + $0x390] sm:$0xff]
    %v793 = vld [vmem:[#allocation7 + $0x398] sm:$0xff]
    %v794 = vld [vmem:[#allocation7 + $0x3a0] sm:$0xff]
    %v795 = vld [vmem:[#allocation7 + $0x3a8] sm:$0xff]
    %v796 = vld [vmem:[#allocation7 + $0x3b0] sm:$0xff]
    %v797 = vld [vmem:[#allocation7 + $0x3b8] sm:$0xff]
    %v798 = vld [vmem:[#allocation7 + $0x3c0] sm:$0xff]
    %v799 = vld [vmem:[#allocation7 + $0x3c8] sm:$0xff]
    %v800 = vld [vmem:[#allocation7 + $0x3d0] sm:$0xff]
    %v801 = vld [vmem:[#allocation7 + $0x3d8] sm:$0xff]
    %v802 = vld [vmem:[#allocation7 + $0x3e0] sm:$0xff]
    %v803 = vld [vmem:[#allocation7 + $0x3e8] sm:$0xff]
    %v804 = vld [vmem:[#allocation7 + $0x3f0] sm:$0xff]
    %v805 = vld [vmem:[#allocation7 + $0x3f8] sm:$0xff]
    %v806 = vld [vmem:[#allocation7 + $0x400] sm:$0xff]
    %v807 = vld [vmem:[#allocation7 + $0x408] sm:$0xff]
    %v808 = vld [vmem:[#allocation7 + $0x410] sm:$0xff]
    %v809 = vld [vmem:[#allocation7 + $0x418] sm:$0xff]
    %v810 = vld [vmem:[#allocation7 + $0x420] sm:$0xff]
    %v811 = vld [vmem:[#allocation7 + $0x428] sm:$0xff]
    %v812 = vld [vmem:[#allocation7 + $0x430] sm:$0xff]
    %v813 = vld [vmem:[#allocation7 + $0x438] sm:$0xff]
    %v814 = vld [vmem:[#allocation7 + $0x440] sm:$0xff]
    %v815 = vld [vmem:[#allocation7 + $0x448] sm:$0xff]
    %v816 = vld [vmem:[#allocation7 + $0x450] sm:$0xff]
    %v817 = vld [vmem:[#allocation7 + $0x458] sm:$0xff]
    %v818 = vld [vmem:[#allocation7 + $0x460] sm:$0xff]
    %v819 = vld [vmem:[#allocation7 + $0x468] sm:$0xff]
    %v820 = vld [vmem:[#allocation7 + $0x470] sm:$0xff]
    %v821 = vld [vmem:[#allocation7 + $0x478] sm:$0xff]
    %v822 = vld [vmem:[#allocation7 + $0x480] sm:$0xff]
    %v823 = vld [vmem:[#allocation7 + $0x488] sm:$0xff]
    %v824 = vld [vmem:[#allocation7 + $0x490] sm:$0xff]
    %v825 = vld [vmem:[#allocation7 + $0x498] sm:$0xff]
    %v826 = vld [vmem:[#allocation7 + $0x4a0] sm:$0xff]
    %v827 = vld [vmem:[#allocation7 + $0x4a8] sm:$0xff]
    %v828 = vld [vmem:[#allocation7 + $0x4b0] sm:$0xff]
    %v829 = vld [vmem:[#allocation7 + $0x4b8] sm:$0xff]
    %v830 = vld [vmem:[#allocation7 + $0x4c0] sm:$0xff]
    %v831 = vld [vmem:[#allocation7 + $0x4c8] sm:$0xff]
    %v832 = vld [vmem:[#allocation7 + $0x4d0] sm:$0xff]
    %v833 = vld [vmem:[#allocation7 + $0x4d8] sm:$0xff]
    %v834 = vld [vmem:[#allocation7 + $0x4e0] sm:$0xff]
    %v835 = vld [vmem:[#allocation7 + $0x4e8] sm:$0xff]
    %v836 = vld [vmem:[#allocation7 + $0x4f0] sm:$0xff]
    %v837 = vld [vmem:[#allocation7 + $0x4f8] sm:$0xff]
    %v838 = vld [vmem:[#allocation7 + $0x500] sm:$0xff]
    %v839 = vld [vmem:[#allocation7 + $0x508] sm:$0xff]
    %v840 = vld [vmem:[#allocation7 + $0x510] sm:$0xff]
    %v841 = vld [vmem:[#allocation7 + $0x518] sm:$0xff]
    %v842 = vld [vmem:[#allocation7 + $0x520] sm:$0xff]
    %v843 = vld [vmem:[#allocation7 + $0x528] sm:$0xff]
    %v844 = vld [vmem:[#allocation7 + $0x530] sm:$0xff]
    %v845 = vld [vmem:[#allocation7 + $0x538] sm:$0xff]
    %v846 = vld [vmem:[#allocation7 + $0x540] sm:$0xff]
    %v847 = vld [vmem:[#allocation7 + $0x548] sm:$0xff]
    %v848 = vld [vmem:[#allocation7 + $0x550] sm:$0xff]
    %v849 = vld [vmem:[#allocation7 + $0x558] sm:$0xff]
    %v850 = vld [vmem:[#allocation7 + $0x560] sm:$0xff]
    %v851 = vld [vmem:[#allocation7 + $0x568] sm:$0xff]
    %v852 = vld [vmem:[#allocation7 + $0x570] sm:$0xff]
    %v853 = vld [vmem:[#allocation7 + $0x578] sm:$0xff]
    %v854 = vld [vmem:[#allocation7 + $0x580] sm:$0xff]
    %v855 = vld [vmem:[#allocation7 + $0x588] sm:$0xff]
    %v856 = vld [vmem:[#allocation7 + $0x590] sm:$0xff]
    %v857 = vld [vmem:[#allocation7 + $0x598] sm:$0xff]
    %v858 = vld [vmem:[#allocation7 + $0x5a0] sm:$0xff]
    %v859 = vld [vmem:[#allocation7 + $0x5a8] sm:$0xff]
    %v860 = vld [vmem:[#allocation7 + $0x5b0] sm:$0xff]
    %v861 = vld [vmem:[#allocation7 + $0x5b8] sm:$0xff]
    %v862 = vld [vmem:[#allocation7 + $0x5c0] sm:$0xff]
    %v863 = vld [vmem:[#allocation7 + $0x5c8] sm:$0xff]
    %v864 = vld [vmem:[#allocation7 + $0x5d0] sm:$0xff]
    %v865 = vld [vmem:[#allocation7 + $0x5d8] sm:$0xff]
    %v866 = vld [vmem:[#allocation7 + $0x5e0] sm:$0xff]
    %v867 = vld [vmem:[#allocation7 + $0x5e8] sm:$0xff]
    %v868 = vld [vmem:[#allocation7 + $0x5f0] sm:$0xff]
    %v869 = vld [vmem:[#allocation7 + $0x5f8] sm:$0xff]
    %v870 = vld [vmem:[#allocation7 + $0x600] sm:$0xff]
    %v871 = vld [vmem:[#allocation7 + $0x608] sm:$0xff]
    %v872 = vld [vmem:[#allocation7 + $0x610] sm:$0xff]
    %v873 = vld [vmem:[#allocation7 + $0x618] sm:$0xff]
    %v874 = vld [vmem:[#allocation7 + $0x620] sm:$0xff]
    %v875 = vld [vmem:[#allocation7 + $0x628] sm:$0xff]
    %v876 = vld [vmem:[#allocation7 + $0x630] sm:$0xff]
    %v877 = vld [vmem:[#allocation7 + $0x638] sm:$0xff]
    %v878 = vld [vmem:[#allocation7 + $0x640] sm:$0xff]
    %v879 = vld [vmem:[#allocation7 + $0x648] sm:$0xff]
    %v880 = vld [vmem:[#allocation7 + $0x650] sm:$0xff]
    %v881 = vld [vmem:[#allocation7 + $0x658] sm:$0xff]
    %v882 = vld [vmem:[#allocation7 + $0x660] sm:$0xff]
    %v883 = vld [vmem:[#allocation7 + $0x668] sm:$0xff]
    %v884 = vld [vmem:[#allocation7 + $0x670] sm:$0xff]
    %v885 = vld [vmem:[#allocation7 + $0x678] sm:$0xff]
    %v886 = vld [vmem:[#allocation7 + $0x680] sm:$0xff]
    %v887 = vld [vmem:[#allocation7 + $0x688] sm:$0xff]
    %v888 = vld [vmem:[#allocation7 + $0x690] sm:$0xff]
    %v889 = vld [vmem:[#allocation7 + $0x698] sm:$0xff]
    %v890 = vld [vmem:[#allocation7 + $0x6a0] sm:$0xff]
    %v891 = vld [vmem:[#allocation7 + $0x6a8] sm:$0xff]
    %v892 = vld [vmem:[#allocation7 + $0x6b0] sm:$0xff]
    %v893 = vld [vmem:[#allocation7 + $0x6b8] sm:$0xff]
    %v894 = vld [vmem:[#allocation7 + $0x6c0] sm:$0xff]
    %v895 = vld [vmem:[#allocation7 + $0x6c8] sm:$0xff]
    %v896 = vld [vmem:[#allocation7 + $0x6d0] sm:$0xff]
    %v897 = vld [vmem:[#allocation7 + $0x6d8] sm:$0xff]
    %v898 = vld [vmem:[#allocation7 + $0x6e0] sm:$0xff]
    %v899 = vld [vmem:[#allocation7 + $0x6e8] sm:$0xff]
    %v900 = vld [vmem:[#allocation7 + $0x6f0] sm:$0xff]
    %v901 = vld [vmem:[#allocation7 + $0x6f8] sm:$0xff]
    %v902 = vld [vmem:[#allocation7 + $0x700] sm:$0xff]
    %v903 = vld [vmem:[#allocation7 + $0x708] sm:$0xff]
    %v904 = vld [vmem:[#allocation7 + $0x710] sm:$0xff]
    %v905 = vld [vmem:[#allocation7 + $0x718] sm:$0xff]
    %v906 = vld [vmem:[#allocation7 + $0x720] sm:$0xff]
    %v907 = vld [vmem:[#allocation7 + $0x728] sm:$0xff]
    %v908 = vld [vmem:[#allocation7 + $0x730] sm:$0xff]
    %v909 = vld [vmem:[#allocation7 + $0x738] sm:$0xff]
    %v910 = vld [vmem:[#allocation7 + $0x740] sm:$0xff]
    %v911 = vld [vmem:[#allocation7 + $0x748] sm:$0xff]
    %v912 = vld [vmem:[#allocation7 + $0x750] sm:$0xff]
    %v913 = vld [vmem:[#allocation7 + $0x758] sm:$0xff]
    %v914 = vld [vmem:[#allocation7 + $0x760] sm:$0xff]
    %v915 = vld [vmem:[#allocation7 + $0x768] sm:$0xff]
    %v916 = vld [vmem:[#allocation7 + $0x770] sm:$0xff]
    %v917 = vld [vmem:[#allocation7 + $0x778] sm:$0xff]
    %v918 = vld [vmem:[#allocation7 + $0x780] sm:$0xff]
    %v919 = vld [vmem:[#allocation7 + $0x788] sm:$0xff]
    %v920 = vld [vmem:[#allocation7 + $0x790] sm:$0xff]
    %v921 = vld [vmem:[#allocation7 + $0x798] sm:$0xff]
    %v922 = vld [vmem:[#allocation7 + $0x7a0] sm:$0xff]
    %v923 = vld [vmem:[#allocation7 + $0x7a8] sm:$0xff]
    %v924 = vld [vmem:[#allocation7 + $0x7b0] sm:$0xff]
    %v925 = vld [vmem:[#allocation7 + $0x7b8] sm:$0xff]
    %v926 = vld [vmem:[#allocation7 + $0x7c0] sm:$0xff]
    %v927 = vld [vmem:[#allocation7 + $0x7c8] sm:$0xff]
    %v928 = vld [vmem:[#allocation7 + $0x7d0] sm:$0xff]
    %v929 = vld [vmem:[#allocation7 + $0x7d8] sm:$0xff]
    %v930 = vld [vmem:[#allocation7 + $0x7e0] sm:$0xff]
    %v931 = vld [vmem:[#allocation7 + $0x7e8] sm:$0xff]
    %v932 = vld [vmem:[#allocation7 + $0x7f0] sm:$0xff]
    %v933 = vld [vmem:[#allocation7 + $0x7f8] sm:$0xff]
    %v934 = vld [vmem:[#allocation7 + $0x800] sm:$0xff]
    %v935 = vld [vmem:[#allocation7 + $0x808] sm:$0xff]
    %v936 = vld [vmem:[#allocation7 + $0x810] sm:$0xff]
    %v937 = vld [vmem:[#allocation7 + $0x818] sm:$0xff]
    %v938 = vld [vmem:[#allocation7 + $0x820] sm:$0xff]
    %v939 = vld [vmem:[#allocation7 + $0x828] sm:$0xff]
    %v940 = vld [vmem:[#allocation7 + $0x830] sm:$0xff]
    %v941 = vld [vmem:[#allocation7 + $0x838] sm:$0xff]
    %v942 = vld [vmem:[#allocation7 + $0x840] sm:$0xff]
    %v943 = vld [vmem:[#allocation7 + $0x848] sm:$0xff]
    %v944 = vld [vmem:[#allocation7 + $0x850] sm:$0xff]
    %v945 = vld [vmem:[#allocation7 + $0x858] sm:$0xff]
    %v946 = vld [vmem:[#allocation7 + $0x860] sm:$0xff]
    %v947 = vld [vmem:[#allocation7 + $0x868] sm:$0xff]
    %v948 = vld [vmem:[#allocation7 + $0x870] sm:$0xff]
    %v949 = vld [vmem:[#allocation7 + $0x878] sm:$0xff]
    %v950 = vld [vmem:[#allocation7 + $0x880] sm:$0xff]
    %v951 = vld [vmem:[#allocation7 + $0x888] sm:$0xff]
    %v952 = vld [vmem:[#allocation7 + $0x890] sm:$0xff]
    %v953 = vld [vmem:[#allocation7 + $0x898] sm:$0xff]
    %v954 = vld [vmem:[#allocation7 + $0x8a0] sm:$0xff]
    %v955 = vld [vmem:[#allocation7 + $0x8a8] sm:$0xff]
    %v956 = vld [vmem:[#allocation7 + $0x8b0] sm:$0xff]
    %v957 = vld [vmem:[#allocation7 + $0x8b8] sm:$0xff]
    %v958 = vld [vmem:[#allocation7 + $0x8c0] sm:$0xff]
    %v959 = vld [vmem:[#allocation7 + $0x8c8] sm:$0xff]
    %v960 = vld [vmem:[#allocation7 + $0x8d0] sm:$0xff]
    %v961 = vld [vmem:[#allocation7 + $0x8d8] sm:$0xff]
    %v962 = vld [vmem:[#allocation7 + $0x8e0] sm:$0xff]
    %v963 = vld [vmem:[#allocation7 + $0x8e8] sm:$0xff]
    %v964 = vld [vmem:[#allocation7 + $0x8f0] sm:$0xff]
    %v965 = vld [vmem:[#allocation7 + $0x8f8] sm:$0xff]
    %v966 = vld [vmem:[#allocation7 + $0x900] sm:$0xff]
    %v967 = vld [vmem:[#allocation7 + $0x908] sm:$0xff]
    %v968 = vld [vmem:[#allocation7 + $0x910] sm:$0xff]
    %v969 = vld [vmem:[#allocation7 + $0x918] sm:$0xff]
    %v970 = vld [vmem:[#allocation7 + $0x920] sm:$0xff]
    %v971 = vld [vmem:[#allocation7 + $0x928] sm:$0xff]
    %v972 = vld [vmem:[#allocation7 + $0x930] sm:$0xff]
    %v973 = vld [vmem:[#allocation7 + $0x938] sm:$0xff]
    %v974 = vld [vmem:[#allocation7 + $0x940] sm:$0xff]
    %v975 = vld [vmem:[#allocation7 + $0x948] sm:$0xff]
    %v976 = vld [vmem:[#allocation7 + $0x950] sm:$0xff]
    %v977 = vld [vmem:[#allocation7 + $0x958] sm:$0xff]
    %v978 = vld [vmem:[#allocation7 + $0x960] sm:$0xff]
    %v979 = vld [vmem:[#allocation7 + $0x968] sm:$0xff]
    %v980 = vld [vmem:[#allocation7 + $0x970] sm:$0xff]
    %v981 = vld [vmem:[#allocation7 + $0x978] sm:$0xff]
    %v982 = vld [vmem:[#allocation7 + $0x980] sm:$0xff]
    %v983 = vld [vmem:[#allocation7 + $0x988] sm:$0xff]
    %v984 = vld [vmem:[#allocation7 + $0x990] sm:$0xff]
    %v985 = vld [vmem:[#allocation7 + $0x998] sm:$0xff]
    %v986 = vld [vmem:[#allocation7 + $0x9a0] sm:$0xff]
    %v987 = vld [vmem:[#allocation7 + $0x9a8] sm:$0xff]
    %v988 = vld [vmem:[#allocation7 + $0x9b0] sm:$0xff]
    %v989 = vld [vmem:[#allocation7 + $0x9b8] sm:$0xff]
    %v990 = vld [vmem:[#allocation7 + $0x9c0] sm:$0xff]
    %v991 = vld [vmem:[#allocation7 + $0x9c8] sm:$0xff]
    %v992 = vld [vmem:[#allocation7 + $0x9d0] sm:$0xff]
    %v993 = vld [vmem:[#allocation7 + $0x9d8] sm:$0xff]
    %v994 = vld [vmem:[#allocation7 + $0x9e0] sm:$0xff]
    %v995 = vld [vmem:[#allocation7 + $0x9e8] sm:$0xff]
    %v996 = vld [vmem:[#allocation7 + $0x9f0] sm:$0xff]
    %v997 = vld [vmem:[#allocation7 + $0x9f8] sm:$0xff]
    %v998 = vld [vmem:[#allocation7 + $0xa00] sm:$0xff]
    %v999 = vld [vmem:[#allocation7 + $0xa08] sm:$0xff]
    %v1000 = vld [vmem:[#allocation7 + $0xa10] sm:$0xff]
    %v1001 = vld [vmem:[#allocation7 + $0xa18] sm:$0xff]
    %v1002 = vld [vmem:[#allocation7 + $0xa20] sm:$0xff]
    %v1003 = vld [vmem:[#allocation7 + $0xa28] sm:$0xff]
    %v1004 = vld [vmem:[#allocation7 + $0xa30] sm:$0xff]
    %v1005 = vld [vmem:[#allocation7 + $0xa38] sm:$0xff]
    %v1006 = vld [vmem:[#allocation7 + $0xa40] sm:$0xff]
    %v1007 = vld [vmem:[#allocation7 + $0xa48] sm:$0xff]
    %v1008 = vld [vmem:[#allocation7 + $0xa50] sm:$0xff]
    %v1009 = vld [vmem:[#allocation7 + $0xa58] sm:$0xff]
    %v1010 = vld [vmem:[#allocation7 + $0xa60] sm:$0xff]
    %v1011 = vld [vmem:[#allocation7 + $0xa68] sm:$0xff]
    %v1012 = vld [vmem:[#allocation7 + $0xa70] sm:$0xff]
    %v1013 = vld [vmem:[#allocation7 + $0xa78] sm:$0xff]
    %v1014 = vld [vmem:[#allocation7 + $0xa80] sm:$0xff]
    %v1015 = vld [vmem:[#allocation7 + $0xa88] sm:$0xff]
    %v1016 = vld [vmem:[#allocation7 + $0xa90] sm:$0xff]
    %v1017 = vld [vmem:[#allocation7 + $0xa98] sm:$0xff]
    %v1018 = vld [vmem:[#allocation7 + $0xaa0] sm:$0xff]
    %v1019 = vld [vmem:[#allocation7 + $0xaa8] sm:$0xff]
    %v1020 = vld [vmem:[#allocation7 + $0xab0] sm:$0xff]
    %v1021 = vld [vmem:[#allocation7 + $0xab8] sm:$0xff]
    %v1022 = vld [vmem:[#allocation7 + $0xac0] sm:$0xff]
    %v1023 = vld [vmem:[#allocation7 + $0xac8] sm:$0xff]
    %v1024 = vld [vmem:[#allocation7 + $0xad0] sm:$0xff]
    %v1025 = vld [vmem:[#allocation7 + $0xad8] sm:$0xff]
    %v1026 = vld [vmem:[#allocation7 + $0xae0] sm:$0xff]
    %v1027 = vld [vmem:[#allocation7 + $0xae8] sm:$0xff]
    %v1028 = vld [vmem:[#allocation7 + $0xaf0] sm:$0xff]
    %v1029 = vld [vmem:[#allocation7 + $0xaf8] sm:$0xff]
    %v1030 = vld [vmem:[#allocation7 + $0xb00] sm:$0xff]
    %v1031 = vld [vmem:[#allocation7 + $0xb08] sm:$0xff]
    %v1032 = vld [vmem:[#allocation7 + $0xb10] sm:$0xff]
    %v1033 = vld [vmem:[#allocation7 + $0xb18] sm:$0xff]
    %v1034 = vld [vmem:[#allocation7 + $0xb20] sm:$0xff]
    %v1035 = vld [vmem:[#allocation7 + $0xb28] sm:$0xff]
    %v1036 = vld [vmem:[#allocation7 + $0xb30] sm:$0xff]
    %v1037 = vld [vmem:[#allocation7 + $0xb38] sm:$0xff]
    %v1038 = vld [vmem:[#allocation7 + $0xb40] sm:$0xff]
    %v1039 = vld [vmem:[#allocation7 + $0xb48] sm:$0xff]
    %v1040 = vld [vmem:[#allocation7 + $0xb50] sm:$0xff]
    %v1041 = vld [vmem:[#allocation7 + $0xb58] sm:$0xff]
    %v1042 = vld [vmem:[#allocation7 + $0xb60] sm:$0xff]
    %v1043 = vld [vmem:[#allocation7 + $0xb68] sm:$0xff]
    %v1044 = vld [vmem:[#allocation7 + $0xb70] sm:$0xff]
    %v1045 = vld [vmem:[#allocation7 + $0xb78] sm:$0xff]
    %v1046 = vld [vmem:[#allocation7 + $0xb80] sm:$0xff]
    %v1047 = vld [vmem:[#allocation7 + $0xb88] sm:$0xff]
    %v1048 = vld [vmem:[#allocation7 + $0xb90] sm:$0xff]
    %v1049 = vld [vmem:[#allocation7 + $0xb98] sm:$0xff]
    %v1050 = vld [vmem:[#allocation7 + $0xba0] sm:$0xff]
    %v1051 = vld [vmem:[#allocation7 + $0xba8] sm:$0xff]
    %v1052 = vld [vmem:[#allocation7 + $0xbb0] sm:$0xff]
    %v1053 = vld [vmem:[#allocation7 + $0xbb8] sm:$0xff]
    %v1054 = vld [vmem:[#allocation7 + $0xbc0] sm:$0xff]
    %v1055 = vld [vmem:[#allocation7 + $0xbc8] sm:$0xff]
    %v1056 = vld [vmem:[#allocation7 + $0xbd0] sm:$0xff]
    %v1057 = vld [vmem:[#allocation7 + $0xbd8] sm:$0xff]
    %v1058 = vld [vmem:[#allocation7 + $0xbe0] sm:$0xff]
    %v1059 = vld [vmem:[#allocation7 + $0xbe8] sm:$0xff]
    %v1060 = vld [vmem:[#allocation7 + $0xbf0] sm:$0xff]
    %v1061 = vld [vmem:[#allocation7 + $0xbf8] sm:$0xff]
    %v1062 = vld [vmem:[#allocation7 + $0xc00] sm:$0xff]
    %v1063 = vld [vmem:[#allocation7 + $0xc08] sm:$0xff]
    %v1064 = vld [vmem:[#allocation7 + $0xc10] sm:$0xff]
    %v1065 = vld [vmem:[#allocation7 + $0xc18] sm:$0xff]
    %v1066 = vld [vmem:[#allocation7 + $0xc20] sm:$0xff]
    %v1067 = vld [vmem:[#allocation7 + $0xc28] sm:$0xff]
    %v1068 = vld [vmem:[#allocation7 + $0xc30] sm:$0xff]
    %v1069 = vld [vmem:[#allocation7 + $0xc38] sm:$0xff]
    %v1070 = vld [vmem:[#allocation7 + $0xc40] sm:$0xff]
    %v1071 = vld [vmem:[#allocation7 + $0xc48] sm:$0xff]
    %v1072 = vld [vmem:[#allocation7 + $0xc50] sm:$0xff]
    %v1073 = vld [vmem:[#allocation7 + $0xc58] sm:$0xff]
    %v1074 = vld [vmem:[#allocation7 + $0xc60] sm:$0xff]
    %v1075 = vld [vmem:[#allocation7 + $0xc68] sm:$0xff]
    %v1076 = vld [vmem:[#allocation7 + $0xc70] sm:$0xff]
    %v1077 = vld [vmem:[#allocation7 + $0xc78] sm:$0xff]
    %v1078 = vld [vmem:[#allocation19] sm:$0x1f]
    %v1080 = vlaneseq
    %v1081 = vshrl.u32 %v1080, 7
    %v1082 = vsub.s32 0, %v1081
    %v1083 = vrot.slane %v1078, %v1082
    %v1084 = vlaneseq
    %v1085 = vshrl.u32 %v1084, 7
    %v1086 = vsub.s32 1, %v1085
    %v1087 = vrot.slane %v1078, %v1086
    %v1088 = vlaneseq
    %v1089 = vshrl.u32 %v1088, 7
    %v1090 = vsub.s32 2, %v1089
    %v1091 = vrot.slane %v1078, %v1090
    %v1092 = vlaneseq
    %v1093 = vshrl.u32 %v1092, 7
    %v1094 = vsub.s32 3, %v1093
    %v1095 = vrot.slane %v1078, %v1094
    %v1096 = vlaneseq
    %v1097 = vshrl.u32 %v1096, 7
    %v1098 = vsub.s32 4, %v1097
    %v1099 = vrot.slane %v1078, %v1098
    %1105 = vmatprep.subr.mxu0 %v679
    %1106 = vmatpush1.msra.mxu0 %v678
    %1107 = vmatprep.subr.mxu0 %v684
    %1108 = vmatpush1.msra.mxu0 %v683
    %1109 = vmatprep.subr.mxu0 %v689
    %1110 = vmatpush1.msra.mxu0 %v688
    %1111 = vmatprep.subr.mxu0 %v694
    %1112 = vmatpush1.msra.mxu0 %v693
    %1113 = vmatprep.subr.mxu0 %v699
    %1114 = vmatpush1.msra.mxu0 %v698
    %1115 = vmatprep.subr.mxu0 %v704
    %1116 = vmatpush1.msra.mxu0 %v703
    %1117 = vmatprep.subr.mxu0 %v709
    %1118 = vmatpush1.msra.mxu0 %v708
    %1119 = vmatprep.subr.mxu0 %v714
    %1120 = vmatpush1.msra.mxu0 %v713
    %1121 = vmatprep.subr.mxu0 %v719
    %1122 = vmatpush1.msra.mxu0 %v718
    %1123 = vmatprep.subr.mxu0 %v724
    %1124 = vmatpush1.msra.mxu0 %v723
    %1125 = vmatprep.subr.mxu0 %v729
    %1126 = vmatpush1.msra.mxu0 %v728
    %1127 = vmatprep.subr.mxu0 %v734
    %1128 = vmatpush1.msra.mxu0 %v733
    %1129 = vmatprep.subr.mxu0 %v739
    %1130 = vmatpush1.msra.mxu0 %v738
    %1131 = vmatprep.subr.mxu0 %v744
    %1132 = vmatpush1.msra.mxu0 %v743
    %1133 = vmatprep.subr.mxu0 %v749
    %1134 = vmatpush1.msra.mxu0 %v748
    %1135 = vmatprep.subr.mxu0 %v754
    %1136 = vmatpush1.msra.mxu0 %v753
    %1137 = vmatprep.subr.mxu0 %v759
    %1138 = vmatpush1.msra.mxu0 %v758
    %1139 = vmatprep.subr.mxu0 %v764
    %1140 = vmatpush1.msra.mxu0 %v763
    %1141 = vmatprep.subr.mxu0 %v769
    %1142 = vmatpush1.msra.mxu0 %v768
    %1143 = vmatprep.subr.mxu0 %v774
    %1144 = vmatpush1.msra.mxu0 %v773
    %1145 = vmatprep.subr.mxu0 %v779
    %1146 = vmatpush1.msra.mxu0 %v778
    %1147 = vmatprep.subr.mxu0 %v784
    %1148 = vmatpush1.msra.mxu0 %v783
    %1149 = vmatprep.subr.mxu0 %v789
    %1150 = vmatpush1.msra.mxu0 %v788
    %1151 = vmatprep.subr.mxu0 %v794
    %1152 = vmatpush1.msra.mxu0 %v793
    %1153 = vmatprep.subr.mxu0 %v799
    %1154 = vmatpush1.msra.mxu0 %v798
    %1155 = vmatprep.subr.mxu0 %v804
    %1156 = vmatpush1.msra.mxu0 %v803
    %1157 = vmatprep.subr.mxu0 %v809
    %1158 = vmatpush1.msra.mxu0 %v808
    %1159 = vmatprep.subr.mxu0 %v814
    %1160 = vmatpush1.msra.mxu0 %v813
    %1161 = vmatprep.subr.mxu0 %v819
    %1162 = vmatpush1.msra.mxu0 %v818
    %1163 = vmatprep.subr.mxu0 %v824
    %1164 = vmatpush1.msra.mxu0 %v823
    %1165 = vmatprep.subr.mxu0 %v829
    %1166 = vmatpush1.msra.mxu0 %v828
    %1167 = vmatprep.subr.mxu0 %v834
    %1168 = vmatpush1.msra.mxu0 %v833
    %1169 = vmatprep.mubr.f32.mxu0 %v674
    %1170 = vmatmul.mubr.f32.gmra.mrb[0].mxu0 %v673
    %v1171 = vpop.f32.mrb[0].mxu0
    %v1172 = vadd.f32 %v1083, %v1171
    %v1173 = vpop.f32.mrb[0].mxu0
    %v1174 = vadd.f32 %v1087, %v1173
    %1175 = vdwg.mxu0
    %1176 = vmatprep.subr.mxu0 %v839
    %1177 = vmatpush1.msra.mxu0 %v838
    %1178 = vmatprep.subr.mxu0 %v844
    %1179 = vmatpush1.msra.mxu0 %v843
    %1180 = vmatprep.subr.mxu0 %v849
    %1181 = vmatpush1.msra.mxu0 %v848
    %1182 = vmatprep.subr.mxu0 %v854
    %1183 = vmatpush1.msra.mxu0 %v853
    %1184 = vmatprep.subr.mxu0 %v859
    %1185 = vmatpush1.msra.mxu0 %v858
    %1186 = vmatprep.subr.mxu0 %v864
    %1187 = vmatpush1.msra.mxu0 %v863
    %1188 = vmatprep.subr.mxu0 %v869
    %1189 = vmatpush1.msra.mxu0 %v868
    %1190 = vmatprep.subr.mxu0 %v874
    %1191 = vmatpush1.msra.mxu0 %v873
    %1192 = vmatprep.subr.mxu0 %v879
    %1193 = vmatpush1.msra.mxu0 %v878
    %1194 = vmatprep.subr.mxu0 %v884
    %1195 = vmatpush1.msra.mxu0 %v883
    %1196 = vmatprep.subr.mxu0 %v889
    %1197 = vmatpush1.msra.mxu0 %v888
    %1198 = vmatprep.subr.mxu0 %v894
    %1199 = vmatpush1.msra.mxu0 %v893
    %1200 = vmatprep.subr.mxu0 %v899
    %1201 = vmatpush1.msra.mxu0 %v898
    %1202 = vmatprep.subr.mxu0 %v904
    %1203 = vmatpush1.msra.mxu0 %v903
    %1204 = vmatprep.subr.mxu0 %v909
    %1205 = vmatpush1.msra.mxu0 %v908
    %1206 = vmatprep.subr.mxu0 %v914
    %1207 = vmatpush1.msra.mxu0 %v913
    %1208 = vmatprep.subr.mxu0 %v919
    %1209 = vmatpush1.msra.mxu0 %v918
    %1210 = vmatprep.subr.mxu0 %v924
    %1211 = vmatpush1.msra.mxu0 %v923
    %1212 = vmatprep.subr.mxu0 %v929
    %1213 = vmatpush1.msra.mxu0 %v928
    %1214 = vmatprep.subr.mxu0 %v934
    %1215 = vmatpush1.msra.mxu0 %v933
    %1216 = vmatprep.subr.mxu0 %v939
    %1217 = vmatpush1.msra.mxu0 %v938
    %1218 = vmatprep.subr.mxu0 %v944
    %1219 = vmatpush1.msra.mxu0 %v943
    %1220 = vmatprep.subr.mxu0 %v949
    %1221 = vmatpush1.msra.mxu0 %v948
    %1222 = vmatprep.subr.mxu0 %v954
    %1223 = vmatpush1.msra.mxu0 %v953
    %1224 = vmatprep.subr.mxu0 %v959
    %1225 = vmatpush1.msra.mxu0 %v958
    %1226 = vmatprep.subr.mxu0 %v964
    %1227 = vmatpush1.msra.mxu0 %v963
    %1228 = vmatprep.subr.mxu0 %v969
    %1229 = vmatpush1.msra.mxu0 %v968
    %1230 = vmatprep.subr.mxu0 %v974
    %1231 = vmatpush1.msra.mxu0 %v973
    %1232 = vmatprep.subr.mxu0 %v979
    %1233 = vmatpush1.msra.mxu0 %v978
    %1234 = vmatprep.subr.mxu0 %v984
    %1235 = vmatpush1.msra.mxu0 %v983
    %1236 = vmatprep.subr.mxu0 %v989
    %1237 = vmatpush1.msra.mxu0 %v988
    %1238 = vmatprep.subr.mxu0 %v994
    %1239 = vmatpush1.msra.mxu0 %v993
    %1240 = vmatprep.mubr.f32.mxu0 %v676
    %1241 = vmatmul.mubr.f32.gmra.mrb[0].mxu0 %v675
    %v1242 = vpop.f32.mrb[0].mxu0
    %v1243 = vadd.f32 %v1172, %v1242
    %v1244 = vpop.f32.mrb[0].mxu0
    %v1245 = vadd.f32 %v1174, %v1244
    %1246 = vdwg.mxu0
    %1247 = vmatprep.subr.mxu0 %v999
    %1248 = vmatpush1.msra.mxu0 %v998
    %1249 = vmatprep.subr.mxu0 %v1004
    %1250 = vmatpush1.msra.mxu0 %v1003
    %1251 = vmatprep.subr.mxu0 %v1009
    %1252 = vmatpush1.msra.mxu0 %v1008
    %1253 = vmatprep.subr.mxu0 %v1014
    %1254 = vmatpush1.msra.mxu0 %v1013
    %1255 = vmatprep.subr.mxu0 %v1019
    %1256 = vmatpush1.msra.mxu0 %v1018
    %1257 = vmatprep.subr.mxu0 %v1024
    %1258 = vmatpush1.msra.mxu0 %v1023
    %1259 = vmatprep.subr.mxu0 %v1029
    %1260 = vmatpush1.msra.mxu0 %v1028
    %1261 = vmatprep.subr.mxu0 %v1034
    %1262 = vmatpush1.msra.mxu0 %v1033
    %1263 = vmatprep.subr.mxu0 %v1039
    %1264 = vmatpush1.msra.mxu0 %v1038
    %1265 = vmatprep.subr.mxu0 %v1044
    %1266 = vmatpush1.msra.mxu0 %v1043
    %1267 = vmatprep.subr.mxu0 %v1049
    %1268 = vmatpush1.msra.mxu0 %v1048
    %1269 = vmatprep.subr.mxu0 %v1054
    %1270 = vmatpush1.msra.mxu0 %v1053
    %1271 = vmatprep.subr.mxu0 %v1059
    %1272 = vmatpush1.msra.mxu0 %v1058
    %1273 = vmatprep.subr.mxu0 %v1064
    %1274 = vmatpush1.msra.mxu0 %v1063
    %1275 = vmatprep.subr.mxu0 %v1069
    %1276 = vmatpush1.msra.mxu0 %v1068
    %1277 = vmatprep.subr.mxu0 %v1074
    %1278 = vmatpush1.msra.mxu0 %v1073
    %1279 = vmatprep.subr.mxu0 0.0
    %1280 = vmatpush1.msra.mxu0 0.0
    %1281 = vmatprep.subr.mxu0 0.0
    %1282 = vmatpush1.msra.mxu0 0.0
    %1283 = vmatprep.subr.mxu0 0.0
    %1284 = vmatpush1.msra.mxu0 0.0
    %1285 = vmatprep.subr.mxu0 0.0
    %1286 = vmatpush1.msra.mxu0 0.0
    %1287 = vmatprep.subr.mxu0 0.0
    %1288 = vmatpush1.msra.mxu0 0.0
    %1289 = vmatprep.subr.mxu0 0.0
    %1290 = vmatpush1.msra.mxu0 0.0
    %1291 = vmatprep.subr.mxu0 0.0
    %1292 = vmatpush1.msra.mxu0 0.0
    %1293 = vmatprep.subr.mxu0 0.0
    %1294 = vmatpush1.msra.mxu0 0.0
    %1295 = vmatprep.subr.mxu0 0.0
    %1296 = vmatpush1.msra.mxu0 0.0
    %1297 = vmatprep.subr.mxu0 0.0
    %1298 = vmatpush1.msra.mxu0 0.0
    %1299 = vmatprep.subr.mxu0 0.0
    %1300 = vmatpush1.msra.mxu0 0.0
    %1301 = vmatprep.subr.mxu0 0.0
    %1302 = vmatpush1.msra.mxu0 0.0
    %1303 = vmatprep.subr.mxu0 0.0
    %1304 = vmatpush1.msra.mxu0 0.0
    %1305 = vmatprep.subr.mxu0 0.0
    %1306 = vmatpush1.msra.mxu0 0.0
    %1307 = vmatprep.subr.mxu0 0.0
    %1308 = vmatpush1.msra.mxu0 0.0
    %1309 = vmatprep.subr.mxu0 0.0
    %1310 = vmatpush1.msra.mxu0 0.0
    %1311 = vmatprep.mubr.f32.mxu0 0.0
    %1312 = vmatmul.mubr.f32.gmra.mrb[0].mxu0 %v677
    %v1313 = vpop.f32.mrb[0].mxu0
    %v1314 = vadd.f32 %v1243, %v1313
    %v1315 = vpop.f32.mrb[0].mxu0
    %v1316 = vadd.f32 %v1245, %v1315
    %1317 = vdwg.mxu0
    %1318 = vmatprep.subr.mxu0 %v681
    %1319 = vmatpush1.msra.mxu0 %v680
    %1320 = vmatprep.subr.mxu0 %v686
    %1321 = vmatpush1.msra.mxu0 %v685
    %1322 = vmatprep.subr.mxu0 %v691
    %1323 = vmatpush1.msra.mxu0 %v690
    %1324 = vmatprep.subr.mxu0 %v696
    %1325 = vmatpush1.msra.mxu0 %v695
    %1326 = vmatprep.subr.mxu0 %v701
    %1327 = vmatpush1.msra.mxu0 %v700
    %1328 = vmatprep.subr.mxu0 %v706
    %1329 = vmatpush1.msra.mxu0 %v705
    %1330 = vmatprep.subr.mxu0 %v711
    %1331 = vmatpush1.msra.mxu0 %v710
    %1332 = vmatprep.subr.mxu0 %v716
    %1333 = vmatpush1.msra.mxu0 %v715
    %1334 = vmatprep.subr.mxu0 %v721
    %1335 = vmatpush1.msra.mxu0 %v720
    %1336 = vmatprep.subr.mxu0 %v726
    %1337 = vmatpush1.msra.mxu0 %v725
    %1338 = vmatprep.subr.mxu0 %v731
    %1339 = vmatpush1.msra.mxu0 %v730
    %1340 = vmatprep.subr.mxu0 %v736
    %1341 = vmatpush1.msra.mxu0 %v735
    %1342 = vmatprep.subr.mxu0 %v741
    %1343 = vmatpush1.msra.mxu0 %v740
    %1344 = vmatprep.subr.mxu0 %v746
    %1345 = vmatpush1.msra.mxu0 %v745
    %1346 = vmatprep.subr.mxu0 %v751
    %1347 = vmatpush1.msra.mxu0 %v750
    %1348 = vmatprep.subr.mxu0 %v756
    %1349 = vmatpush1.msra.mxu0 %v755
    %1350 = vmatprep.subr.mxu0 %v761
    %1351 = vmatpush1.msra.mxu0 %v760
    %1352 = vmatprep.subr.mxu0 %v766
    %1353 = vmatpush1.msra.mxu0 %v765
    %1354 = vmatprep.subr.mxu0 %v771
    %1355 = vmatpush1.msra.mxu0 %v770
    %1356 = vmatprep.subr.mxu0 %v776
    %1357 = vmatpush1.msra.mxu0 %v775
    %1358 = vmatprep.subr.mxu0 %v781
    %1359 = vmatpush1.msra.mxu0 %v780
    %1360 = vmatprep.subr.mxu0 %v786
    %1361 = vmatpush1.msra.mxu0 %v785
    %1362 = vmatprep.subr.mxu0 %v791
    %1363 = vmatpush1.msra.mxu0 %v790
    %1364 = vmatprep.subr.mxu0 %v796
    %1365 = vmatpush1.msra.mxu0 %v795
    %1366 = vmatprep.subr.mxu0 %v801
    %1367 = vmatpush1.msra.mxu0 %v800
    %1368 = vmatprep.subr.mxu0 %v806
    %1369 = vmatpush1.msra.mxu0 %v805
    %1370 = vmatprep.subr.mxu0 %v811
    %1371 = vmatpush1.msra.mxu0 %v810
    %1372 = vmatprep.subr.mxu0 %v816
    %1373 = vmatpush1.msra.mxu0 %v815
    %1374 = vmatprep.subr.mxu0 %v821
    %1375 = vmatpush1.msra.mxu0 %v820
    %1376 = vmatprep.subr.mxu0 %v826
    %1377 = vmatpush1.msra.mxu0 %v825
    %1378 = vmatprep.subr.mxu0 %v831
    %1379 = vmatpush1.msra.mxu0 %v830
    %1380 = vmatprep.subr.mxu0 %v836
    %1381 = vmatpush1.msra.mxu0 %v835
    %1382 = vmatprep.mubr.f32.mxu0 %v674
    %1383 = vmatmul.mubr.f32.gmra.mrb[0].mxu0 %v673
    %v1384 = vpop.f32.mrb[0].mxu0
    %v1385 = vadd.f32 %v1091, %v1384
    %v1386 = vpop.f32.mrb[0].mxu0
    %v1387 = vadd.f32 %v1095, %v1386
    %1388 = vdwg.mxu0
    %1389 = vmatprep.subr.mxu0 %v841
    %1390 = vmatpush1.msra.mxu0 %v840
    %1391 = vmatprep.subr.mxu0 %v846
    %1392 = vmatpush1.msra.mxu0 %v845
    %1393 = vmatprep.subr.mxu0 %v851
    %1394 = vmatpush1.msra.mxu0 %v850
    %1395 = vmatprep.subr.mxu0 %v856
    %1396 = vmatpush1.msra.mxu0 %v855
    %1397 = vmatprep.subr.mxu0 %v861
    %1398 = vmatpush1.msra.mxu0 %v860
    %1399 = vmatprep.subr.mxu0 %v866
    %1400 = vmatpush1.msra.mxu0 %v865
    %1401 = vmatprep.subr.mxu0 %v871
    %1402 = vmatpush1.msra.mxu0 %v870
    %1403 = vmatprep.subr.mxu0 %v876
    %1404 = vmatpush1.msra.mxu0 %v875
    %1405 = vmatprep.subr.mxu0 %v881
    %1406 = vmatpush1.msra.mxu0 %v880
    %1407 = vmatprep.subr.mxu0 %v886
    %1408 = vmatpush1.msra.mxu0 %v885
    %1409 = vmatprep.subr.mxu0 %v891
    %1410 = vmatpush1.msra.mxu0 %v890
    %1411 = vmatprep.subr.mxu0 %v896
    %1412 = vmatpush1.msra.mxu0 %v895
    %1413 = vmatprep.subr.mxu0 %v901
    %1414 = vmatpush1.msra.mxu0 %v900
    %1415 = vmatprep.subr.mxu0 %v906
    %1416 = vmatpush1.msra.mxu0 %v905
    %1417 = vmatprep.subr.mxu0 %v911
    %1418 = vmatpush1.msra.mxu0 %v910
    %1419 = vmatprep.subr.mxu0 %v916
    %1420 = vmatpush1.msra.mxu0 %v915
    %1421 = vmatprep.subr.mxu0 %v921
    %1422 = vmatpush1.msra.mxu0 %v920
    %1423 = vmatprep.subr.mxu0 %v926
    %1424 = vmatpush1.msra.mxu0 %v925
    %1425 = vmatprep.subr.mxu0 %v931
    %1426 = vmatpush1.msra.mxu0 %v930
    %1427 = vmatprep.subr.mxu0 %v936
    %1428 = vmatpush1.msra.mxu0 %v935
    %1429 = vmatprep.subr.mxu0 %v941
    %1430 = vmatpush1.msra.mxu0 %v940
    %1431 = vmatprep.subr.mxu0 %v946
    %1432 = vmatpush1.msra.mxu0 %v945
    %1433 = vmatprep.subr.mxu0 %v951
    %1434 = vmatpush1.msra.mxu0 %v950
    %1435 = vmatprep.subr.mxu0 %v956
    %1436 = vmatpush1.msra.mxu0 %v955
    %1437 = vmatprep.subr.mxu0 %v961
    %1438 = vmatpush1.msra.mxu0 %v960
    %1439 = vmatprep.subr.mxu0 %v966
    %1440 = vmatpush1.msra.mxu0 %v965
    %1441 = vmatprep.subr.mxu0 %v971
    %1442 = vmatpush1.msra.mxu0 %v970
    %1443 = vmatprep.subr.mxu0 %v976
    %1444 = vmatpush1.msra.mxu0 %v975
    %1445 = vmatprep.subr.mxu0 %v981
    %1446 = vmatpush1.msra.mxu0 %v980
    %1447 = vmatprep.subr.mxu0 %v986
    %1448 = vmatpush1.msra.mxu0 %v985
    %1449 = vmatprep.subr.mxu0 %v991
    %1450 = vmatpush1.msra.mxu0 %v990
    %1451 = vmatprep.subr.mxu0 %v996
    %1452 = vmatpush1.msra.mxu0 %v995
    %1453 = vmatprep.mubr.f32.mxu0 %v676
    %1454 = vmatmul.mubr.f32.gmra.mrb[0].mxu0 %v675
    %v1455 = vpop.f32.mrb[0].mxu0
    %v1456 = vadd.f32 %v1385, %v1455
    %v1457 = vpop.f32.mrb[0].mxu0
    %v1458 = vadd.f32 %v1387, %v1457
    %1459 = vdwg.mxu0
    %1460 = vmatprep.subr.mxu0 %v1001
    %1461 = vmatpush1.msra.mxu0 %v1000
    %1462 = vmatprep.subr.mxu0 %v1006
    %1463 = vmatpush1.msra.mxu0 %v1005
    %1464 = vmatprep.subr.mxu0 %v1011
    %1465 = vmatpush1.msra.mxu0 %v1010
    %1466 = vmatprep.subr.mxu0 %v1016
    %1467 = vmatpush1.msra.mxu0 %v1015
    %1468 = vmatprep.subr.mxu0 %v1021
    %1469 = vmatpush1.msra.mxu0 %v1020
    %1470 = vmatprep.subr.mxu0 %v1026
    %1471 = vmatpush1.msra.mxu0 %v1025
    %1472 = vmatprep.subr.mxu0 %v1031
    %1473 = vmatpush1.msra.mxu0 %v1030
    %1474 = vmatprep.subr.mxu0 %v1036
    %1475 = vmatpush1.msra.mxu0 %v1035
    %1476 = vmatprep.subr.mxu0 %v1041
    %1477 = vmatpush1.msra.mxu0 %v1040
    %1478 = vmatprep.subr.mxu0 %v1046
    %1479 = vmatpush1.msra.mxu0 %v1045
    %1480 = vmatprep.subr.mxu0 %v1051
    %1481 = vmatpush1.msra.mxu0 %v1050
    %1482 = vmatprep.subr.mxu0 %v1056
    %1483 = vmatpush1.msra.mxu0 %v1055
    %1484 = vmatprep.subr.mxu0 %v1061
    %1485 = vmatpush1.msra.mxu0 %v1060
    %1486 = vmatprep.subr.mxu0 %v1066
    %1487 = vmatpush1.msra.mxu0 %v1065
    %1488 = vmatprep.subr.mxu0 %v1071
    %1489 = vmatpush1.msra.mxu0 %v1070
    %1490 = vmatprep.subr.mxu0 %v1076
    %1491 = vmatpush1.msra.mxu0 %v1075
    %1492 = vmatprep.subr.mxu0 0.0
    %1493 = vmatpush1.msra.mxu0 0.0
    %1494 = vmatprep.subr.mxu0 0.0
    %1495 = vmatpush1.msra.mxu0 0.0
    %1496 = vmatprep.subr.mxu0 0.0
    %1497 = vmatpush1.msra.mxu0 0.0
    %1498 = vmatprep.subr.mxu0 0.0
    %1499 = vmatpush1.msra.mxu0 0.0
    %1500 = vmatprep.subr.mxu0 0.0
    %1501 = vmatpush1.msra.mxu0 0.0
    %1502 = vmatprep.subr.mxu0 0.0
    %1503 = vmatpush1.msra.mxu0 0.0
    %1504 = vmatprep.subr.mxu0 0.0
    %1505 = vmatpush1.msra.mxu0 0.0
    %1506 = vmatprep.subr.mxu0 0.0
    %1507 = vmatpush1.msra.mxu0 0.0
    %1508 = vmatprep.subr.mxu0 0.0
    %1509 = vmatpush1.msra.mxu0 0.0
    %1510 = vmatprep.subr.mxu0 0.0
    %1511 = vmatpush1.msra.mxu0 0.0
    %1512 = vmatprep.subr.mxu0 0.0
    %1513 = vmatpush1.msra.mxu0 0.0
    %1514 = vmatprep.subr.mxu0 0.0
    %1515 = vmatpush1.msra.mxu0 0.0
    %1516 = vmatprep.subr.mxu0 0.0
    %1517 = vmatpush1.msra.mxu0 0.0
    %1518 = vmatprep.subr.mxu0 0.0
    %1519 = vmatpush1.msra.mxu0 0.0
    %1520 = vmatprep.subr.mxu0 0.0
    %1521 = vmatpush1.msra.mxu0 0.0
    %1522 = vmatprep.subr.mxu0 0.0
    %1523 = vmatpush1.msra.mxu0 0.0
    %1524 = vmatprep.mubr.f32.mxu0 0.0
    %1525 = vmatmul.mubr.f32.gmra.mrb[0].mxu0 %v677
    %v1526 = vpop.f32.mrb[0].mxu0
    %v1527 = vadd.f32 %v1456, %v1526
    %v1528 = vpop.f32.mrb[0].mxu0
    %v1529 = vadd.f32 %v1458, %v1528
    %1530 = vdwg.mxu0
    %1531 = vmatprep.subr.mxu0 0.0
    %1532 = vmatpush1.msra.mxu0 %v682
    %1533 = vmatprep.subr.mxu0 0.0
    %1534 = vmatpush1.msra.mxu0 %v687
    %1535 = vmatprep.subr.mxu0 0.0
    %1536 = vmatpush1.msra.mxu0 %v692
    %1537 = vmatprep.subr.mxu0 0.0
    %1538 = vmatpush1.msra.mxu0 %v697
    %1539 = vmatprep.subr.mxu0 0.0
    %1540 = vmatpush1.msra.mxu0 %v702
    %1541 = vmatprep.subr.mxu0 0.0
    %1542 = vmatpush1.msra.mxu0 %v707
    %1543 = vmatprep.subr.mxu0 0.0
    %1544 = vmatpush1.msra.mxu0 %v712
    %1545 = vmatprep.subr.mxu0 0.0
    %1546 = vmatpush1.msra.mxu0 %v717
    %1547 = vmatprep.subr.mxu0 0.0
    %1548 = vmatpush1.msra.mxu0 %v722
    %1549 = vmatprep.subr.mxu0 0.0
    %1550 = vmatpush1.msra.mxu0 %v727
    %1551 = vmatprep.subr.mxu0 0.0
    %1552 = vmatpush1.msra.mxu0 %v732
    %1553 = vmatprep.subr.mxu0 0.0
    %1554 = vmatpush1.msra.mxu0 %v737
    %1555 = vmatprep.subr.mxu0 0.0
    %1556 = vmatpush1.msra.mxu0 %v742
    %1557 = vmatprep.subr.mxu0 0.0
    %1558 = vmatpush1.msra.mxu0 %v747
    %1559 = vmatprep.subr.mxu0 0.0
    %1560 = vmatpush1.msra.mxu0 %v752
    %1561 = vmatprep.subr.mxu0 0.0
    %1562 = vmatpush1.msra.mxu0 %v757
    %1563 = vmatprep.subr.mxu0 0.0
    %1564 = vmatpush1.msra.mxu0 %v762
    %1565 = vmatprep.subr.mxu0 0.0
    %1566 = vmatpush1.msra.mxu0 %v767
    %1567 = vmatprep.subr.mxu0 0.0
    %1568 = vmatpush1.msra.mxu0 %v772
    %1569 = vmatprep.subr.mxu0 0.0
    %1570 = vmatpush1.msra.mxu0 %v777
    %1571 = vmatprep.subr.mxu0 0.0
    %1572 = vmatpush1.msra.mxu0 %v782
    %1573 = vmatprep.subr.mxu0 0.0
    %1574 = vmatpush1.msra.mxu0 %v787
    %1575 = vmatprep.subr.mxu0 0.0
    %1576 = vmatpush1.msra.mxu0 %v792
    %1577 = vmatprep.subr.mxu0 0.0
    %1578 = vmatpush1.msra.mxu0 %v797
    %1579 = vmatprep.subr.mxu0 0.0
    %1580 = vmatpush1.msra.mxu0 %v802
    %1581 = vmatprep.subr.mxu0 0.0
    %1582 = vmatpush1.msra.mxu0 %v807
    %1583 = vmatprep.subr.mxu0 0.0
    %1584 = vmatpush1.msra.mxu0 %v812
    %1585 = vmatprep.subr.mxu0 0.0
    %1586 = vmatpush1.msra.mxu0 %v817
    %1587 = vmatprep.subr.mxu0 0.0
    %1588 = vmatpush1.msra.mxu0 %v822
    %1589 = vmatprep.subr.mxu0 0.0
    %1590 = vmatpush1.msra.mxu0 %v827
    %1591 = vmatprep.subr.mxu0 0.0
    %1592 = vmatpush1.msra.mxu0 %v832
    %1593 = vmatprep.subr.mxu0 0.0
    %1594 = vmatpush1.msra.mxu0 %v837
    %1595 = vmatprep.mubr.f32.mxu0 %v674
    %1596 = vmatmul.mubr.f32.gmra.mrb[0].mxu0 %v673
    %v1597 = vpop.f32.mrb[0].mxu0
    %v1598 = vadd.f32 %v1099, %v1597
    %v1599 = vpop.f32.mrb[0].mxu0
    %1600 = vdwg.mxu0
    %1601 = vmatprep.subr.mxu0 0.0
    %1602 = vmatpush1.msra.mxu0 %v842
    %1603 = vmatprep.subr.mxu0 0.0
    %1604 = vmatpush1.msra.mxu0 %v847
    %1605 = vmatprep.subr.mxu0 0.0
    %1606 = vmatpush1.msra.mxu0 %v852
    %1607 = vmatprep.subr.mxu0 0.0
    %1608 = vmatpush1.msra.mxu0 %v857
    %1609 = vmatprep.subr.mxu0 0.0
    %1610 = vmatpush1.msra.mxu0 %v862
    %1611 = vmatprep.subr.mxu0 0.0
    %1612 = vmatpush1.msra.mxu0 %v867
    %1613 = vmatprep.subr.mxu0 0.0
    %1614 = vmatpush1.msra.mxu0 %v872
    %1615 = vmatprep.subr.mxu0 0.0
    %1616 = vmatpush1.msra.mxu0 %v877
    %1617 = vmatprep.subr.mxu0 0.0
    %1618 = vmatpush1.msra.mxu0 %v882
    %1619 = vmatprep.subr.mxu0 0.0
    %1620 = vmatpush1.msra.mxu0 %v887
    %1621 = vmatprep.subr.mxu0 0.0
    %1622 = vmatpush1.msra.mxu0 %v892
    %1623 = vmatprep.subr.mxu0 0.0
    %1624 = vmatpush1.msra.mxu0 %v897
    %1625 = vmatprep.subr.mxu0 0.0
    %1626 = vmatpush1.msra.mxu0 %v902
    %1627 = vmatprep.subr.mxu0 0.0
    %1628 = vmatpush1.msra.mxu0 %v907
    %1629 = vmatprep.subr.mxu0 0.0
    %1630 = vmatpush1.msra.mxu0 %v912
    %1631 = vmatprep.subr.mxu0 0.0
    %1632 = vmatpush1.msra.mxu0 %v917
    %1633 = vmatprep.subr.mxu0 0.0
    %1634 = vmatpush1.msra.mxu0 %v922
    %1635 = vmatprep.subr.mxu0 0.0
    %1636 = vmatpush1.msra.mxu0 %v927
    %1637 = vmatprep.subr.mxu0 0.0
    %1638 = vmatpush1.msra.mxu0 %v932
    %1639 = vmatprep.subr.mxu0 0.0
    %1640 = vmatpush1.msra.mxu0 %v937
    %1641 = vmatprep.subr.mxu0 0.0
    %1642 = vmatpush1.msra.mxu0 %v942
    %1643 = vmatprep.subr.mxu0 0.0
    %1644 = vmatpush1.msra.mxu0 %v947
    %1645 = vmatprep.subr.mxu0 0.0
    %1646 = vmatpush1.msra.mxu0 %v952
    %1647 = vmatprep.subr.mxu0 0.0
    %1648 = vmatpush1.msra.mxu0 %v957
    %1649 = vmatprep.subr.mxu0 0.0
    %1650 = vmatpush1.msra.mxu0 %v962
    %1651 = vmatprep.subr.mxu0 0.0
    %1652 = vmatpush1.msra.mxu0 %v967
    %1653 = vmatprep.subr.mxu0 0.0
    %1654 = vmatpush1.msra.mxu0 %v972
    %1655 = vmatprep.subr.mxu0 0.0
    %1656 = vmatpush1.msra.mxu0 %v977
    %1657 = vmatprep.subr.mxu0 0.0
    %1658 = vmatpush1.msra.mxu0 %v982
    %1659 = vmatprep.subr.mxu0 0.0
    %1660 = vmatpush1.msra.mxu0 %v987
    %1661 = vmatprep.subr.mxu0 0.0
    %1662 = vmatpush1.msra.mxu0 %v992
    %1663 = vmatprep.subr.mxu0 0.0
    %1664 = vmatpush1.msra.mxu0 %v997
    %1665 = vmatprep.mubr.f32.mxu0 %v676
    %1666 = vmatmul.mubr.f32.gmra.mrb[0].mxu0 %v675
    %v1667 = vpop.f32.mrb[0].mxu0
    %v1668 = vadd.f32 %v1598, %v1667
    %v1669 = vpop.f32.mrb[0].mxu0
    %1670 = vdwg.mxu0
    %1671 = vmatprep.subr.mxu0 0.0
    %1672 = vmatpush1.msra.mxu0 %v1002
    %1673 = vmatprep.subr.mxu0 0.0
    %1674 = vmatpush1.msra.mxu0 %v1007
    %1675 = vmatprep.subr.mxu0 0.0
    %1676 = vmatpush1.msra.mxu0 %v1012
    %1677 = vmatprep.subr.mxu0 0.0
    %1678 = vmatpush1.msra.mxu0 %v1017
    %1679 = vmatprep.subr.mxu0 0.0
    %1680 = vmatpush1.msra.mxu0 %v1022
    %1681 = vmatprep.subr.mxu0 0.0
    %1682 = vmatpush1.msra.mxu0 %v1027
    %1683 = vmatprep.subr.mxu0 0.0
    %1684 = vmatpush1.msra.mxu0 %v1032
    %1685 = vmatprep.subr.mxu0 0.0
    %1686 = vmatpush1.msra.mxu0 %v1037
    %1687 = vmatprep.subr.mxu0 0.0
    %1688 = vmatpush1.msra.mxu0 %v1042
    %1689 = vmatprep.subr.mxu0 0.0
    %1690 = vmatpush1.msra.mxu0 %v1047
    %1691 = vmatprep.subr.mxu0 0.0
    %1692 = vmatpush1.msra.mxu0 %v1052
    %1693 = vmatprep.subr.mxu0 0.0
    %1694 = vmatpush1.msra.mxu0 %v1057
    %1695 = vmatprep.subr.mxu0 0.0
    %1696 = vmatpush1.msra.mxu0 %v1062
    %1697 = vmatprep.subr.mxu0 0.0
    %1698 = vmatpush1.msra.mxu0 %v1067
    %1699 = vmatprep.subr.mxu0 0.0
    %1700 = vmatpush1.msra.mxu0 %v1072
    %1701 = vmatprep.subr.mxu0 0.0
    %1702 = vmatpush1.msra.mxu0 %v1077
    %1703 = vmatprep.subr.mxu0 0.0
    %1704 = vmatpush1.msra.mxu0 0.0
    %1705 = vmatprep.subr.mxu0 0.0
    %1706 = vmatpush1.msra.mxu0 0.0
    %1707 = vmatprep.subr.mxu0 0.0
    %1708 = vmatpush1.msra.mxu0 0.0
    %1709 = vmatprep.subr.mxu0 0.0
    %1710 = vmatpush1.msra.mxu0 0.0
    %1711 = vmatprep.subr.mxu0 0.0
    %1712 = vmatpush1.msra.mxu0 0.0
    %1713 = vmatprep.subr.mxu0 0.0
    %1714 = vmatpush1.msra.mxu0 0.0
    %1715 = vmatprep.subr.mxu0 0.0
    %1716 = vmatpush1.msra.mxu0 0.0
    %1717 = vmatprep.subr.mxu0 0.0
    %1718 = vmatpush1.msra.mxu0 0.0
    %1719 = vmatprep.subr.mxu0 0.0
    %1720 = vmatpush1.msra.mxu0 0.0
    %1721 = vmatprep.subr.mxu0 0.0
    %1722 = vmatpush1.msra.mxu0 0.0
    %1723 = vmatprep.subr.mxu0 0.0
    %1724 = vmatpush1.msra.mxu0 0.0
    %1725 = vmatprep.subr.mxu0 0.0
    %1726 = vmatpush1.msra.mxu0 0.0
    %1727 = vmatprep.subr.mxu0 0.0
    %1728 = vmatpush1.msra.mxu0 0.0
    %1729 = vmatprep.subr.mxu0 0.0
    %1730 = vmatpush1.msra.mxu0 0.0
    %1731 = vmatprep.subr.mxu0 0.0
    %1732 = vmatpush1.msra.mxu0 0.0
    %1733 = vmatprep.subr.mxu0 0.0
    %1734 = vmatpush1.msra.mxu0 0.0
    %1735 = vmatprep.mubr.f32.mxu0 0.0
    %1736 = vmatmul.mubr.f32.gmra.mrb[0].mxu0 %v677
    %v1737 = vpop.f32.mrb[0].mxu0
    %v1738 = vadd.f32 %v1668, %v1737
    %v1739 = vpop.f32.mrb[0].mxu0
    %1740 = vdwg.mxu0
    %v1741 = vmax.f32 %v1314, 0.0
    %v1742 = vmax.f32 %v1316, 0.0
    %v1743 = vmax.f32 %v1527, 0.0
    %v1744 = vmax.f32 %v1529, 0.0
    %v1745 = vmax.f32 %v1738, 0.0
    %v1746 = vld [vmem:[#allocation8] sm:$0xff]
    %v1747 = vld [vmem:[#allocation8 + $0x8] sm:$0xff]
    %v1748 = vld [vmem:[#allocation8 + $0x10] sm:$0xff]
    %v1749 = vld [vmem:[#allocation8 + $0x18] sm:$0xff]
    %v1750 = vld [vmem:[#allocation8 + $0x20] sm:$0xff]
    %v1751 = vld [vmem:[#allocation8 + $0x28] sm:$0xff]
    %v1752 = vld [vmem:[#allocation8 + $0x30] sm:$0xff]
    %v1753 = vld [vmem:[#allocation8 + $0x38] sm:$0xff]
    %v1754 = vld [vmem:[#allocation8 + $0x40] sm:$0xff]
    %v1755 = vld [vmem:[#allocation8 + $0x48] sm:$0xff]
    %v1756 = vld [vmem:[#allocation8 + $0x50] sm:$0xff]
    %v1757 = vld [vmem:[#allocation8 + $0x58] sm:$0xff]
    %v1758 = vld [vmem:[#allocation8 + $0x60] sm:$0xff]
    %v1759 = vld [vmem:[#allocation8 + $0x68] sm:$0xff]
    %v1760 = vld [vmem:[#allocation8 + $0x70] sm:$0xff]
    %v1761 = vld [vmem:[#allocation8 + $0x78] sm:$0xff]
    %v1762 = vld [vmem:[#allocation8 + $0x80] sm:$0xff]
    %v1763 = vld [vmem:[#allocation8 + $0x88] sm:$0xff]
    %v1764 = vld [vmem:[#allocation8 + $0x90] sm:$0xff]
    %v1765 = vld [vmem:[#allocation8 + $0x98] sm:$0xff]
    %v1766 = vld [vmem:[#allocation8 + $0xa0] sm:$0xff]
    %v1767 = vld [vmem:[#allocation8 + $0xa8] sm:$0xff]
    %v1768 = vld [vmem:[#allocation8 + $0xb0] sm:$0xff]
    %v1769 = vld [vmem:[#allocation8 + $0xb8] sm:$0xff]
    %v1770 = vld [vmem:[#allocation8 + $0xc0] sm:$0xff]
    %v1771 = vld [vmem:[#allocation8 + $0xc8] sm:$0xff]
    %v1772 = vld [vmem:[#allocation8 + $0xd0] sm:$0xff]
    %v1773 = vld [vmem:[#allocation8 + $0xd8] sm:$0xff]
    %v1774 = vld [vmem:[#allocation8 + $0xe0] sm:$0xff]
    %v1775 = vld [vmem:[#allocation8 + $0xe8] sm:$0xff]
    %v1776 = vld [vmem:[#allocation8 + $0xf0] sm:$0xff]
    %v1777 = vld [vmem:[#allocation8 + $0xf8] sm:$0xff]
    %v1778 = vld [vmem:[#allocation8 + $0x100] sm:$0xff]
    %v1779 = vld [vmem:[#allocation8 + $0x108] sm:$0xff]
    %v1780 = vld [vmem:[#allocation8 + $0x110] sm:$0xff]
    %v1781 = vld [vmem:[#allocation8 + $0x118] sm:$0xff]
    %v1782 = vld [vmem:[#allocation8 + $0x120] sm:$0xff]
    %v1783 = vld [vmem:[#allocation8 + $0x128] sm:$0xff]
    %v1784 = vld [vmem:[#allocation8 + $0x130] sm:$0xff]
    %v1785 = vld [vmem:[#allocation8 + $0x138] sm:$0xff]
    %v1786 = vld [vmem:[#allocation8 + $0x140] sm:$0xff]
    %v1787 = vld [vmem:[#allocation8 + $0x148] sm:$0xff]
    %v1788 = vld [vmem:[#allocation8 + $0x150] sm:$0xff]
    %v1789 = vld [vmem:[#allocation8 + $0x158] sm:$0xff]
    %v1790 = vld [vmem:[#allocation8 + $0x160] sm:$0xff]
    %v1791 = vld [vmem:[#allocation8 + $0x168] sm:$0xff]
    %v1792 = vld [vmem:[#allocation8 + $0x170] sm:$0xff]
    %v1793 = vld [vmem:[#allocation8 + $0x178] sm:$0xff]
    %v1794 = vld [vmem:[#allocation8 + $0x180] sm:$0xff]
    %v1795 = vld [vmem:[#allocation8 + $0x188] sm:$0xff]
    %v1796 = vld [vmem:[#allocation8 + $0x190] sm:$0xff]
    %v1797 = vld [vmem:[#allocation8 + $0x198] sm:$0xff]
    %v1798 = vld [vmem:[#allocation8 + $0x1a0] sm:$0xff]
    %v1799 = vld [vmem:[#allocation8 + $0x1a8] sm:$0xff]
    %v1800 = vld [vmem:[#allocation8 + $0x1b0] sm:$0xff]
    %v1801 = vld [vmem:[#allocation8 + $0x1b8] sm:$0xff]
    %v1802 = vld [vmem:[#allocation8 + $0x1c0] sm:$0xff]
    %v1803 = vld [vmem:[#allocation8 + $0x1c8] sm:$0xff]
    %v1804 = vld [vmem:[#allocation8 + $0x1d0] sm:$0xff]
    %v1805 = vld [vmem:[#allocation8 + $0x1d8] sm:$0xff]
    %v1806 = vld [vmem:[#allocation8 + $0x1e0] sm:$0xff]
    %v1807 = vld [vmem:[#allocation8 + $0x1e8] sm:$0xff]
    %v1808 = vld [vmem:[#allocation8 + $0x1f0] sm:$0xff]
    %v1809 = vld [vmem:[#allocation8 + $0x1f8] sm:$0xff]
    %v1810 = vld [vmem:[#allocation8 + $0x200] sm:$0xff]
    %v1811 = vld [vmem:[#allocation8 + $0x208] sm:$0xff]
    %v1812 = vld [vmem:[#allocation8 + $0x210] sm:$0xff]
    %v1813 = vld [vmem:[#allocation8 + $0x218] sm:$0xff]
    %v1814 = vld [vmem:[#allocation8 + $0x220] sm:$0xff]
    %v1815 = vld [vmem:[#allocation8 + $0x228] sm:$0xff]
    %v1816 = vld [vmem:[#allocation8 + $0x230] sm:$0xff]
    %v1817 = vld [vmem:[#allocation8 + $0x238] sm:$0xff]
    %v1818 = vld [vmem:[#allocation8 + $0x240] sm:$0xff]
    %v1819 = vld [vmem:[#allocation8 + $0x248] sm:$0xff]
    %v1820 = vld [vmem:[#allocation8 + $0x250] sm:$0xff]
    %v1821 = vld [vmem:[#allocation8 + $0x258] sm:$0xff]
    %v1822 = vld [vmem:[#allocation8 + $0x260] sm:$0xff]
    %v1823 = vld [vmem:[#allocation8 + $0x268] sm:$0xff]
    %v1824 = vld [vmem:[#allocation8 + $0x270] sm:$0xff]
    %v1825 = vld [vmem:[#allocation8 + $0x278] sm:$0xff]
    %v1826 = vld [vmem:[#allocation8 + $0x280] sm:$0xff]
    %v1827 = vld [vmem:[#allocation8 + $0x288] sm:$0xff]
    %v1828 = vld [vmem:[#allocation8 + $0x290] sm:$0xff]
    %v1829 = vld [vmem:[#allocation8 + $0x298] sm:$0xff]
    %v1830 = vld [vmem:[#allocation8 + $0x2a0] sm:$0xff]
    %v1831 = vld [vmem:[#allocation8 + $0x2a8] sm:$0xff]
    %v1832 = vld [vmem:[#allocation8 + $0x2b0] sm:$0xff]
    %v1833 = vld [vmem:[#allocation8 + $0x2b8] sm:$0xff]
    %v1834 = vld [vmem:[#allocation8 + $0x2c0] sm:$0xff]
    %v1835 = vld [vmem:[#allocation8 + $0x2c8] sm:$0xff]
    %v1836 = vld [vmem:[#allocation8 + $0x2d0] sm:$0xff]
    %v1837 = vld [vmem:[#allocation8 + $0x2d8] sm:$0xff]
    %v1838 = vld [vmem:[#allocation8 + $0x2e0] sm:$0xff]
    %v1839 = vld [vmem:[#allocation8 + $0x2e8] sm:$0xff]
    %v1840 = vld [vmem:[#allocation8 + $0x2f0] sm:$0xff]
    %v1841 = vld [vmem:[#allocation8 + $0x2f8] sm:$0xff]
    %v1842 = vld [vmem:[#allocation8 + $0x300] sm:$0xff]
    %v1843 = vld [vmem:[#allocation8 + $0x308] sm:$0xff]
    %v1844 = vld [vmem:[#allocation8 + $0x310] sm:$0xff]
    %v1845 = vld [vmem:[#allocation8 + $0x318] sm:$0xff]
    %v1846 = vld [vmem:[#allocation8 + $0x320] sm:$0xff]
    %v1847 = vld [vmem:[#allocation8 + $0x328] sm:$0xff]
    %v1848 = vld [vmem:[#allocation8 + $0x330] sm:$0xff]
    %v1849 = vld [vmem:[#allocation8 + $0x338] sm:$0xff]
    %v1850 = vld [vmem:[#allocation8 + $0x340] sm:$0xff]
    %v1851 = vld [vmem:[#allocation8 + $0x348] sm:$0xff]
    %v1852 = vld [vmem:[#allocation8 + $0x350] sm:$0xff]
    %v1853 = vld [vmem:[#allocation8 + $0x358] sm:$0xff]
    %v1854 = vld [vmem:[#allocation8 + $0x360] sm:$0xff]
    %v1855 = vld [vmem:[#allocation8 + $0x368] sm:$0xff]
    %v1856 = vld [vmem:[#allocation8 + $0x370] sm:$0xff]
    %v1857 = vld [vmem:[#allocation8 + $0x378] sm:$0xff]
    %v1858 = vld [vmem:[#allocation8 + $0x380] sm:$0xff]
    %v1859 = vld [vmem:[#allocation8 + $0x388] sm:$0xff]
    %v1860 = vld [vmem:[#allocation8 + $0x390] sm:$0xff]
    %v1861 = vld [vmem:[#allocation8 + $0x398] sm:$0xff]
    %v1862 = vld [vmem:[#allocation8 + $0x3a0] sm:$0xff]
    %v1863 = vld [vmem:[#allocation8 + $0x3a8] sm:$0xff]
    %v1864 = vld [vmem:[#allocation8 + $0x3b0] sm:$0xff]
    %v1865 = vld [vmem:[#allocation8 + $0x3b8] sm:$0xff]
    %v1866 = vld [vmem:[#allocation8 + $0x3c0] sm:$0xff]
    %v1867 = vld [vmem:[#allocation8 + $0x3c8] sm:$0xff]
    %v1868 = vld [vmem:[#allocation8 + $0x3d0] sm:$0xff]
    %v1869 = vld [vmem:[#allocation8 + $0x3d8] sm:$0xff]
    %v1870 = vld [vmem:[#allocation8 + $0x3e0] sm:$0xff]
    %v1871 = vld [vmem:[#allocation8 + $0x3e8] sm:$0xff]
    %v1872 = vld [vmem:[#allocation8 + $0x3f0] sm:$0xff]
    %v1873 = vld [vmem:[#allocation8 + $0x3f8] sm:$0xff]
    %v1874 = vld [vmem:[#allocation8 + $0x400] sm:$0xff]
    %v1875 = vld [vmem:[#allocation8 + $0x408] sm:$0xff]
    %v1876 = vld [vmem:[#allocation8 + $0x410] sm:$0xff]
    %v1877 = vld [vmem:[#allocation8 + $0x418] sm:$0xff]
    %v1878 = vld [vmem:[#allocation8 + $0x420] sm:$0xff]
    %v1879 = vld [vmem:[#allocation8 + $0x428] sm:$0xff]
    %v1880 = vld [vmem:[#allocation8 + $0x430] sm:$0xff]
    %v1881 = vld [vmem:[#allocation8 + $0x438] sm:$0xff]
    %v1882 = vld [vmem:[#allocation8 + $0x440] sm:$0xff]
    %v1883 = vld [vmem:[#allocation8 + $0x448] sm:$0xff]
    %v1884 = vld [vmem:[#allocation8 + $0x450] sm:$0xff]
    %v1885 = vld [vmem:[#allocation8 + $0x458] sm:$0xff]
    %v1886 = vld [vmem:[#allocation8 + $0x460] sm:$0xff]
    %v1887 = vld [vmem:[#allocation8 + $0x468] sm:$0xff]
    %v1888 = vld [vmem:[#allocation8 + $0x470] sm:$0xff]
    %v1889 = vld [vmem:[#allocation8 + $0x478] sm:$0xff]
    %v1890 = vld [vmem:[#allocation8 + $0x480] sm:$0xff]
    %v1891 = vld [vmem:[#allocation8 + $0x488] sm:$0xff]
    %v1892 = vld [vmem:[#allocation8 + $0x490] sm:$0xff]
    %v1893 = vld [vmem:[#allocation8 + $0x498] sm:$0xff]
    %v1894 = vld [vmem:[#allocation8 + $0x4a0] sm:$0xff]
    %v1895 = vld [vmem:[#allocation8 + $0x4a8] sm:$0xff]
    %v1896 = vld [vmem:[#allocation8 + $0x4b0] sm:$0xff]
    %v1897 = vld [vmem:[#allocation8 + $0x4b8] sm:$0xff]
    %v1898 = vld [vmem:[#allocation8 + $0x4c0] sm:$0xff]
    %v1899 = vld [vmem:[#allocation8 + $0x4c8] sm:$0xff]
    %v1900 = vld [vmem:[#allocation8 + $0x4d0] sm:$0xff]
    %v1901 = vld [vmem:[#allocation8 + $0x4d8] sm:$0xff]
    %v1902 = vld [vmem:[#allocation8 + $0x4e0] sm:$0xff]
    %v1903 = vld [vmem:[#allocation8 + $0x4e8] sm:$0xff]
    %v1904 = vld [vmem:[#allocation8 + $0x4f0] sm:$0xff]
    %v1905 = vld [vmem:[#allocation8 + $0x4f8] sm:$0xff]
    %v1906 = vld [vmem:[#allocation8 + $0x500] sm:$0xff]
    %v1907 = vld [vmem:[#allocation8 + $0x508] sm:$0xff]
    %v1908 = vld [vmem:[#allocation8 + $0x510] sm:$0xff]
    %v1909 = vld [vmem:[#allocation8 + $0x518] sm:$0xff]
    %v1910 = vld [vmem:[#allocation8 + $0x520] sm:$0xff]
    %v1911 = vld [vmem:[#allocation8 + $0x528] sm:$0xff]
    %v1912 = vld [vmem:[#allocation8 + $0x530] sm:$0xff]
    %v1913 = vld [vmem:[#allocation8 + $0x538] sm:$0xff]
    %v1914 = vld [vmem:[#allocation8 + $0x540] sm:$0xff]
    %v1915 = vld [vmem:[#allocation8 + $0x548] sm:$0xff]
    %v1916 = vld [vmem:[#allocation8 + $0x550] sm:$0xff]
    %v1917 = vld [vmem:[#allocation8 + $0x558] sm:$0xff]
    %v1918 = vld [vmem:[#allocation8 + $0x560] sm:$0xff]
    %v1919 = vld [vmem:[#allocation8 + $0x568] sm:$0xff]
    %v1920 = vld [vmem:[#allocation8 + $0x570] sm:$0xff]
    %v1921 = vld [vmem:[#allocation8 + $0x578] sm:$0xff]
    %v1922 = vld [vmem:[#allocation8 + $0x580] sm:$0xff]
    %v1923 = vld [vmem:[#allocation8 + $0x588] sm:$0xff]
    %v1924 = vld [vmem:[#allocation8 + $0x590] sm:$0xff]
    %v1925 = vld [vmem:[#allocation8 + $0x598] sm:$0xff]
    %v1926 = vld [vmem:[#allocation8 + $0x5a0] sm:$0xff]
    %v1927 = vld [vmem:[#allocation8 + $0x5a8] sm:$0xff]
    %v1928 = vld [vmem:[#allocation8 + $0x5b0] sm:$0xff]
    %v1929 = vld [vmem:[#allocation8 + $0x5b8] sm:$0xff]
    %v1930 = vld [vmem:[#allocation8 + $0x5c0] sm:$0xff]
    %v1931 = vld [vmem:[#allocation8 + $0x5c8] sm:$0xff]
    %v1932 = vld [vmem:[#allocation8 + $0x5d0] sm:$0xff]
    %v1933 = vld [vmem:[#allocation8 + $0x5d8] sm:$0xff]
    %v1934 = vld [vmem:[#allocation8 + $0x5e0] sm:$0xff]
    %v1935 = vld [vmem:[#allocation8 + $0x5e8] sm:$0xff]
    %v1936 = vld [vmem:[#allocation8 + $0x5f0] sm:$0xff]
    %v1937 = vld [vmem:[#allocation8 + $0x5f8] sm:$0xff]
    %v1938 = vld [vmem:[#allocation8 + $0x600] sm:$0xff]
    %v1939 = vld [vmem:[#allocation8 + $0x608] sm:$0xff]
    %v1940 = vld [vmem:[#allocation8 + $0x610] sm:$0xff]
    %v1941 = vld [vmem:[#allocation8 + $0x618] sm:$0xff]
    %v1942 = vld [vmem:[#allocation8 + $0x620] sm:$0xff]
    %v1943 = vld [vmem:[#allocation8 + $0x628] sm:$0xff]
    %v1944 = vld [vmem:[#allocation8 + $0x630] sm:$0xff]
    %v1945 = vld [vmem:[#allocation8 + $0x638] sm:$0xff]
    %v1946 = vld [vmem:[#allocation8 + $0x640] sm:$0xff]
    %v1947 = vld [vmem:[#allocation8 + $0x648] sm:$0xff]
    %v1948 = vld [vmem:[#allocation8 + $0x650] sm:$0xff]
    %v1949 = vld [vmem:[#allocation8 + $0x658] sm:$0xff]
    %v1950 = vld [vmem:[#allocation8 + $0x660] sm:$0xff]
    %v1951 = vld [vmem:[#allocation8 + $0x668] sm:$0xff]
    %v1952 = vld [vmem:[#allocation8 + $0x670] sm:$0xff]
    %v1953 = vld [vmem:[#allocation8 + $0x678] sm:$0xff]
    %v1954 = vld [vmem:[#allocation8 + $0x680] sm:$0xff]
    %v1955 = vld [vmem:[#allocation8 + $0x688] sm:$0xff]
    %v1956 = vld [vmem:[#allocation8 + $0x690] sm:$0xff]
    %v1957 = vld [vmem:[#allocation8 + $0x698] sm:$0xff]
    %v1958 = vld [vmem:[#allocation8 + $0x6a0] sm:$0xff]
    %v1959 = vld [vmem:[#allocation8 + $0x6a8] sm:$0xff]
    %v1960 = vld [vmem:[#allocation8 + $0x6b0] sm:$0xff]
    %v1961 = vld [vmem:[#allocation8 + $0x6b8] sm:$0xff]
    %v1962 = vld [vmem:[#allocation8 + $0x6c0] sm:$0xff]
    %v1963 = vld [vmem:[#allocation8 + $0x6c8] sm:$0xff]
    %v1964 = vld [vmem:[#allocation8 + $0x6d0] sm:$0xff]
    %v1965 = vld [vmem:[#allocation8 + $0x6d8] sm:$0xff]
    %v1966 = vld [vmem:[#allocation8 + $0x6e0] sm:$0xff]
    %v1967 = vld [vmem:[#allocation8 + $0x6e8] sm:$0xff]
    %v1968 = vld [vmem:[#allocation8 + $0x6f0] sm:$0xff]
    %v1969 = vld [vmem:[#allocation8 + $0x6f8] sm:$0xff]
    %v1970 = vld [vmem:[#allocation8 + $0x700] sm:$0xff]
    %v1971 = vld [vmem:[#allocation8 + $0x708] sm:$0xff]
    %v1972 = vld [vmem:[#allocation8 + $0x710] sm:$0xff]
    %v1973 = vld [vmem:[#allocation8 + $0x718] sm:$0xff]
    %v1974 = vld [vmem:[#allocation8 + $0x720] sm:$0xff]
    %v1975 = vld [vmem:[#allocation8 + $0x728] sm:$0xff]
    %v1976 = vld [vmem:[#allocation8 + $0x730] sm:$0xff]
    %v1977 = vld [vmem:[#allocation8 + $0x738] sm:$0xff]
    %v1978 = vld [vmem:[#allocation8 + $0x740] sm:$0xff]
    %v1979 = vld [vmem:[#allocation8 + $0x748] sm:$0xff]
    %v1980 = vld [vmem:[#allocation8 + $0x750] sm:$0xff]
    %v1981 = vld [vmem:[#allocation8 + $0x758] sm:$0xff]
    %v1982 = vld [vmem:[#allocation8 + $0x760] sm:$0xff]
    %v1983 = vld [vmem:[#allocation8 + $0x768] sm:$0xff]
    %v1984 = vld [vmem:[#allocation8 + $0x770] sm:$0xff]
    %v1985 = vld [vmem:[#allocation8 + $0x778] sm:$0xff]
    %v1986 = vld [vmem:[#allocation20] sm:$0x7]
    %v1988 = vlaneseq
    %v1989 = vshrl.u32 %v1988, 7
    %v1990 = vsub.s32 0, %v1989
    %v1991 = vrot.slane %v1986, %v1990
    %v1992 = vlaneseq
    %v1993 = vshrl.u32 %v1992, 7
    %v1994 = vsub.s32 1, %v1993
    %v1995 = vrot.slane %v1986, %v1994
    %v1996 = vlaneseq
    %v1997 = vshrl.u32 %v1996, 7
    %v1998 = vsub.s32 2, %v1997
    %v1999 = vrot.slane %v1986, %v1998
    %2003 = vmatprep.subr.mxu0 %v1747
    %2004 = vmatpush1.msra.mxu0 %v1746
    %2005 = vmatprep.subr.mxu0 %v1750
    %2006 = vmatpush1.msra.mxu0 %v1749
    %2007 = vmatprep.subr.mxu0 %v1753
    %2008 = vmatpush1.msra.mxu0 %v1752
    %2009 = vmatprep.subr.mxu0 %v1756
    %2010 = vmatpush1.msra.mxu0 %v1755
    %2011 = vmatprep.subr.mxu0 %v1759
    %2012 = vmatpush1.msra.mxu0 %v1758
    %2013 = vmatprep.subr.mxu0 %v1762
    %2014 = vmatpush1.msra.mxu0 %v1761
    %2015 = vmatprep.subr.mxu0 %v1765
    %2016 = vmatpush1.msra.mxu0 %v1764
    %2017 = vmatprep.subr.mxu0 %v1768
    %2018 = vmatpush1.msra.mxu0 %v1767
    %2019 = vmatprep.subr.mxu0 %v1771
    %2020 = vmatpush1.msra.mxu0 %v1770
    %2021 = vmatprep.subr.mxu0 %v1774
    %2022 = vmatpush1.msra.mxu0 %v1773
    %2023 = vmatprep.subr.mxu0 %v1777
    %2024 = vmatpush1.msra.mxu0 %v1776
    %2025 = vmatprep.subr.mxu0 %v1780
    %2026 = vmatpush1.msra.mxu0 %v1779
    %2027 = vmatprep.subr.mxu0 %v1783
    %2028 = vmatpush1.msra.mxu0 %v1782
    %2029 = vmatprep.subr.mxu0 %v1786
    %2030 = vmatpush1.msra.mxu0 %v1785
    %2031 = vmatprep.subr.mxu0 %v1789
    %2032 = vmatpush1.msra.mxu0 %v1788
    %2033 = vmatprep.subr.mxu0 %v1792
    %2034 = vmatpush1.msra.mxu0 %v1791
    %2035 = vmatprep.subr.mxu0 %v1795
    %2036 = vmatpush1.msra.mxu0 %v1794
    %2037 = vmatprep.subr.mxu0 %v1798
    %2038 = vmatpush1.msra.mxu0 %v1797
    %2039 = vmatprep.subr.mxu0 %v1801
    %2040 = vmatpush1.msra.mxu0 %v1800
    %2041 = vmatprep.subr.mxu0 %v1804
    %2042 = vmatpush1.msra.mxu0 %v1803
    %2043 = vmatprep.subr.mxu0 %v1807
    %2044 = vmatpush1.msra.mxu0 %v1806
    %2045 = vmatprep.subr.mxu0 %v1810
    %2046 = vmatpush1.msra.mxu0 %v1809
    %2047 = vmatprep.subr.mxu0 %v1813
    %2048 = vmatpush1.msra.mxu0 %v1812
    %2049 = vmatprep.subr.mxu0 %v1816
    %2050 = vmatpush1.msra.mxu0 %v1815
    %2051 = vmatprep.subr.mxu0 %v1819
    %2052 = vmatpush1.msra.mxu0 %v1818
    %2053 = vmatprep.subr.mxu0 %v1822
    %2054 = vmatpush1.msra.mxu0 %v1821
    %2055 = vmatprep.subr.mxu0 %v1825
    %2056 = vmatpush1.msra.mxu0 %v1824
    %2057 = vmatprep.subr.mxu0 %v1828
    %2058 = vmatpush1.msra.mxu0 %v1827
    %2059 = vmatprep.subr.mxu0 %v1831
    %2060 = vmatpush1.msra.mxu0 %v1830
    %2061 = vmatprep.subr.mxu0 %v1834
    %2062 = vmatpush1.msra.mxu0 %v1833
    %2063 = vmatprep.subr.mxu0 %v1837
    %2064 = vmatpush1.msra.mxu0 %v1836
    %2065 = vmatprep.subr.mxu0 %v1840
    %2066 = vmatpush1.msra.mxu0 %v1839
    %2067 = vmatprep.mubr.f32.mxu0 %v1742
    %2068 = vmatmul.mubr.f32.gmra.mrb[0].mxu0 %v1741
    %v2069 = vpop.f32.mrb[0].mxu0
    %v2070 = vadd.f32 %v1991, %v2069
    %v2071 = vpop.f32.mrb[0].mxu0
    %v2072 = vadd.f32 %v1995, %v2071
    %2073 = vdwg.mxu0
    %2074 = vmatprep.subr.mxu0 %v1843
    %2075 = vmatpush1.msra.mxu0 %v1842
    %2076 = vmatprep.subr.mxu0 %v1846
    %2077 = vmatpush1.msra.mxu0 %v1845
    %2078 = vmatprep.subr.mxu0 %v1849
    %2079 = vmatpush1.msra.mxu0 %v1848
    %2080 = vmatprep.subr.mxu0 %v1852
    %2081 = vmatpush1.msra.mxu0 %v1851
    %2082 = vmatprep.subr.mxu0 %v1855
    %2083 = vmatpush1.msra.mxu0 %v1854
    %2084 = vmatprep.subr.mxu0 %v1858
    %2085 = vmatpush1.msra.mxu0 %v1857
    %2086 = vmatprep.subr.mxu0 %v1861
    %2087 = vmatpush1.msra.mxu0 %v1860
    %2088 = vmatprep.subr.mxu0 %v1864
    %2089 = vmatpush1.msra.mxu0 %v1863
    %2090 = vmatprep.subr.mxu0 %v1867
    %2091 = vmatpush1.msra.mxu0 %v1866
    %2092 = vmatprep.subr.mxu0 %v1870
    %2093 = vmatpush1.msra.mxu0 %v1869
    %2094 = vmatprep.subr.mxu0 %v1873
    %2095 = vmatpush1.msra.mxu0 %v1872
    %2096 = vmatprep.subr.mxu0 %v1876
    %2097 = vmatpush1.msra.mxu0 %v1875
    %2098 = vmatprep.subr.mxu0 %v1879
    %2099 = vmatpush1.msra.mxu0 %v1878
    %2100 = vmatprep.subr.mxu0 %v1882
    %2101 = vmatpush1.msra.mxu0 %v1881
    %2102 = vmatprep.subr.mxu0 %v1885
    %2103 = vmatpush1.msra.mxu0 %v1884
    %2104 = vmatprep.subr.mxu0 %v1888
    %2105 = vmatpush1.msra.mxu0 %v1887
    %2106 = vmatprep.subr.mxu0 %v1891
    %2107 = vmatpush1.msra.mxu0 %v1890
    %2108 = vmatprep.subr.mxu0 %v1894
    %2109 = vmatpush1.msra.mxu0 %v1893
    %2110 = vmatprep.subr.mxu0 %v1897
    %2111 = vmatpush1.msra.mxu0 %v1896
    %2112 = vmatprep.subr.mxu0 %v1900
    %2113 = vmatpush1.msra.mxu0 %v1899
    %2114 = vmatprep.subr.mxu0 %v1903
    %2115 = vmatpush1.msra.mxu0 %v1902
    %2116 = vmatprep.subr.mxu0 %v1906
    %2117 = vmatpush1.msra.mxu0 %v1905
    %2118 = vmatprep.subr.mxu0 %v1909
    %2119 = vmatpush1.msra.mxu0 %v1908
    %2120 = vmatprep.subr.mxu0 %v1912
    %2121 = vmatpush1.msra.mxu0 %v1911
    %2122 = vmatprep.subr.mxu0 %v1915
    %2123 = vmatpush1.msra.mxu0 %v1914
    %2124 = vmatprep.subr.mxu0 %v1918
    %2125 = vmatpush1.msra.mxu0 %v1917
    %2126 = vmatprep.subr.mxu0 %v1921
    %2127 = vmatpush1.msra.mxu0 %v1920
    %2128 = vmatprep.subr.mxu0 %v1924
    %2129 = vmatpush1.msra.mxu0 %v1923
    %2130 = vmatprep.subr.mxu0 %v1927
    %2131 = vmatpush1.msra.mxu0 %v1926
    %2132 = vmatprep.subr.mxu0 %v1930
    %2133 = vmatpush1.msra.mxu0 %v1929
    %2134 = vmatprep.subr.mxu0 %v1933
    %2135 = vmatpush1.msra.mxu0 %v1932
    %2136 = vmatprep.subr.mxu0 %v1936
    %2137 = vmatpush1.msra.mxu0 %v1935
    %2138 = vmatprep.mubr.f32.mxu0 %v1744
    %2139 = vmatmul.mubr.f32.gmra.mrb[0].mxu0 %v1743
    %v2140 = vpop.f32.mrb[0].mxu0
    %v2141 = vadd.f32 %v2070, %v2140
    %v2142 = vpop.f32.mrb[0].mxu0
    %v2143 = vadd.f32 %v2072, %v2142
    %2144 = vdwg.mxu0
    %2145 = vmatprep.subr.mxu0 %v1939
    %2146 = vmatpush1.msra.mxu0 %v1938
    %2147 = vmatprep.subr.mxu0 %v1942
    %2148 = vmatpush1.msra.mxu0 %v1941
    %2149 = vmatprep.subr.mxu0 %v1945
    %2150 = vmatpush1.msra.mxu0 %v1944
    %2151 = vmatprep.subr.mxu0 %v1948
    %2152 = vmatpush1.msra.mxu0 %v1947
    %2153 = vmatprep.subr.mxu0 %v1951
    %2154 = vmatpush1.msra.mxu0 %v1950
    %2155 = vmatprep.subr.mxu0 %v1954
    %2156 = vmatpush1.msra.mxu0 %v1953
    %2157 = vmatprep.subr.mxu0 %v1957
    %2158 = vmatpush1.msra.mxu0 %v1956
    %2159 = vmatprep.subr.mxu0 %v1960
    %2160 = vmatpush1.msra.mxu0 %v1959
    %2161 = vmatprep.subr.mxu0 %v1963
    %2162 = vmatpush1.msra.mxu0 %v1962
    %2163 = vmatprep.subr.mxu0 %v1966
    %2164 = vmatpush1.msra.mxu0 %v1965
    %2165 = vmatprep.subr.mxu0 %v1969
    %2166 = vmatpush1.msra.mxu0 %v1968
    %2167 = vmatprep.subr.mxu0 %v1972
    %2168 = vmatpush1.msra.mxu0 %v1971
    %2169 = vmatprep.subr.mxu0 %v1975
    %2170 = vmatpush1.msra.mxu0 %v1974
    %2171 = vmatprep.subr.mxu0 %v1978
    %2172 = vmatpush1.msra.mxu0 %v1977
    %2173 = vmatprep.subr.mxu0 %v1981
    %2174 = vmatpush1.msra.mxu0 %v1980
    %2175 = vmatprep.subr.mxu0 %v1984
    %2176 = vmatpush1.msra.mxu0 %v1983
    %2177 = vmatprep.subr.mxu0 0.0
    %2178 = vmatpush1.msra.mxu0 0.0
    %2179 = vmatprep.subr.mxu0 0.0
    %2180 = vmatpush1.msra.mxu0 0.0
    %2181 = vmatprep.subr.mxu0 0.0
    %2182 = vmatpush1.msra.mxu0 0.0
    %2183 = vmatprep.subr.mxu0 0.0
    %2184 = vmatpush1.msra.mxu0 0.0
    %2185 = vmatprep.subr.mxu0 0.0
    %2186 = vmatpush1.msra.mxu0 0.0
    %2187 = vmatprep.subr.mxu0 0.0
    %2188 = vmatpush1.msra.mxu0 0.0
    %2189 = vmatprep.subr.mxu0 0.0
    %2190 = vmatpush1.msra.mxu0 0.0
    %2191 = vmatprep.subr.mxu0 0.0
    %2192 = vmatpush1.msra.mxu0 0.0
    %2193 = vmatprep.subr.mxu0 0.0
    %2194 = vmatpush1.msra.mxu0 0.0
    %2195 = vmatprep.subr.mxu0 0.0
    %2196 = vmatpush1.msra.mxu0 0.0
    %2197 = vmatprep.subr.mxu0 0.0
    %2198 = vmatpush1.msra.mxu0 0.0
    %2199 = vmatprep.subr.mxu0 0.0
    %2200 = vmatpush1.msra.mxu0 0.0
    %2201 = vmatprep.subr.mxu0 0.0
    %2202 = vmatpush1.msra.mxu0 0.0
    %2203 = vmatprep.subr.mxu0 0.0
    %2204 = vmatpush1.msra.mxu0 0.0
    %2205 = vmatprep.subr.mxu0 0.0
    %2206 = vmatpush1.msra.mxu0 0.0
    %2207 = vmatprep.subr.mxu0 0.0
    %2208 = vmatpush1.msra.mxu0 0.0
    %2209 = vmatprep.mubr.f32.mxu0 0.0
    %2210 = vmatmul.mubr.f32.gmra.mrb[0].mxu0 %v1745
    %v2211 = vpop.f32.mrb[0].mxu0
    %v2212 = vadd.f32 %v2141, %v2211
    %v2213 = vpop.f32.mrb[0].mxu0
    %v2214 = vadd.f32 %v2143, %v2213
    %2215 = vdwg.mxu0
    %2216 = vmatprep.subr.mxu0 0.0
    %2217 = vmatpush1.msra.mxu0 %v1748
    %2218 = vmatprep.subr.mxu0 0.0
    %2219 = vmatpush1.msra.mxu0 %v1751
    %2220 = vmatprep.subr.mxu0 0.0
    %2221 = vmatpush1.msra.mxu0 %v1754
    %2222 = vmatprep.subr.mxu0 0.0
    %2223 = vmatpush1.msra.mxu0 %v1757
    %2224 = vmatprep.subr.mxu0 0.0
    %2225 = vmatpush1.msra.mxu0 %v1760
    %2226 = vmatprep.subr.mxu0 0.0
    %2227 = vmatpush1.msra.mxu0 %v1763
    %2228 = vmatprep.subr.mxu0 0.0
    %2229 = vmatpush1.msra.mxu0 %v1766
    %2230 = vmatprep.subr.mxu0 0.0
    %2231 = vmatpush1.msra.mxu0 %v1769
    %2232 = vmatprep.subr.mxu0 0.0
    %2233 = vmatpush1.msra.mxu0 %v1772
    %2234 = vmatprep.subr.mxu0 0.0
    %2235 = vmatpush1.msra.mxu0 %v1775
    %2236 = vmatprep.subr.mxu0 0.0
    %2237 = vmatpush1.msra.mxu0 %v1778
    %2238 = vmatprep.subr.mxu0 0.0
    %2239 = vmatpush1.msra.mxu0 %v1781
    %2240 = vmatprep.subr.mxu0 0.0
    %2241 = vmatpush1.msra.mxu0 %v1784
    %2242 = vmatprep.subr.mxu0 0.0
    %2243 = vmatpush1.msra.mxu0 %v1787
    %2244 = vmatprep.subr.mxu0 0.0
    %2245 = vmatpush1.msra.mxu0 %v1790
    %2246 = vmatprep.subr.mxu0 0.0
    %2247 = vmatpush1.msra.mxu0 %v1793
    %2248 = vmatprep.subr.mxu0 0.0
    %2249 = vmatpush1.msra.mxu0 %v1796
    %2250 = vmatprep.subr.mxu0 0.0
    %2251 = vmatpush1.msra.mxu0 %v1799
    %2252 = vmatprep.subr.mxu0 0.0
    %2253 = vmatpush1.msra.mxu0 %v1802
    %2254 = vmatprep.subr.mxu0 0.0
    %2255 = vmatpush1.msra.mxu0 %v1805
    %2256 = vmatprep.subr.mxu0 0.0
    %2257 = vmatpush1.msra.mxu0 %v1808
    %2258 = vmatprep.subr.mxu0 0.0
    %2259 = vmatpush1.msra.mxu0 %v1811
    %2260 = vmatprep.subr.mxu0 0.0
    %2261 = vmatpush1.msra.mxu0 %v1814
    %2262 = vmatprep.subr.mxu0 0.0
    %2263 = vmatpush1.msra.mxu0 %v1817
    %2264 = vmatprep.subr.mxu0 0.0
    %2265 = vmatpush1.msra.mxu0 %v1820
    %2266 = vmatprep.subr.mxu0 0.0
    %2267 = vmatpush1.msra.mxu0 %v1823
    %2268 = vmatprep.subr.mxu0 0.0
    %2269 = vmatpush1.msra.mxu0 %v1826
    %2270 = vmatprep.subr.mxu0 0.0
    %2271 = vmatpush1.msra.mxu0 %v1829
    %2272 = vmatprep.subr.mxu0 0.0
    %2273 = vmatpush1.msra.mxu0 %v1832
    %2274 = vmatprep.subr.mxu0 0.0
    %2275 = vmatpush1.msra.mxu0 %v1835
    %2276 = vmatprep.subr.mxu0 0.0
    %2277 = vmatpush1.msra.mxu0 %v1838
    %2278 = vmatprep.subr.mxu0 0.0
    %2279 = vmatpush1.msra.mxu0 %v1841
    %2280 = vmatprep.mubr.f32.mxu0 %v1742
    %2281 = vmatmul.mubr.f32.gmra.mrb[0].mxu0 %v1741
    %v2282 = vpop.f32.mrb[0].mxu0
    %v2283 = vadd.f32 %v1999, %v2282
    %v2284 = vpop.f32.mrb[0].mxu0
    %2285 = vdwg.mxu0
    %2286 = vmatprep.subr.mxu0 0.0
    %2287 = vmatpush1.msra.mxu0 %v1844
    %2288 = vmatprep.subr.mxu0 0.0
    %2289 = vmatpush1.msra.mxu0 %v1847
    %2290 = vmatprep.subr.mxu0 0.0
    %2291 = vmatpush1.msra.mxu0 %v1850
    %2292 = vmatprep.subr.mxu0 0.0
    %2293 = vmatpush1.msra.mxu0 %v1853
    %2294 = vmatprep.subr.mxu0 0.0
    %2295 = vmatpush1.msra.mxu0 %v1856
    %2296 = vmatprep.subr.mxu0 0.0
    %2297 = vmatpush1.msra.mxu0 %v1859
    %2298 = vmatprep.subr.mxu0 0.0
    %2299 = vmatpush1.msra.mxu0 %v1862
    %2300 = vmatprep.subr.mxu0 0.0
    %2301 = vmatpush1.msra.mxu0 %v1865
    %2302 = vmatprep.subr.mxu0 0.0
    %2303 = vmatpush1.msra.mxu0 %v1868
    %2304 = vmatprep.subr.mxu0 0.0
    %2305 = vmatpush1.msra.mxu0 %v1871
    %2306 = vmatprep.subr.mxu0 0.0
    %2307 = vmatpush1.msra.mxu0 %v1874
    %2308 = vmatprep.subr.mxu0 0.0
    %2309 = vmatpush1.msra.mxu0 %v1877
    %2310 = vmatprep.subr.mxu0 0.0
    %2311 = vmatpush1.msra.mxu0 %v1880
    %2312 = vmatprep.subr.mxu0 0.0
    %2313 = vmatpush1.msra.mxu0 %v1883
    %2314 = vmatprep.subr.mxu0 0.0
    %2315 = vmatpush1.msra.mxu0 %v1886
    %2316 = vmatprep.subr.mxu0 0.0
    %2317 = vmatpush1.msra.mxu0 %v1889
    %2318 = vmatprep.subr.mxu0 0.0
    %2319 = vmatpush1.msra.mxu0 %v1892
    %2320 = vmatprep.subr.mxu0 0.0
    %2321 = vmatpush1.msra.mxu0 %v1895
    %2322 = vmatprep.subr.mxu0 0.0
    %2323 = vmatpush1.msra.mxu0 %v1898
    %2324 = vmatprep.subr.mxu0 0.0
    %2325 = vmatpush1.msra.mxu0 %v1901
    %2326 = vmatprep.subr.mxu0 0.0
    %2327 = vmatpush1.msra.mxu0 %v1904
    %2328 = vmatprep.subr.mxu0 0.0
    %2329 = vmatpush1.msra.mxu0 %v1907
    %2330 = vmatprep.subr.mxu0 0.0
    %2331 = vmatpush1.msra.mxu0 %v1910
    %2332 = vmatprep.subr.mxu0 0.0
    %2333 = vmatpush1.msra.mxu0 %v1913
    %2334 = vmatprep.subr.mxu0 0.0
    %2335 = vmatpush1.msra.mxu0 %v1916
    %2336 = vmatprep.subr.mxu0 0.0
    %2337 = vmatpush1.msra.mxu0 %v1919
    %2338 = vmatprep.subr.mxu0 0.0
    %2339 = vmatpush1.msra.mxu0 %v1922
    %2340 = vmatprep.subr.mxu0 0.0
    %2341 = vmatpush1.msra.mxu0 %v1925
    %2342 = vmatprep.subr.mxu0 0.0
    %2343 = vmatpush1.msra.mxu0 %v1928
    %2344 = vmatprep.subr.mxu0 0.0
    %2345 = vmatpush1.msra.mxu0 %v1931
    %2346 = vmatprep.subr.mxu0 0.0
    %2347 = vmatpush1.msra.mxu0 %v1934
    %2348 = vmatprep.subr.mxu0 0.0
    %2349 = vmatpush1.msra.mxu0 %v1937
    %2350 = vmatprep.mubr.f32.mxu0 %v1744
    %2351 = vmatmul.mubr.f32.gmra.mrb[0].mxu0 %v1743
    %v2352 = vpop.f32.mrb[0].mxu0
    %v2353 = vadd.f32 %v2283, %v2352
    %v2354 = vpop.f32.mrb[0].mxu0
    %2355 = vdwg.mxu0
    %2356 = vmatprep.subr.mxu0 0.0
    %2357 = vmatpush1.msra.mxu0 %v1940
    %2358 = vmatprep.subr.mxu0 0.0
    %2359 = vmatpush1.msra.mxu0 %v1943
    %2360 = vmatprep.subr.mxu0 0.0
    %2361 = vmatpush1.msra.mxu0 %v1946
    %2362 = vmatprep.subr.mxu0 0.0
    %2363 = vmatpush1.msra.mxu0 %v1949
    %2364 = vmatprep.subr.mxu0 0.0
    %2365 = vmatpush1.msra.mxu0 %v1952
    %2366 = vmatprep.subr.mxu0 0.0
    %2367 = vmatpush1.msra.mxu0 %v1955
    %2368 = vmatprep.subr.mxu0 0.0
    %2369 = vmatpush1.msra.mxu0 %v1958
    %2370 = vmatprep.subr.mxu0 0.0
    %2371 = vmatpush1.msra.mxu0 %v1961
    %2372 = vmatprep.subr.mxu0 0.0
    %2373 = vmatpush1.msra.mxu0 %v1964
    %2374 = vmatprep.subr.mxu0 0.0
    %2375 = vmatpush1.msra.mxu0 %v1967
    %2376 = vmatprep.subr.mxu0 0.0
    %2377 = vmatpush1.msra.mxu0 %v1970
    %2378 = vmatprep.subr.mxu0 0.0
    %2379 = vmatpush1.msra.mxu0 %v1973
    %2380 = vmatprep.subr.mxu0 0.0
    %2381 = vmatpush1.msra.mxu0 %v1976
    %2382 = vmatprep.subr.mxu0 0.0
    %2383 = vmatpush1.msra.mxu0 %v1979
    %2384 = vmatprep.subr.mxu0 0.0
    %2385 = vmatpush1.msra.mxu0 %v1982
    %2386 = vmatprep.subr.mxu0 0.0
    %2387 = vmatpush1.msra.mxu0 %v1985
    %2388 = vmatprep.subr.mxu0 0.0
    %2389 = vmatpush1.msra.mxu0 0.0
    %2390 = vmatprep.subr.mxu0 0.0
    %2391 = vmatpush1.msra.mxu0 0.0
    %2392 = vmatprep.subr.mxu0 0.0
    %2393 = vmatpush1.msra.mxu0 0.0
    %2394 = vmatprep.subr.mxu0 0.0
    %2395 = vmatpush1.msra.mxu0 0.0
    %2396 = vmatprep.subr.mxu0 0.0
    %2397 = vmatpush1.msra.mxu0 0.0
    %2398 = vmatprep.subr.mxu0 0.0
    %2399 = vmatpush1.msra.mxu0 0.0
    %2400 = vmatprep.subr.mxu0 0.0
    %2401 = vmatpush1.msra.mxu0 0.0
    %2402 = vmatprep.subr.mxu0 0.0
    %2403 = vmatpush1.msra.mxu0 0.0
    %2404 = vmatprep.subr.mxu0 0.0
    %2405 = vmatpush1.msra.mxu0 0.0
    %2406 = vmatprep.subr.mxu0 0.0
    %2407 = vmatpush1.msra.mxu0 0.0
    %2408 = vmatprep.subr.mxu0 0.0
    %2409 = vmatpush1.msra.mxu0 0.0
    %2410 = vmatprep.subr.mxu0 0.0
    %2411 = vmatpush1.msra.mxu0 0.0
    %2412 = vmatprep.subr.mxu0 0.0
    %2413 = vmatpush1.msra.mxu0 0.0
    %2414 = vmatprep.subr.mxu0 0.0
    %2415 = vmatpush1.msra.mxu0 0.0
    %2416 = vmatprep.subr.mxu0 0.0
    %2417 = vmatpush1.msra.mxu0 0.0
    %2418 = vmatprep.subr.mxu0 0.0
    %2419 = vmatpush1.msra.mxu0 0.0
    %2420 = vmatprep.mubr.f32.mxu0 0.0
    %2421 = vmatmul.mubr.f32.gmra.mrb[0].mxu0 %v1745
    %v2422 = vpop.f32.mrb[0].mxu0
    %v2423 = vadd.f32 %v2353, %v2422
    %v2424 = vpop.f32.mrb[0].mxu0
    %2425 = vdwg.mxu0
    %v2426 = vmax.f32 %v2212, 0.0
    %v2427 = vmax.f32 %v2214, 0.0
    %v2428 = vmax.f32 %v2423, 0.0
    %v2429 = vld [vmem:[#allocation10] sm:$0xff]
    %v2430 = vld [vmem:[#allocation10 + $0x8] sm:$0xff]
    %v2431 = vld [vmem:[#allocation10 + $0x10] sm:$0xff]
    %v2432 = vld [vmem:[#allocation10 + $0x18] sm:$0xff]
    %v2433 = vld [vmem:[#allocation10 + $0x20] sm:$0xff]
    %v2434 = vld [vmem:[#allocation10 + $0x28] sm:$0xff]
    %v2435 = vld [vmem:[#allocation10 + $0x30] sm:$0xff]
    %v2436 = vld [vmem:[#allocation10 + $0x38] sm:$0xff]
    %v2437 = vld [vmem:[#allocation10 + $0x40] sm:$0xff]
    %v2438 = vld [vmem:[#allocation10 + $0x48] sm:$0xff]
    %v2439 = vld [vmem:[#allocation10 + $0x50] sm:$0xff]
    %v2440 = vld [vmem:[#allocation10 + $0x58] sm:$0xff]
    %v2441 = vld [vmem:[#allocation10 + $0x60] sm:$0xff]
    %v2442 = vld [vmem:[#allocation10 + $0x68] sm:$0xff]
    %v2443 = vld [vmem:[#allocation10 + $0x70] sm:$0xff]
    %v2444 = vld [vmem:[#allocation10 + $0x78] sm:$0xff]
    %v2445 = vld [vmem:[#allocation10 + $0x80] sm:$0xff]
    %v2446 = vld [vmem:[#allocation10 + $0x88] sm:$0xff]
    %v2447 = vld [vmem:[#allocation10 + $0x90] sm:$0xff]
    %v2448 = vld [vmem:[#allocation10 + $0x98] sm:$0xff]
    %v2449 = vld [vmem:[#allocation10 + $0xa0] sm:$0xff]
    %v2450 = vld [vmem:[#allocation10 + $0xa8] sm:$0xff]
    %v2451 = vld [vmem:[#allocation10 + $0xb0] sm:$0xff]
    %v2452 = vld [vmem:[#allocation10 + $0xb8] sm:$0xff]
    %v2453 = vld [vmem:[#allocation10 + $0xc0] sm:$0xff]
    %v2454 = vld [vmem:[#allocation10 + $0xc8] sm:$0xff]
    %v2455 = vld [vmem:[#allocation10 + $0xd0] sm:$0xff]
    %v2456 = vld [vmem:[#allocation10 + $0xd8] sm:$0xff]
    %v2457 = vld [vmem:[#allocation10 + $0xe0] sm:$0xff]
    %v2458 = vld [vmem:[#allocation10 + $0xe8] sm:$0xff]
    %v2459 = vld [vmem:[#allocation10 + $0xf0] sm:$0xff]
    %v2460 = vld [vmem:[#allocation10 + $0xf8] sm:$0xff]
    %v2461 = vld [vmem:[#allocation10 + $0x100] sm:$0xff]
    %v2462 = vld [vmem:[#allocation10 + $0x108] sm:$0xff]
    %v2463 = vld [vmem:[#allocation10 + $0x110] sm:$0xff]
    %v2464 = vld [vmem:[#allocation10 + $0x118] sm:$0xff]
    %v2465 = vld [vmem:[#allocation10 + $0x120] sm:$0xff]
    %v2466 = vld [vmem:[#allocation10 + $0x128] sm:$0xff]
    %v2467 = vld [vmem:[#allocation10 + $0x130] sm:$0xff]
    %v2468 = vld [vmem:[#allocation10 + $0x138] sm:$0xff]
    %v2469 = vld [vmem:[#allocation10 + $0x140] sm:$0xff]
    %v2470 = vld [vmem:[#allocation10 + $0x148] sm:$0xff]
    %v2471 = vld [vmem:[#allocation10 + $0x150] sm:$0xff]
    %v2472 = vld [vmem:[#allocation10 + $0x158] sm:$0xff]
    %v2473 = vld [vmem:[#allocation10 + $0x160] sm:$0xff]
    %v2474 = vld [vmem:[#allocation10 + $0x168] sm:$0xff]
    %v2475 = vld [vmem:[#allocation10 + $0x170] sm:$0xff]
    %v2476 = vld [vmem:[#allocation10 + $0x178] sm:$0xff]
    %v2477 = vld [vmem:[#allocation22] sm:$0x1]
    %v2479 = vlaneseq
    %v2480 = vshrl.u32 %v2479, 7
    %v2481 = vsub.s32 0, %v2480
    %v2482 = vrot.slane %v2477, %v2481
    %2484 = vmatprep.subr.mxu0 0.0
    %2485 = vmatpush1.msra.mxu0 %v2429
    %2486 = vmatprep.subr.mxu0 0.0
    %2487 = vmatpush1.msra.mxu0 %v2430
    %2488 = vmatprep.subr.mxu0 0.0
    %2489 = vmatpush1.msra.mxu0 %v2431
    %2490 = vmatprep.subr.mxu0 0.0
    %2491 = vmatpush1.msra.mxu0 %v2432
    %2492 = vmatprep.subr.mxu0 0.0
    %2493 = vmatpush1.msra.mxu0 %v2433
    %2494 = vmatprep.subr.mxu0 0.0
    %2495 = vmatpush1.msra.mxu0 %v2434
    %2496 = vmatprep.subr.mxu0 0.0
    %2497 = vmatpush1.msra.mxu0 %v2435
    %2498 = vmatprep.subr.mxu0 0.0
    %2499 = vmatpush1.msra.mxu0 %v2436
    %2500 = vmatprep.subr.mxu0 0.0
    %2501 = vmatpush1.msra.mxu0 %v2437
    %2502 = vmatprep.subr.mxu0 0.0
    %2503 = vmatpush1.msra.mxu0 %v2438
    %2504 = vmatprep.subr.mxu0 0.0
    %2505 = vmatpush1.msra.mxu0 %v2439
    %2506 = vmatprep.subr.mxu0 0.0
    %2507 = vmatpush1.msra.mxu0 %v2440
    %2508 = vmatprep.subr.mxu0 0.0
    %2509 = vmatpush1.msra.mxu0 %v2441
    %2510 = vmatprep.subr.mxu0 0.0
    %2511 = vmatpush1.msra.mxu0 %v2442
    %2512 = vmatprep.subr.mxu0 0.0
    %2513 = vmatpush1.msra.mxu0 %v2443
    %2514 = vmatprep.subr.mxu0 0.0
    %2515 = vmatpush1.msra.mxu0 %v2444
    %2516 = vmatprep.subr.mxu0 0.0
    %2517 = vmatpush1.msra.mxu0 %v2445
    %2518 = vmatprep.subr.mxu0 0.0
    %2519 = vmatpush1.msra.mxu0 %v2446
    %2520 = vmatprep.subr.mxu0 0.0
    %2521 = vmatpush1.msra.mxu0 %v2447
    %2522 = vmatprep.subr.mxu0 0.0
    %2523 = vmatpush1.msra.mxu0 %v2448
    %2524 = vmatprep.subr.mxu0 0.0
    %2525 = vmatpush1.msra.mxu0 %v2449
    %2526 = vmatprep.subr.mxu0 0.0
    %2527 = vmatpush1.msra.mxu0 %v2450
    %2528 = vmatprep.subr.mxu0 0.0
    %2529 = vmatpush1.msra.mxu0 %v2451
    %2530 = vmatprep.subr.mxu0 0.0
    %2531 = vmatpush1.msra.mxu0 %v2452
    %2532 = vmatprep.subr.mxu0 0.0
    %2533 = vmatpush1.msra.mxu0 %v2453
    %2534 = vmatprep.subr.mxu0 0.0
    %2535 = vmatpush1.msra.mxu0 %v2454
    %2536 = vmatprep.subr.mxu0 0.0
    %2537 = vmatpush1.msra.mxu0 %v2455
    %2538 = vmatprep.subr.mxu0 0.0
    %2539 = vmatpush1.msra.mxu0 %v2456
    %2540 = vmatprep.subr.mxu0 0.0
    %2541 = vmatpush1.msra.mxu0 %v2457
    %2542 = vmatprep.subr.mxu0 0.0
    %2543 = vmatpush1.msra.mxu0 %v2458
    %2544 = vmatprep.subr.mxu0 0.0
    %2545 = vmatpush1.msra.mxu0 %v2459
    %2546 = vmatprep.subr.mxu0 0.0
    %2547 = vmatpush1.msra.mxu0 %v2460
    %2548 = vmatprep.mubr.f32.mxu0 %v2427
    %2549 = vmatmul.mubr.f32.gmra.mrb[0].mxu0 %v2426
    %v2550 = vpop.f32.mrb[0].mxu0
    %v2551 = vadd.f32 %v2482, %v2550
    %v2552 = vpop.f32.mrb[0].mxu0
    %2553 = vdwg.mxu0
    %2554 = vmatprep.subr.mxu0 0.0
    %2555 = vmatpush1.msra.mxu0 %v2461
    %2556 = vmatprep.subr.mxu0 0.0
    %2557 = vmatpush1.msra.mxu0 %v2462
    %2558 = vmatprep.subr.mxu0 0.0
    %2559 = vmatpush1.msra.mxu0 %v2463
    %2560 = vmatprep.subr.mxu0 0.0
    %2561 = vmatpush1.msra.mxu0 %v2464
    %2562 = vmatprep.subr.mxu0 0.0
    %2563 = vmatpush1.msra.mxu0 %v2465
    %2564 = vmatprep.subr.mxu0 0.0
    %2565 = vmatpush1.msra.mxu0 %v2466
    %2566 = vmatprep.subr.mxu0 0.0
    %2567 = vmatpush1.msra.mxu0 %v2467
    %2568 = vmatprep.subr.mxu0 0.0
    %2569 = vmatpush1.msra.mxu0 %v2468
    %2570 = vmatprep.subr.mxu0 0.0
    %2571 = vmatpush1.msra.mxu0 %v2469
    %2572 = vmatprep.subr.mxu0 0.0
    %2573 = vmatpush1.msra.mxu0 %v2470
    %2574 = vmatprep.subr.mxu0 0.0
    %2575 = vmatpush1.msra.mxu0 %v2471
    %2576 = vmatprep.subr.mxu0 0.0
    %2577 = vmatpush1.msra.mxu0 %v2472
    %2578 = vmatprep.subr.mxu0 0.0
    %2579 = vmatpush1.msra.mxu0 %v2473
    %2580 = vmatprep.subr.mxu0 0.0
    %2581 = vmatpush1.msra.mxu0 %v2474
    %2582 = vmatprep.subr.mxu0 0.0
    %2583 = vmatpush1.msra.mxu0 %v2475
    %2584 = vmatprep.subr.mxu0 0.0
    %2585 = vmatpush1.msra.mxu0 %v2476
    %2586 = vmatprep.subr.mxu0 0.0
    %2587 = vmatpush1.msra.mxu0 0.0
    %2588 = vmatprep.subr.mxu0 0.0
    %2589 = vmatpush1.msra.mxu0 0.0
    %2590 = vmatprep.subr.mxu0 0.0
    %2591 = vmatpush1.msra.mxu0 0.0
    %2592 = vmatprep.subr.mxu0 0.0
    %2593 = vmatpush1.msra.mxu0 0.0
    %2594 = vmatprep.subr.mxu0 0.0
    %2595 = vmatpush1.msra.mxu0 0.0
    %2596 = vmatprep.subr.mxu0 0.0
    %2597 = vmatpush1.msra.mxu0 0.0
    %2598 = vmatprep.subr.mxu0 0.0
    %2599 = vmatpush1.msra.mxu0 0.0
    %2600 = vmatprep.subr.mxu0 0.0
    %2601 = vmatpush1.msra.mxu0 0.0
    %2602 = vmatprep.subr.mxu0 0.0
    %2603 = vmatpush1.msra.mxu0 0.0
    %2604 = vmatprep.subr.mxu0 0.0
    %2605 = vmatpush1.msra.mxu0 0.0
    %2606 = vmatprep.subr.mxu0 0.0
    %2607 = vmatpush1.msra.mxu0 0.0
    %2608 = vmatprep.subr.mxu0 0.0
    %2609 = vmatpush1.msra.mxu0 0.0
    %2610 = vmatprep.subr.mxu0 0.0
    %2611 = vmatpush1.msra.mxu0 0.0
    %2612 = vmatprep.subr.mxu0 0.0
    %2613 = vmatpush1.msra.mxu0 0.0
    %2614 = vmatprep.subr.mxu0 0.0
    %2615 = vmatpush1.msra.mxu0 0.0
    %2616 = vmatprep.subr.mxu0 0.0
    %2617 = vmatpush1.msra.mxu0 0.0
    %2618 = vmatprep.mubr.f32.mxu0 0.0
    %2619 = vmatmul.mubr.f32.gmra.mrb[0].mxu0 %v2428
    %v2620 = vpop.f32.mrb[0].mxu0
    %v2621 = vadd.f32 %v2551, %v2620
    %v2622 = vpop.f32.mrb[0].mxu0
    %2623 = vdwg.mxu0
    %v2624 = vmax.f32 %v2621, 0.0
    %2625 = vst [vmem:[#allocation29] sm:$0xff] %v2624
    %v2626 = vld [vmem:[#allocation11] sm:$0xff]
    %v2627 = vld [vmem:[#allocation11 + $0x8] sm:$0xff]
    %v2628 = vld [vmem:[#allocation11 + $0x10] sm:$0xff]
    %v2629 = vld [vmem:[#allocation11 + $0x18] sm:$0xff]
    %v2630 = vld [vmem:[#allocation11 + $0x20] sm:$0xff]
    %v2631 = vld [vmem:[#allocation11 + $0x28] sm:$0xff]
    %v2632 = vld [vmem:[#allocation11 + $0x30] sm:$0xff]
    %v2633 = vld [vmem:[#allocation11 + $0x38] sm:$0xff]
    %v2634 = vld [vmem:[#allocation11 + $0x40] sm:$0xff]
    %v2635 = vld [vmem:[#allocation11 + $0x48] sm:$0xff]
    %v2636 = vld [vmem:[#allocation11 + $0x50] sm:$0xff]
    %v2637 = vld [vmem:[#allocation11 + $0x58] sm:$0xff]
    %v2638 = vld [vmem:[#allocation11 + $0x60] sm:$0xff]
    %v2639 = vld [vmem:[#allocation11 + $0x68] sm:$0xff]
    %v2640 = vld [vmem:[#allocation11 + $0x70] sm:$0xff]
    %v2641 = vld [vmem:[#allocation11 + $0x78] sm:$0xff]
    %v2642 = vld [vmem:[#allocation11 + $0x80] sm:$0xff]
    %v2643 = vld [vmem:[#allocation11 + $0x88] sm:$0xff]
    %v2644 = vld [vmem:[#allocation11 + $0x90] sm:$0xff]
    %v2645 = vld [vmem:[#allocation11 + $0x98] sm:$0xff]
    %v2646 = vld [vmem:[#allocation11 + $0xa0] sm:$0xff]
    %v2647 = vld [vmem:[#allocation11 + $0xa8] sm:$0xff]
    %v2648 = vld [vmem:[#allocation11 + $0xb0] sm:$0xff]
    %v2649 = vld [vmem:[#allocation11 + $0xb8] sm:$0xff]
    %v2650 = vld [vmem:[#allocation11 + $0xc0] sm:$0xff]
    %v2651 = vld [vmem:[#allocation11 + $0xc8] sm:$0xff]
    %v2652 = vld [vmem:[#allocation11 + $0xd0] sm:$0xff]
    %v2653 = vld [vmem:[#allocation11 + $0xd8] sm:$0xff]
    %v2654 = vld [vmem:[#allocation11 + $0xe0] sm:$0xff]
    %v2655 = vld [vmem:[#allocation11 + $0xe8] sm:$0xff]
    %v2656 = vld [vmem:[#allocation11 + $0xf0] sm:$0xff]
    %v2657 = vld [vmem:[#allocation11 + $0xf8] sm:$0xff]
    %v2658 = vld [vmem:[#allocation11 + $0x100] sm:$0xff]
    %v2659 = vld [vmem:[#allocation11 + $0x108] sm:$0xff]
    %v2660 = vld [vmem:[#allocation11 + $0x110] sm:$0xff]
    %v2661 = vld [vmem:[#allocation11 + $0x118] sm:$0xff]
    %v2662 = vld [vmem:[#allocation11 + $0x120] sm:$0xff]
    %v2663 = vld [vmem:[#allocation11 + $0x128] sm:$0xff]
    %v2664 = vld [vmem:[#allocation11 + $0x130] sm:$0xff]
    %v2665 = vld [vmem:[#allocation11 + $0x138] sm:$0xff]
    %v2666 = vld [vmem:[#allocation11 + $0x140] sm:$0xff]
    %v2667 = vld [vmem:[#allocation11 + $0x148] sm:$0xff]
    %v2668 = vld [vmem:[#allocation11 + $0x150] sm:$0xff]
    %v2669 = vld [vmem:[#allocation11 + $0x158] sm:$0xff]
    %v2670 = vld [vmem:[#allocation11 + $0x160] sm:$0xff]
    %v2671 = vld [vmem:[#allocation11 + $0x168] sm:$0xff]
    %v2672 = vld [vmem:[#allocation11 + $0x170] sm:$0xff]
    %v2673 = vld [vmem:[#allocation11 + $0x178] sm:$0xff]
    %v2674 = vld [vmem:[#allocation23] sm:$0x7]
    %v2676 = vlaneseq
    %v2677 = vshrl.u32 %v2676, 7
    %v2678 = vsub.s32 0, %v2677
    %v2679 = vrot.slane %v2674, %v2678
    %v2680 = vlaneseq
    %v2681 = vshrl.u32 %v2680, 7
    %v2682 = vsub.s32 1, %v2681
    %v2683 = vrot.slane %v2674, %v2682
    %v2684 = vlaneseq
    %v2685 = vshrl.u32 %v2684, 7
    %v2686 = vsub.s32 2, %v2685
    %v2687 = vrot.slane %v2674, %v2686
    %2691 = vmatprep.subr.mxu0 %v2627
    %2692 = vmatpush1.msra.mxu0 %v2626
    %2693 = vmatprep.subr.mxu0 %v2630
    %2694 = vmatpush1.msra.mxu0 %v2629
    %2695 = vmatprep.subr.mxu0 %v2633
    %2696 = vmatpush1.msra.mxu0 %v2632
    %2697 = vmatprep.subr.mxu0 %v2636
    %2698 = vmatpush1.msra.mxu0 %v2635
    %2699 = vmatprep.subr.mxu0 %v2639
    %2700 = vmatpush1.msra.mxu0 %v2638
    %2701 = vmatprep.subr.mxu0 %v2642
    %2702 = vmatpush1.msra.mxu0 %v2641
    %2703 = vmatprep.subr.mxu0 %v2645
    %2704 = vmatpush1.msra.mxu0 %v2644
    %2705 = vmatprep.subr.mxu0 %v2648
    %2706 = vmatpush1.msra.mxu0 %v2647
    %2707 = vmatprep.subr.mxu0 %v2651
    %2708 = vmatpush1.msra.mxu0 %v2650
    %2709 = vmatprep.subr.mxu0 %v2654
    %2710 = vmatpush1.msra.mxu0 %v2653
    %2711 = vmatprep.subr.mxu0 %v2657
    %2712 = vmatpush1.msra.mxu0 %v2656
    %2713 = vmatprep.subr.mxu0 %v2660
    %2714 = vmatpush1.msra.mxu0 %v2659
    %2715 = vmatprep.subr.mxu0 %v2663
    %2716 = vmatpush1.msra.mxu0 %v2662
    %2717 = vmatprep.subr.mxu0 %v2666
    %2718 = vmatpush1.msra.mxu0 %v2665
    %2719 = vmatprep.subr.mxu0 %v2669
    %2720 = vmatpush1.msra.mxu0 %v2668
    %2721 = vmatprep.subr.mxu0 %v2672
    %2722 = vmatpush1.msra.mxu0 %v2671
    %2723 = vmatprep.subr.mxu0 0.0
    %2724 = vmatpush1.msra.mxu0 0.0
    %2725 = vmatprep.subr.mxu0 0.0
    %2726 = vmatpush1.msra.mxu0 0.0
    %2727 = vmatprep.subr.mxu0 0.0
    %2728 = vmatpush1.msra.mxu0 0.0
    %2729 = vmatprep.subr.mxu0 0.0
    %2730 = vmatpush1.msra.mxu0 0.0
    %2731 = vmatprep.subr.mxu0 0.0
    %2732 = vmatpush1.msra.mxu0 0.0
    %2733 = vmatprep.subr.mxu0 0.0
    %2734 = vmatpush1.msra.mxu0 0.0
    %2735 = vmatprep.subr.mxu0 0.0
    %2736 = vmatpush1.msra.mxu0 0.0
    %2737 = vmatprep.subr.mxu0 0.0
    %2738 = vmatpush1.msra.mxu0 0.0
    %2739 = vmatprep.subr.mxu0 0.0
    %2740 = vmatpush1.msra.mxu0 0.0
    %2741 = vmatprep.subr.mxu0 0.0
    %2742 = vmatpush1.msra.mxu0 0.0
    %2743 = vmatprep.subr.mxu0 0.0
    %2744 = vmatpush1.msra.mxu0 0.0
    %2745 = vmatprep.subr.mxu0 0.0
    %2746 = vmatpush1.msra.mxu0 0.0
    %2747 = vmatprep.subr.mxu0 0.0
    %2748 = vmatpush1.msra.mxu0 0.0
    %2749 = vmatprep.subr.mxu0 0.0
    %2750 = vmatpush1.msra.mxu0 0.0
    %2751 = vmatprep.subr.mxu0 0.0
    %2752 = vmatpush1.msra.mxu0 0.0
    %2753 = vmatprep.subr.mxu0 0.0
    %2754 = vmatpush1.msra.mxu0 0.0
    %2755 = vmatprep.mubr.f32.mxu0 0.0
    %2756 = vmatmul.mubr.f32.gmra.mrb[0].mxu0 %v2624
    %v2757 = vpop.f32.mrb[0].mxu0
    %v2758 = vadd.f32 %v2679, %v2757
    %v2759 = vpop.f32.mrb[0].mxu0
    %v2760 = vadd.f32 %v2683, %v2759
    %2761 = vdwg.mxu0
    %2762 = vmatprep.subr.mxu0 0.0
    %2763 = vmatpush1.msra.mxu0 %v2628
    %2764 = vmatprep.subr.mxu0 0.0
    %2765 = vmatpush1.msra.mxu0 %v2631
    %2766 = vmatprep.subr.mxu0 0.0
    %2767 = vmatpush1.msra.mxu0 %v2634
    %2768 = vmatprep.subr.mxu0 0.0
    %2769 = vmatpush1.msra.mxu0 %v2637
    %2770 = vmatprep.subr.mxu0 0.0
    %2771 = vmatpush1.msra.mxu0 %v2640
    %2772 = vmatprep.subr.mxu0 0.0
    %2773 = vmatpush1.msra.mxu0 %v2643
    %2774 = vmatprep.subr.mxu0 0.0
    %2775 = vmatpush1.msra.mxu0 %v2646
    %2776 = vmatprep.subr.mxu0 0.0
    %2777 = vmatpush1.msra.mxu0 %v2649
    %2778 = vmatprep.subr.mxu0 0.0
    %2779 = vmatpush1.msra.mxu0 %v2652
    %2780 = vmatprep.subr.mxu0 0.0
    %2781 = vmatpush1.msra.mxu0 %v2655
    %2782 = vmatprep.subr.mxu0 0.0
    %2783 = vmatpush1.msra.mxu0 %v2658
    %2784 = vmatprep.subr.mxu0 0.0
    %2785 = vmatpush1.msra.mxu0 %v2661
    %2786 = vmatprep.subr.mxu0 0.0
    %2787 = vmatpush1.msra.mxu0 %v2664
    %2788 = vmatprep.subr.mxu0 0.0
    %2789 = vmatpush1.msra.mxu0 %v2667
    %2790 = vmatprep.subr.mxu0 0.0
    %2791 = vmatpush1.msra.mxu0 %v2670
    %2792 = vmatprep.subr.mxu0 0.0
    %2793 = vmatpush1.msra.mxu0 %v2673
    %2794 = vmatprep.subr.mxu0 0.0
    %2795 = vmatpush1.msra.mxu0 0.0
    %2796 = vmatprep.subr.mxu0 0.0
    %2797 = vmatpush1.msra.mxu0 0.0
    %2798 = vmatprep.subr.mxu0 0.0
    %2799 = vmatpush1.msra.mxu0 0.0
    %2800 = vmatprep.subr.mxu0 0.0
    %2801 = vmatpush1.msra.mxu0 0.0
    %2802 = vmatprep.subr.mxu0 0.0
    %2803 = vmatpush1.msra.mxu0 0.0
    %2804 = vmatprep.subr.mxu0 0.0
    %2805 = vmatpush1.msra.mxu0 0.0
    %2806 = vmatprep.subr.mxu0 0.0
    %2807 = vmatpush1.msra.mxu0 0.0
    %2808 = vmatprep.subr.mxu0 0.0
    %2809 = vmatpush1.msra.mxu0 0.0
    %2810 = vmatprep.subr.mxu0 0.0
    %2811 = vmatpush1.msra.mxu0 0.0
    %2812 = vmatprep.subr.mxu0 0.0
    %2813 = vmatpush1.msra.mxu0 0.0
    %2814 = vmatprep.subr.mxu0 0.0
    %2815 = vmatpush1.msra.mxu0 0.0
    %2816 = vmatprep.subr.mxu0 0.0
    %2817 = vmatpush1.msra.mxu0 0.0
    %2818 = vmatprep.subr.mxu0 0.0
    %2819 = vmatpush1.msra.mxu0 0.0
    %2820 = vmatprep.subr.mxu0 0.0
    %2821 = vmatpush1.msra.mxu0 0.0
    %2822 = vmatprep.subr.mxu0 0.0
    %2823 = vmatpush1.msra.mxu0 0.0
    %2824 = vmatprep.subr.mxu0 0.0
    %2825 = vmatpush1.msra.mxu0 0.0
    %2826 = vmatprep.mubr.f32.mxu0 0.0
    %2827 = vmatmul.mubr.f32.gmra.mrb[0].mxu0 %v2624
    %v2828 = vpop.f32.mrb[0].mxu0
    %v2829 = vadd.f32 %v2687, %v2828
    %v2830 = vpop.f32.mrb[0].mxu0
    %2831 = vdwg.mxu0
    %v2832 = vmax.f32 %v2758, 0.0
    %v2833 = vmax.f32 %v2760, 0.0
    %v2834 = vmax.f32 %v2829, 0.0
    %v2835 = vld [vmem:[#allocation13] sm:$0xff]
    %v2836 = vld [vmem:[#allocation13 + $0x8] sm:$0xff]
    %v2837 = vld [vmem:[#allocation13 + $0x10] sm:$0xff]
    %v2838 = vld [vmem:[#allocation13 + $0x18] sm:$0xff]
    %v2839 = vld [vmem:[#allocation13 + $0x20] sm:$0xff]
    %v2840 = vld [vmem:[#allocation13 + $0x28] sm:$0xff]
    %v2841 = vld [vmem:[#allocation13 + $0x30] sm:$0xff]
    %v2842 = vld [vmem:[#allocation13 + $0x38] sm:$0xff]
    %v2843 = vld [vmem:[#allocation13 + $0x40] sm:$0xff]
    %v2844 = vld [vmem:[#allocation13 + $0x48] sm:$0xff]
    %v2845 = vld [vmem:[#allocation13 + $0x50] sm:$0xff]
    %v2846 = vld [vmem:[#allocation13 + $0x58] sm:$0xff]
    %v2847 = vld [vmem:[#allocation13 + $0x60] sm:$0xff]
    %v2848 = vld [vmem:[#allocation13 + $0x68] sm:$0xff]
    %v2849 = vld [vmem:[#allocation13 + $0x70] sm:$0xff]
    %v2850 = vld [vmem:[#allocation13 + $0x78] sm:$0xff]
    %v2851 = vld [vmem:[#allocation13 + $0x80] sm:$0xff]
    %v2852 = vld [vmem:[#allocation13 + $0x88] sm:$0xff]
    %v2853 = vld [vmem:[#allocation13 + $0x90] sm:$0xff]
    %v2854 = vld [vmem:[#allocation13 + $0x98] sm:$0xff]
    %v2855 = vld [vmem:[#allocation13 + $0xa0] sm:$0xff]
    %v2856 = vld [vmem:[#allocation13 + $0xa8] sm:$0xff]
    %v2857 = vld [vmem:[#allocation13 + $0xb0] sm:$0xff]
    %v2858 = vld [vmem:[#allocation13 + $0xb8] sm:$0xff]
    %v2859 = vld [vmem:[#allocation13 + $0xc0] sm:$0xff]
    %v2860 = vld [vmem:[#allocation13 + $0xc8] sm:$0xff]
    %v2861 = vld [vmem:[#allocation13 + $0xd0] sm:$0xff]
    %v2862 = vld [vmem:[#allocation13 + $0xd8] sm:$0xff]
    %v2863 = vld [vmem:[#allocation13 + $0xe0] sm:$0xff]
    %v2864 = vld [vmem:[#allocation13 + $0xe8] sm:$0xff]
    %v2865 = vld [vmem:[#allocation13 + $0xf0] sm:$0xff]
    %v2866 = vld [vmem:[#allocation13 + $0xf8] sm:$0xff]
    %v2867 = vld [vmem:[#allocation13 + $0x100] sm:$0xff]
    %v2868 = vld [vmem:[#allocation13 + $0x108] sm:$0xff]
    %v2869 = vld [vmem:[#allocation13 + $0x110] sm:$0xff]
    %v2870 = vld [vmem:[#allocation13 + $0x118] sm:$0xff]
    %v2871 = vld [vmem:[#allocation13 + $0x120] sm:$0xff]
    %v2872 = vld [vmem:[#allocation13 + $0x128] sm:$0xff]
    %v2873 = vld [vmem:[#allocation13 + $0x130] sm:$0xff]
    %v2874 = vld [vmem:[#allocation13 + $0x138] sm:$0xff]
    %v2875 = vld [vmem:[#allocation13 + $0x140] sm:$0xff]
    %v2876 = vld [vmem:[#allocation13 + $0x148] sm:$0xff]
    %v2877 = vld [vmem:[#allocation13 + $0x150] sm:$0xff]
    %v2878 = vld [vmem:[#allocation13 + $0x158] sm:$0xff]
    %v2879 = vld [vmem:[#allocation13 + $0x160] sm:$0xff]
    %v2880 = vld [vmem:[#allocation13 + $0x168] sm:$0xff]
    %v2881 = vld [vmem:[#allocation13 + $0x170] sm:$0xff]
    %v2882 = vld [vmem:[#allocation13 + $0x178] sm:$0xff]
    %v2883 = vld [vmem:[#allocation13 + $0x180] sm:$0xff]
    %v2884 = vld [vmem:[#allocation13 + $0x188] sm:$0xff]
    %v2885 = vld [vmem:[#allocation13 + $0x190] sm:$0xff]
    %v2886 = vld [vmem:[#allocation13 + $0x198] sm:$0xff]
    %v2887 = vld [vmem:[#allocation13 + $0x1a0] sm:$0xff]
    %v2888 = vld [vmem:[#allocation13 + $0x1a8] sm:$0xff]
    %v2889 = vld [vmem:[#allocation13 + $0x1b0] sm:$0xff]
    %v2890 = vld [vmem:[#allocation13 + $0x1b8] sm:$0xff]
    %v2891 = vld [vmem:[#allocation13 + $0x1c0] sm:$0xff]
    %v2892 = vld [vmem:[#allocation13 + $0x1c8] sm:$0xff]
    %v2893 = vld [vmem:[#allocation13 + $0x1d0] sm:$0xff]
    %v2894 = vld [vmem:[#allocation13 + $0x1d8] sm:$0xff]
    %v2895 = vld [vmem:[#allocation13 + $0x1e0] sm:$0xff]
    %v2896 = vld [vmem:[#allocation13 + $0x1e8] sm:$0xff]
    %v2897 = vld [vmem:[#allocation13 + $0x1f0] sm:$0xff]
    %v2898 = vld [vmem:[#allocation13 + $0x1f8] sm:$0xff]
    %v2899 = vld [vmem:[#allocation13 + $0x200] sm:$0xff]
    %v2900 = vld [vmem:[#allocation13 + $0x208] sm:$0xff]
    %v2901 = vld [vmem:[#allocation13 + $0x210] sm:$0xff]
    %v2902 = vld [vmem:[#allocation13 + $0x218] sm:$0xff]
    %v2903 = vld [vmem:[#allocation13 + $0x220] sm:$0xff]
    %v2904 = vld [vmem:[#allocation13 + $0x228] sm:$0xff]
    %v2905 = vld [vmem:[#allocation13 + $0x230] sm:$0xff]
    %v2906 = vld [vmem:[#allocation13 + $0x238] sm:$0xff]
    %v2907 = vld [vmem:[#allocation13 + $0x240] sm:$0xff]
    %v2908 = vld [vmem:[#allocation13 + $0x248] sm:$0xff]
    %v2909 = vld [vmem:[#allocation13 + $0x250] sm:$0xff]
    %v2910 = vld [vmem:[#allocation13 + $0x258] sm:$0xff]
    %v2911 = vld [vmem:[#allocation13 + $0x260] sm:$0xff]
    %v2912 = vld [vmem:[#allocation13 + $0x268] sm:$0xff]
    %v2913 = vld [vmem:[#allocation13 + $0x270] sm:$0xff]
    %v2914 = vld [vmem:[#allocation13 + $0x278] sm:$0xff]
    %v2915 = vld [vmem:[#allocation13 + $0x280] sm:$0xff]
    %v2916 = vld [vmem:[#allocation13 + $0x288] sm:$0xff]
    %v2917 = vld [vmem:[#allocation13 + $0x290] sm:$0xff]
    %v2918 = vld [vmem:[#allocation13 + $0x298] sm:$0xff]
    %v2919 = vld [vmem:[#allocation13 + $0x2a0] sm:$0xff]
    %v2920 = vld [vmem:[#allocation13 + $0x2a8] sm:$0xff]
    %v2921 = vld [vmem:[#allocation13 + $0x2b0] sm:$0xff]
    %v2922 = vld [vmem:[#allocation13 + $0x2b8] sm:$0xff]
    %v2923 = vld [vmem:[#allocation13 + $0x2c0] sm:$0xff]
    %v2924 = vld [vmem:[#allocation13 + $0x2c8] sm:$0xff]
    %v2925 = vld [vmem:[#allocation13 + $0x2d0] sm:$0xff]
    %v2926 = vld [vmem:[#allocation13 + $0x2d8] sm:$0xff]
    %v2927 = vld [vmem:[#allocation13 + $0x2e0] sm:$0xff]
    %v2928 = vld [vmem:[#allocation13 + $0x2e8] sm:$0xff]
    %v2929 = vld [vmem:[#allocation13 + $0x2f0] sm:$0xff]
    %v2930 = vld [vmem:[#allocation13 + $0x2f8] sm:$0xff]
    %v2931 = vld [vmem:[#allocation13 + $0x300] sm:$0xff]
    %v2932 = vld [vmem:[#allocation13 + $0x308] sm:$0xff]
    %v2933 = vld [vmem:[#allocation13 + $0x310] sm:$0xff]
    %v2934 = vld [vmem:[#allocation13 + $0x318] sm:$0xff]
    %v2935 = vld [vmem:[#allocation13 + $0x320] sm:$0xff]
    %v2936 = vld [vmem:[#allocation13 + $0x328] sm:$0xff]
    %v2937 = vld [vmem:[#allocation13 + $0x330] sm:$0xff]
    %v2938 = vld [vmem:[#allocation13 + $0x338] sm:$0xff]
    %v2939 = vld [vmem:[#allocation13 + $0x340] sm:$0xff]
    %v2940 = vld [vmem:[#allocation13 + $0x348] sm:$0xff]
    %v2941 = vld [vmem:[#allocation13 + $0x350] sm:$0xff]
    %v2942 = vld [vmem:[#allocation13 + $0x358] sm:$0xff]
    %v2943 = vld [vmem:[#allocation13 + $0x360] sm:$0xff]
    %v2944 = vld [vmem:[#allocation13 + $0x368] sm:$0xff]
    %v2945 = vld [vmem:[#allocation13 + $0x370] sm:$0xff]
    %v2946 = vld [vmem:[#allocation13 + $0x378] sm:$0xff]
    %v2947 = vld [vmem:[#allocation13 + $0x380] sm:$0xff]
    %v2948 = vld [vmem:[#allocation13 + $0x388] sm:$0xff]
    %v2949 = vld [vmem:[#allocation13 + $0x390] sm:$0xff]
    %v2950 = vld [vmem:[#allocation13 + $0x398] sm:$0xff]
    %v2951 = vld [vmem:[#allocation13 + $0x3a0] sm:$0xff]
    %v2952 = vld [vmem:[#allocation13 + $0x3a8] sm:$0xff]
    %v2953 = vld [vmem:[#allocation13 + $0x3b0] sm:$0xff]
    %v2954 = vld [vmem:[#allocation13 + $0x3b8] sm:$0xff]
    %v2955 = vld [vmem:[#allocation13 + $0x3c0] sm:$0xff]
    %v2956 = vld [vmem:[#allocation13 + $0x3c8] sm:$0xff]
    %v2957 = vld [vmem:[#allocation13 + $0x3d0] sm:$0xff]
    %v2958 = vld [vmem:[#allocation13 + $0x3d8] sm:$0xff]
    %v2959 = vld [vmem:[#allocation13 + $0x3e0] sm:$0xff]
    %v2960 = vld [vmem:[#allocation13 + $0x3e8] sm:$0xff]
    %v2961 = vld [vmem:[#allocation13 + $0x3f0] sm:$0xff]
    %v2962 = vld [vmem:[#allocation13 + $0x3f8] sm:$0xff]
    %v2963 = vld [vmem:[#allocation13 + $0x400] sm:$0xff]
    %v2964 = vld [vmem:[#allocation13 + $0x408] sm:$0xff]
    %v2965 = vld [vmem:[#allocation13 + $0x410] sm:$0xff]
    %v2966 = vld [vmem:[#allocation13 + $0x418] sm:$0xff]
    %v2967 = vld [vmem:[#allocation13 + $0x420] sm:$0xff]
    %v2968 = vld [vmem:[#allocation13 + $0x428] sm:$0xff]
    %v2969 = vld [vmem:[#allocation13 + $0x430] sm:$0xff]
    %v2970 = vld [vmem:[#allocation13 + $0x438] sm:$0xff]
    %v2971 = vld [vmem:[#allocation13 + $0x440] sm:$0xff]
    %v2972 = vld [vmem:[#allocation13 + $0x448] sm:$0xff]
    %v2973 = vld [vmem:[#allocation13 + $0x450] sm:$0xff]
    %v2974 = vld [vmem:[#allocation13 + $0x458] sm:$0xff]
    %v2975 = vld [vmem:[#allocation13 + $0x460] sm:$0xff]
    %v2976 = vld [vmem:[#allocation13 + $0x468] sm:$0xff]
    %v2977 = vld [vmem:[#allocation13 + $0x470] sm:$0xff]
    %v2978 = vld [vmem:[#allocation13 + $0x478] sm:$0xff]
    %v2979 = vld [vmem:[#allocation13 + $0x480] sm:$0xff]
    %v2980 = vld [vmem:[#allocation13 + $0x488] sm:$0xff]
    %v2981 = vld [vmem:[#allocation13 + $0x490] sm:$0xff]
    %v2982 = vld [vmem:[#allocation13 + $0x498] sm:$0xff]
    %v2983 = vld [vmem:[#allocation13 + $0x4a0] sm:$0xff]
    %v2984 = vld [vmem:[#allocation13 + $0x4a8] sm:$0xff]
    %v2985 = vld [vmem:[#allocation13 + $0x4b0] sm:$0xff]
    %v2986 = vld [vmem:[#allocation13 + $0x4b8] sm:$0xff]
    %v2987 = vld [vmem:[#allocation13 + $0x4c0] sm:$0xff]
    %v2988 = vld [vmem:[#allocation13 + $0x4c8] sm:$0xff]
    %v2989 = vld [vmem:[#allocation13 + $0x4d0] sm:$0xff]
    %v2990 = vld [vmem:[#allocation13 + $0x4d8] sm:$0xff]
    %v2991 = vld [vmem:[#allocation13 + $0x4e0] sm:$0xff]
    %v2992 = vld [vmem:[#allocation13 + $0x4e8] sm:$0xff]
    %v2993 = vld [vmem:[#allocation13 + $0x4f0] sm:$0xff]
    %v2994 = vld [vmem:[#allocation13 + $0x4f8] sm:$0xff]
    %v2995 = vld [vmem:[#allocation13 + $0x500] sm:$0xff]
    %v2996 = vld [vmem:[#allocation13 + $0x508] sm:$0xff]
    %v2997 = vld [vmem:[#allocation13 + $0x510] sm:$0xff]
    %v2998 = vld [vmem:[#allocation13 + $0x518] sm:$0xff]
    %v2999 = vld [vmem:[#allocation13 + $0x520] sm:$0xff]
    %v3000 = vld [vmem:[#allocation13 + $0x528] sm:$0xff]
    %v3001 = vld [vmem:[#allocation13 + $0x530] sm:$0xff]
    %v3002 = vld [vmem:[#allocation13 + $0x538] sm:$0xff]
    %v3003 = vld [vmem:[#allocation13 + $0x540] sm:$0xff]
    %v3004 = vld [vmem:[#allocation13 + $0x548] sm:$0xff]
    %v3005 = vld [vmem:[#allocation13 + $0x550] sm:$0xff]
    %v3006 = vld [vmem:[#allocation13 + $0x558] sm:$0xff]
    %v3007 = vld [vmem:[#allocation13 + $0x560] sm:$0xff]
    %v3008 = vld [vmem:[#allocation13 + $0x568] sm:$0xff]
    %v3009 = vld [vmem:[#allocation13 + $0x570] sm:$0xff]
    %v3010 = vld [vmem:[#allocation13 + $0x578] sm:$0xff]
    %v3011 = vld [vmem:[#allocation13 + $0x580] sm:$0xff]
    %v3012 = vld [vmem:[#allocation13 + $0x588] sm:$0xff]
    %v3013 = vld [vmem:[#allocation13 + $0x590] sm:$0xff]
    %v3014 = vld [vmem:[#allocation13 + $0x598] sm:$0xff]
    %v3015 = vld [vmem:[#allocation13 + $0x5a0] sm:$0xff]
    %v3016 = vld [vmem:[#allocation13 + $0x5a8] sm:$0xff]
    %v3017 = vld [vmem:[#allocation13 + $0x5b0] sm:$0xff]
    %v3018 = vld [vmem:[#allocation13 + $0x5b8] sm:$0xff]
    %v3019 = vld [vmem:[#allocation13 + $0x5c0] sm:$0xff]
    %v3020 = vld [vmem:[#allocation13 + $0x5c8] sm:$0xff]
    %v3021 = vld [vmem:[#allocation13 + $0x5d0] sm:$0xff]
    %v3022 = vld [vmem:[#allocation13 + $0x5d8] sm:$0xff]
    %v3023 = vld [vmem:[#allocation13 + $0x5e0] sm:$0xff]
    %v3024 = vld [vmem:[#allocation13 + $0x5e8] sm:$0xff]
    %v3025 = vld [vmem:[#allocation13 + $0x5f0] sm:$0xff]
    %v3026 = vld [vmem:[#allocation13 + $0x5f8] sm:$0xff]
    %v3027 = vld [vmem:[#allocation13 + $0x600] sm:$0xff]
    %v3028 = vld [vmem:[#allocation13 + $0x608] sm:$0xff]
    %v3029 = vld [vmem:[#allocation13 + $0x610] sm:$0xff]
    %v3030 = vld [vmem:[#allocation13 + $0x618] sm:$0xff]
    %v3031 = vld [vmem:[#allocation13 + $0x620] sm:$0xff]
    %v3032 = vld [vmem:[#allocation13 + $0x628] sm:$0xff]
    %v3033 = vld [vmem:[#allocation13 + $0x630] sm:$0xff]
    %v3034 = vld [vmem:[#allocation13 + $0x638] sm:$0xff]
    %v3035 = vld [vmem:[#allocation13 + $0x640] sm:$0xff]
    %v3036 = vld [vmem:[#allocation13 + $0x648] sm:$0xff]
    %v3037 = vld [vmem:[#allocation13 + $0x650] sm:$0xff]
    %v3038 = vld [vmem:[#allocation13 + $0x658] sm:$0xff]
    %v3039 = vld [vmem:[#allocation13 + $0x660] sm:$0xff]
    %v3040 = vld [vmem:[#allocation13 + $0x668] sm:$0xff]
    %v3041 = vld [vmem:[#allocation13 + $0x670] sm:$0xff]
    %v3042 = vld [vmem:[#allocation13 + $0x678] sm:$0xff]
    %v3043 = vld [vmem:[#allocation13 + $0x680] sm:$0xff]
    %v3044 = vld [vmem:[#allocation13 + $0x688] sm:$0xff]
    %v3045 = vld [vmem:[#allocation13 + $0x690] sm:$0xff]
    %v3046 = vld [vmem:[#allocation13 + $0x698] sm:$0xff]
    %v3047 = vld [vmem:[#allocation13 + $0x6a0] sm:$0xff]
    %v3048 = vld [vmem:[#allocation13 + $0x6a8] sm:$0xff]
    %v3049 = vld [vmem:[#allocation13 + $0x6b0] sm:$0xff]
    %v3050 = vld [vmem:[#allocation13 + $0x6b8] sm:$0xff]
    %v3051 = vld [vmem:[#allocation13 + $0x6c0] sm:$0xff]
    %v3052 = vld [vmem:[#allocation13 + $0x6c8] sm:$0xff]
    %v3053 = vld [vmem:[#allocation13 + $0x6d0] sm:$0xff]
    %v3054 = vld [vmem:[#allocation13 + $0x6d8] sm:$0xff]
    %v3055 = vld [vmem:[#allocation13 + $0x6e0] sm:$0xff]
    %v3056 = vld [vmem:[#allocation13 + $0x6e8] sm:$0xff]
    %v3057 = vld [vmem:[#allocation13 + $0x6f0] sm:$0xff]
    %v3058 = vld [vmem:[#allocation13 + $0x6f8] sm:$0xff]
    %v3059 = vld [vmem:[#allocation13 + $0x700] sm:$0xff]
    %v3060 = vld [vmem:[#allocation13 + $0x708] sm:$0xff]
    %v3061 = vld [vmem:[#allocation13 + $0x710] sm:$0xff]
    %v3062 = vld [vmem:[#allocation13 + $0x718] sm:$0xff]
    %v3063 = vld [vmem:[#allocation13 + $0x720] sm:$0xff]
    %v3064 = vld [vmem:[#allocation13 + $0x728] sm:$0xff]
    %v3065 = vld [vmem:[#allocation13 + $0x730] sm:$0xff]
    %v3066 = vld [vmem:[#allocation13 + $0x738] sm:$0xff]
    %v3067 = vld [vmem:[#allocation13 + $0x740] sm:$0xff]
    %v3068 = vld [vmem:[#allocation13 + $0x748] sm:$0xff]
    %v3069 = vld [vmem:[#allocation13 + $0x750] sm:$0xff]
    %v3070 = vld [vmem:[#allocation13 + $0x758] sm:$0xff]
    %v3071 = vld [vmem:[#allocation13 + $0x760] sm:$0xff]
    %v3072 = vld [vmem:[#allocation13 + $0x768] sm:$0xff]
    %v3073 = vld [vmem:[#allocation13 + $0x770] sm:$0xff]
    %v3074 = vld [vmem:[#allocation13 + $0x778] sm:$0xff]
    %v3075 = vld [vmem:[#allocation25] sm:$0x1f]
    %v3077 = vlaneseq
    %v3078 = vshrl.u32 %v3077, 7
    %v3079 = vsub.s32 0, %v3078
    %v3080 = vrot.slane %v3075, %v3079
    %v3081 = vlaneseq
    %v3082 = vshrl.u32 %v3081, 7
    %v3083 = vsub.s32 1, %v3082
    %v3084 = vrot.slane %v3075, %v3083
    %v3085 = vlaneseq
    %v3086 = vshrl.u32 %v3085, 7
    %v3087 = vsub.s32 2, %v3086
    %v3088 = vrot.slane %v3075, %v3087
    %v3089 = vlaneseq
    %v3090 = vshrl.u32 %v3089, 7
    %v3091 = vsub.s32 3, %v3090
    %v3092 = vrot.slane %v3075, %v3091
    %v3093 = vlaneseq
    %v3094 = vshrl.u32 %v3093, 7
    %v3095 = vsub.s32 4, %v3094
    %v3096 = vrot.slane %v3075, %v3095
    %3102 = vmatprep.subr.mxu0 %v2836
    %3103 = vmatpush1.msra.mxu0 %v2835
    %3104 = vmatprep.subr.mxu0 %v2841
    %3105 = vmatpush1.msra.mxu0 %v2840
    %3106 = vmatprep.subr.mxu0 %v2846
    %3107 = vmatpush1.msra.mxu0 %v2845
    %3108 = vmatprep.subr.mxu0 %v2851
    %3109 = vmatpush1.msra.mxu0 %v2850
    %3110 = vmatprep.subr.mxu0 %v2856
    %3111 = vmatpush1.msra.mxu0 %v2855
    %3112 = vmatprep.subr.mxu0 %v2861
    %3113 = vmatpush1.msra.mxu0 %v2860
    %3114 = vmatprep.subr.mxu0 %v2866
    %3115 = vmatpush1.msra.mxu0 %v2865
    %3116 = vmatprep.subr.mxu0 %v2871
    %3117 = vmatpush1.msra.mxu0 %v2870
    %3118 = vmatprep.subr.mxu0 %v2876
    %3119 = vmatpush1.msra.mxu0 %v2875
    %3120 = vmatprep.subr.mxu0 %v2881
    %3121 = vmatpush1.msra.mxu0 %v2880
    %3122 = vmatprep.subr.mxu0 %v2886
    %3123 = vmatpush1.msra.mxu0 %v2885
    %3124 = vmatprep.subr.mxu0 %v2891
    %3125 = vmatpush1.msra.mxu0 %v2890
    %3126 = vmatprep.subr.mxu0 %v2896
    %3127 = vmatpush1.msra.mxu0 %v2895
    %3128 = vmatprep.subr.mxu0 %v2901
    %3129 = vmatpush1.msra.mxu0 %v2900
    %3130 = vmatprep.subr.mxu0 %v2906
    %3131 = vmatpush1.msra.mxu0 %v2905
    %3132 = vmatprep.subr.mxu0 %v2911
    %3133 = vmatpush1.msra.mxu0 %v2910
    %3134 = vmatprep.subr.mxu0 %v2916
    %3135 = vmatpush1.msra.mxu0 %v2915
    %3136 = vmatprep.subr.mxu0 %v2921
    %3137 = vmatpush1.msra.mxu0 %v2920
    %3138 = vmatprep.subr.mxu0 %v2926
    %3139 = vmatpush1.msra.mxu0 %v2925
    %3140 = vmatprep.subr.mxu0 %v2931
    %3141 = vmatpush1.msra.mxu0 %v2930
    %3142 = vmatprep.subr.mxu0 %v2936
    %3143 = vmatpush1.msra.mxu0 %v2935
    %3144 = vmatprep.subr.mxu0 %v2941
    %3145 = vmatpush1.msra.mxu0 %v2940
    %3146 = vmatprep.subr.mxu0 %v2946
    %3147 = vmatpush1.msra.mxu0 %v2945
    %3148 = vmatprep.subr.mxu0 %v2951
    %3149 = vmatpush1.msra.mxu0 %v2950
    %3150 = vmatprep.subr.mxu0 %v2956
    %3151 = vmatpush1.msra.mxu0 %v2955
    %3152 = vmatprep.subr.mxu0 %v2961
    %3153 = vmatpush1.msra.mxu0 %v2960
    %3154 = vmatprep.subr.mxu0 %v2966
    %3155 = vmatpush1.msra.mxu0 %v2965
    %3156 = vmatprep.subr.mxu0 %v2971
    %3157 = vmatpush1.msra.mxu0 %v2970
    %3158 = vmatprep.subr.mxu0 %v2976
    %3159 = vmatpush1.msra.mxu0 %v2975
    %3160 = vmatprep.subr.mxu0 %v2981
    %3161 = vmatpush1.msra.mxu0 %v2980
    %3162 = vmatprep.subr.mxu0 %v2986
    %3163 = vmatpush1.msra.mxu0 %v2985
    %3164 = vmatprep.subr.mxu0 %v2991
    %3165 = vmatpush1.msra.mxu0 %v2990
    %3166 = vmatprep.mubr.f32.mxu0 %v2833
    %3167 = vmatmul.mubr.f32.gmra.mrb[0].mxu0 %v2832
    %v3168 = vpop.f32.mrb[0].mxu0
    %v3169 = vadd.f32 %v3080, %v3168
    %v3170 = vpop.f32.mrb[0].mxu0
    %v3171 = vadd.f32 %v3084, %v3170
    %3172 = vdwg.mxu0
    %3173 = vmatprep.subr.mxu0 %v2996
    %3174 = vmatpush1.msra.mxu0 %v2995
    %3175 = vmatprep.subr.mxu0 %v3001
    %3176 = vmatpush1.msra.mxu0 %v3000
    %3177 = vmatprep.subr.mxu0 %v3006
    %3178 = vmatpush1.msra.mxu0 %v3005
    %3179 = vmatprep.subr.mxu0 %v3011
    %3180 = vmatpush1.msra.mxu0 %v3010
    %3181 = vmatprep.subr.mxu0 %v3016
    %3182 = vmatpush1.msra.mxu0 %v3015
    %3183 = vmatprep.subr.mxu0 %v3021
    %3184 = vmatpush1.msra.mxu0 %v3020
    %3185 = vmatprep.subr.mxu0 %v3026
    %3186 = vmatpush1.msra.mxu0 %v3025
    %3187 = vmatprep.subr.mxu0 %v3031
    %3188 = vmatpush1.msra.mxu0 %v3030
    %3189 = vmatprep.subr.mxu0 %v3036
    %3190 = vmatpush1.msra.mxu0 %v3035
    %3191 = vmatprep.subr.mxu0 %v3041
    %3192 = vmatpush1.msra.mxu0 %v3040
    %3193 = vmatprep.subr.mxu0 %v3046
    %3194 = vmatpush1.msra.mxu0 %v3045
    %3195 = vmatprep.subr.mxu0 %v3051
    %3196 = vmatpush1.msra.mxu0 %v3050
    %3197 = vmatprep.subr.mxu0 %v3056
    %3198 = vmatpush1.msra.mxu0 %v3055
    %3199 = vmatprep.subr.mxu0 %v3061
    %3200 = vmatpush1.msra.mxu0 %v3060
    %3201 = vmatprep.subr.mxu0 %v3066
    %3202 = vmatpush1.msra.mxu0 %v3065
    %3203 = vmatprep.subr.mxu0 %v3071
    %3204 = vmatpush1.msra.mxu0 %v3070
    %3205 = vmatprep.subr.mxu0 0.0
    %3206 = vmatpush1.msra.mxu0 0.0
    %3207 = vmatprep.subr.mxu0 0.0
    %3208 = vmatpush1.msra.mxu0 0.0
    %3209 = vmatprep.subr.mxu0 0.0
    %3210 = vmatpush1.msra.mxu0 0.0
    %3211 = vmatprep.subr.mxu0 0.0
    %3212 = vmatpush1.msra.mxu0 0.0
    %3213 = vmatprep.subr.mxu0 0.0
    %3214 = vmatpush1.msra.mxu0 0.0
    %3215 = vmatprep.subr.mxu0 0.0
    %3216 = vmatpush1.msra.mxu0 0.0
    %3217 = vmatprep.subr.mxu0 0.0
    %3218 = vmatpush1.msra.mxu0 0.0
    %3219 = vmatprep.subr.mxu0 0.0
    %3220 = vmatpush1.msra.mxu0 0.0
    %3221 = vmatprep.subr.mxu0 0.0
    %3222 = vmatpush1.msra.mxu0 0.0
    %3223 = vmatprep.subr.mxu0 0.0
    %3224 = vmatpush1.msra.mxu0 0.0
    %3225 = vmatprep.subr.mxu0 0.0
    %3226 = vmatpush1.msra.mxu0 0.0
    %3227 = vmatprep.subr.mxu0 0.0
    %3228 = vmatpush1.msra.mxu0 0.0
    %3229 = vmatprep.subr.mxu0 0.0
    %3230 = vmatpush1.msra.mxu0 0.0
    %3231 = vmatprep.subr.mxu0 0.0
    %3232 = vmatpush1.msra.mxu0 0.0
    %3233 = vmatprep.subr.mxu0 0.0
    %3234 = vmatpush1.msra.mxu0 0.0
    %3235 = vmatprep.subr.mxu0 0.0
    %3236 = vmatpush1.msra.mxu0 0.0
    %3237 = vmatprep.mubr.f32.mxu0 0.0
    %3238 = vmatmul.mubr.f32.gmra.mrb[0].mxu0 %v2834
    %v3239 = vpop.f32.mrb[0].mxu0
    %v3240 = vadd.f32 %v3169, %v3239
    %v3241 = vpop.f32.mrb[0].mxu0
    %v3242 = vadd.f32 %v3171, %v3241
    %3243 = vdwg.mxu0
    %3244 = vmatprep.subr.mxu0 %v2838
    %3245 = vmatpush1.msra.mxu0 %v2837
    %3246 = vmatprep.subr.mxu0 %v2843
    %3247 = vmatpush1.msra.mxu0 %v2842
    %3248 = vmatprep.subr.mxu0 %v2848
    %3249 = vmatpush1.msra.mxu0 %v2847
    %3250 = vmatprep.subr.mxu0 %v2853
    %3251 = vmatpush1.msra.mxu0 %v2852
    %3252 = vmatprep.subr.mxu0 %v2858
    %3253 = vmatpush1.msra.mxu0 %v2857
    %3254 = vmatprep.subr.mxu0 %v2863
    %3255 = vmatpush1.msra.mxu0 %v2862
    %3256 = vmatprep.subr.mxu0 %v2868
    %3257 = vmatpush1.msra.mxu0 %v2867
    %3258 = vmatprep.subr.mxu0 %v2873
    %3259 = vmatpush1.msra.mxu0 %v2872
    %3260 = vmatprep.subr.mxu0 %v2878
    %3261 = vmatpush1.msra.mxu0 %v2877
    %3262 = vmatprep.subr.mxu0 %v2883
    %3263 = vmatpush1.msra.mxu0 %v2882
    %3264 = vmatprep.subr.mxu0 %v2888
    %3265 = vmatpush1.msra.mxu0 %v2887
    %3266 = vmatprep.subr.mxu0 %v2893
    %3267 = vmatpush1.msra.mxu0 %v2892
    %3268 = vmatprep.subr.mxu0 %v2898
    %3269 = vmatpush1.msra.mxu0 %v2897
    %3270 = vmatprep.subr.mxu0 %v2903
    %3271 = vmatpush1.msra.mxu0 %v2902
    %3272 = vmatprep.subr.mxu0 %v2908
    %3273 = vmatpush1.msra.mxu0 %v2907
    %3274 = vmatprep.subr.mxu0 %v2913
    %3275 = vmatpush1.msra.mxu0 %v2912
    %3276 = vmatprep.subr.mxu0 %v2918
    %3277 = vmatpush1.msra.mxu0 %v2917
    %3278 = vmatprep.subr.mxu0 %v2923
    %3279 = vmatpush1.msra.mxu0 %v2922
    %3280 = vmatprep.subr.mxu0 %v2928
    %3281 = vmatpush1.msra.mxu0 %v2927
    %3282 = vmatprep.subr.mxu0 %v2933
    %3283 = vmatpush1.msra.mxu0 %v2932
    %3284 = vmatprep.subr.mxu0 %v2938
    %3285 = vmatpush1.msra.mxu0 %v2937
    %3286 = vmatprep.subr.mxu0 %v2943
    %3287 = vmatpush1.msra.mxu0 %v2942
    %3288 = vmatprep.subr.mxu0 %v2948
    %3289 = vmatpush1.msra.mxu0 %v2947
    %3290 = vmatprep.subr.mxu0 %v2953
    %3291 = vmatpush1.msra.mxu0 %v2952
    %3292 = vmatprep.subr.mxu0 %v2958
    %3293 = vmatpush1.msra.mxu0 %v2957
    %3294 = vmatprep.subr.mxu0 %v2963
    %3295 = vmatpush1.msra.mxu0 %v2962
    %3296 = vmatprep.subr.mxu0 %v2968
    %3297 = vmatpush1.msra.mxu0 %v2967
    %3298 = vmatprep.subr.mxu0 %v2973
    %3299 = vmatpush1.msra.mxu0 %v2972
    %3300 = vmatprep.subr.mxu0 %v2978
    %3301 = vmatpush1.msra.mxu0 %v2977
    %3302 = vmatprep.subr.mxu0 %v2983
    %3303 = vmatpush1.msra.mxu0 %v2982
    %3304 = vmatprep.subr.mxu0 %v2988
    %3305 = vmatpush1.msra.mxu0 %v2987
    %3306 = vmatprep.subr.mxu0 %v2993
    %3307 = vmatpush1.msra.mxu0 %v2992
    %3308 = vmatprep.mubr.f32.mxu0 %v2833
    %3309 = vmatmul.mubr.f32.gmra.mrb[0].mxu0 %v2832
    %v3310 = vpop.f32.mrb[0].mxu0
    %v3311 = vadd.f32 %v3088, %v3310
    %v3312 = vpop.f32.mrb[0].mxu0
    %v3313 = vadd.f32 %v3092, %v3312
    %3314 = vdwg.mxu0
    %3315 = vmatprep.subr.mxu0 %v2998
    %3316 = vmatpush1.msra.mxu0 %v2997
    %3317 = vmatprep.subr.mxu0 %v3003
    %3318 = vmatpush1.msra.mxu0 %v3002
    %3319 = vmatprep.subr.mxu0 %v3008
    %3320 = vmatpush1.msra.mxu0 %v3007
    %3321 = vmatprep.subr.mxu0 %v3013
    %3322 = vmatpush1.msra.mxu0 %v3012
    %3323 = vmatprep.subr.mxu0 %v3018
    %3324 = vmatpush1.msra.mxu0 %v3017
    %3325 = vmatprep.subr.mxu0 %v3023
    %3326 = vmatpush1.msra.mxu0 %v3022
    %3327 = vmatprep.subr.mxu0 %v3028
    %3328 = vmatpush1.msra.mxu0 %v3027
    %3329 = vmatprep.subr.mxu0 %v3033
    %3330 = vmatpush1.msra.mxu0 %v3032
    %3331 = vmatprep.subr.mxu0 %v3038
    %3332 = vmatpush1.msra.mxu0 %v3037
    %3333 = vmatprep.subr.mxu0 %v3043
    %3334 = vmatpush1.msra.mxu0 %v3042
    %3335 = vmatprep.subr.mxu0 %v3048
    %3336 = vmatpush1.msra.mxu0 %v3047
    %3337 = vmatprep.subr.mxu0 %v3053
    %3338 = vmatpush1.msra.mxu0 %v3052
    %3339 = vmatprep.subr.mxu0 %v3058
    %3340 = vmatpush1.msra.mxu0 %v3057
    %3341 = vmatprep.subr.mxu0 %v3063
    %3342 = vmatpush1.msra.mxu0 %v3062
    %3343 = vmatprep.subr.mxu0 %v3068
    %3344 = vmatpush1.msra.mxu0 %v3067
    %3345 = vmatprep.subr.mxu0 %v3073
    %3346 = vmatpush1.msra.mxu0 %v3072
    %3347 = vmatprep.subr.mxu0 0.0
    %3348 = vmatpush1.msra.mxu0 0.0
    %3349 = vmatprep.subr.mxu0 0.0
    %3350 = vmatpush1.msra.mxu0 0.0
    %3351 = vmatprep.subr.mxu0 0.0
    %3352 = vmatpush1.msra.mxu0 0.0
    %3353 = vmatprep.subr.mxu0 0.0
    %3354 = vmatpush1.msra.mxu0 0.0
    %3355 = vmatprep.subr.mxu0 0.0
    %3356 = vmatpush1.msra.mxu0 0.0
    %3357 = vmatprep.subr.mxu0 0.0
    %3358 = vmatpush1.msra.mxu0 0.0
    %3359 = vmatprep.subr.mxu0 0.0
    %3360 = vmatpush1.msra.mxu0 0.0
    %3361 = vmatprep.subr.mxu0 0.0
    %3362 = vmatpush1.msra.mxu0 0.0
    %3363 = vmatprep.subr.mxu0 0.0
    %3364 = vmatpush1.msra.mxu0 0.0
    %3365 = vmatprep.subr.mxu0 0.0
    %3366 = vmatpush1.msra.mxu0 0.0
    %3367 = vmatprep.subr.mxu0 0.0
    %3368 = vmatpush1.msra.mxu0 0.0
    %3369 = vmatprep.subr.mxu0 0.0
    %3370 = vmatpush1.msra.mxu0 0.0
    %3371 = vmatprep.subr.mxu0 0.0
    %3372 = vmatpush1.msra.mxu0 0.0
    %3373 = vmatprep.subr.mxu0 0.0
    %3374 = vmatpush1.msra.mxu0 0.0
    %3375 = vmatprep.subr.mxu0 0.0
    %3376 = vmatpush1.msra.mxu0 0.0
    %3377 = vmatprep.subr.mxu0 0.0
    %3378 = vmatpush1.msra.mxu0 0.0
    %3379 = vmatprep.mubr.f32.mxu0 0.0
    %3380 = vmatmul.mubr.f32.gmra.mrb[0].mxu0 %v2834
    %v3381 = vpop.f32.mrb[0].mxu0
    %v3382 = vadd.f32 %v3311, %v3381
    %v3383 = vpop.f32.mrb[0].mxu0
    %v3384 = vadd.f32 %v3313, %v3383
    %3385 = vdwg.mxu0
    %3386 = vmatprep.subr.mxu0 0.0
    %3387 = vmatpush1.msra.mxu0 %v2839
    %3388 = vmatprep.subr.mxu0 0.0
    %3389 = vmatpush1.msra.mxu0 %v2844
    %3390 = vmatprep.subr.mxu0 0.0
    %3391 = vmatpush1.msra.mxu0 %v2849
    %3392 = vmatprep.subr.mxu0 0.0
    %3393 = vmatpush1.msra.mxu0 %v2854
    %3394 = vmatprep.subr.mxu0 0.0
    %3395 = vmatpush1.msra.mxu0 %v2859
    %3396 = vmatprep.subr.mxu0 0.0
    %3397 = vmatpush1.msra.mxu0 %v2864
    %3398 = vmatprep.subr.mxu0 0.0
    %3399 = vmatpush1.msra.mxu0 %v2869
    %3400 = vmatprep.subr.mxu0 0.0
    %3401 = vmatpush1.msra.mxu0 %v2874
    %3402 = vmatprep.subr.mxu0 0.0
    %3403 = vmatpush1.msra.mxu0 %v2879
    %3404 = vmatprep.subr.mxu0 0.0
    %3405 = vmatpush1.msra.mxu0 %v2884
    %3406 = vmatprep.subr.mxu0 0.0
    %3407 = vmatpush1.msra.mxu0 %v2889
    %3408 = vmatprep.subr.mxu0 0.0
    %3409 = vmatpush1.msra.mxu0 %v2894
    %3410 = vmatprep.subr.mxu0 0.0
    %3411 = vmatpush1.msra.mxu0 %v2899
    %3412 = vmatprep.subr.mxu0 0.0
    %3413 = vmatpush1.msra.mxu0 %v2904
    %3414 = vmatprep.subr.mxu0 0.0
    %3415 = vmatpush1.msra.mxu0 %v2909
    %3416 = vmatprep.subr.mxu0 0.0
    %3417 = vmatpush1.msra.mxu0 %v2914
    %3418 = vmatprep.subr.mxu0 0.0
    %3419 = vmatpush1.msra.mxu0 %v2919
    %3420 = vmatprep.subr.mxu0 0.0
    %3421 = vmatpush1.msra.mxu0 %v2924
    %3422 = vmatprep.subr.mxu0 0.0
    %3423 = vmatpush1.msra.mxu0 %v2929
    %3424 = vmatprep.subr.mxu0 0.0
    %3425 = vmatpush1.msra.mxu0 %v2934
    %3426 = vmatprep.subr.mxu0 0.0
    %3427 = vmatpush1.msra.mxu0 %v2939
    %3428 = vmatprep.subr.mxu0 0.0
    %3429 = vmatpush1.msra.mxu0 %v2944
    %3430 = vmatprep.subr.mxu0 0.0
    %3431 = vmatpush1.msra.mxu0 %v2949
    %3432 = vmatprep.subr.mxu0 0.0
    %3433 = vmatpush1.msra.mxu0 %v2954
    %3434 = vmatprep.subr.mxu0 0.0
    %3435 = vmatpush1.msra.mxu0 %v2959
    %3436 = vmatprep.subr.mxu0 0.0
    %3437 = vmatpush1.msra.mxu0 %v2964
    %3438 = vmatprep.subr.mxu0 0.0
    %3439 = vmatpush1.msra.mxu0 %v2969
    %3440 = vmatprep.subr.mxu0 0.0
    %3441 = vmatpush1.msra.mxu0 %v2974
    %3442 = vmatprep.subr.mxu0 0.0
    %3443 = vmatpush1.msra.mxu0 %v2979
    %3444 = vmatprep.subr.mxu0 0.0
    %3445 = vmatpush1.msra.mxu0 %v2984
    %3446 = vmatprep.subr.mxu0 0.0
    %3447 = vmatpush1.msra.mxu0 %v2989
    %3448 = vmatprep.subr.mxu0 0.0
    %3449 = vmatpush1.msra.mxu0 %v2994
    %3450 = vmatprep.mubr.f32.mxu0 %v2833
    %3451 = vmatmul.mubr.f32.gmra.mrb[0].mxu0 %v2832
    %v3452 = vpop.f32.mrb[0].mxu0
    %v3453 = vadd.f32 %v3096, %v3452
    %v3454 = vpop.f32.mrb[0].mxu0
    %3455 = vdwg.mxu0
    %3456 = vmatprep.subr.mxu0 0.0
    %3457 = vmatpush1.msra.mxu0 %v2999
    %3458 = vmatprep.subr.mxu0 0.0
    %3459 = vmatpush1.msra.mxu0 %v3004
    %3460 = vmatprep.subr.mxu0 0.0
    %3461 = vmatpush1.msra.mxu0 %v3009
    %3462 = vmatprep.subr.mxu0 0.0
    %3463 = vmatpush1.msra.mxu0 %v3014
    %3464 = vmatprep.subr.mxu0 0.0
    %3465 = vmatpush1.msra.mxu0 %v3019
    %3466 = vmatprep.subr.mxu0 0.0
    %3467 = vmatpush1.msra.mxu0 %v3024
    %3468 = vmatprep.subr.mxu0 0.0
    %3469 = vmatpush1.msra.mxu0 %v3029
    %3470 = vmatprep.subr.mxu0 0.0
    %3471 = vmatpush1.msra.mxu0 %v3034
    %3472 = vmatprep.subr.mxu0 0.0
    %3473 = vmatpush1.msra.mxu0 %v3039
    %3474 = vmatprep.subr.mxu0 0.0
    %3475 = vmatpush1.msra.mxu0 %v3044
    %3476 = vmatprep.subr.mxu0 0.0
    %3477 = vmatpush1.msra.mxu0 %v3049
    %3478 = vmatprep.subr.mxu0 0.0
    %3479 = vmatpush1.msra.mxu0 %v3054
    %3480 = vmatprep.subr.mxu0 0.0
    %3481 = vmatpush1.msra.mxu0 %v3059
    %3482 = vmatprep.subr.mxu0 0.0
    %3483 = vmatpush1.msra.mxu0 %v3064
    %3484 = vmatprep.subr.mxu0 0.0
    %3485 = vmatpush1.msra.mxu0 %v3069
    %3486 = vmatprep.subr.mxu0 0.0
    %3487 = vmatpush1.msra.mxu0 %v3074
    %3488 = vmatprep.subr.mxu0 0.0
    %3489 = vmatpush1.msra.mxu0 0.0
    %3490 = vmatprep.subr.mxu0 0.0
    %3491 = vmatpush1.msra.mxu0 0.0
    %3492 = vmatprep.subr.mxu0 0.0
    %3493 = vmatpush1.msra.mxu0 0.0
    %3494 = vmatprep.subr.mxu0 0.0
    %3495 = vmatpush1.msra.mxu0 0.0
    %3496 = vmatprep.subr.mxu0 0.0
    %3497 = vmatpush1.msra.mxu0 0.0
    %3498 = vmatprep.subr.mxu0 0.0
    %3499 = vmatpush1.msra.mxu0 0.0
    %3500 = vmatprep.subr.mxu0 0.0
    %3501 = vmatpush1.msra.mxu0 0.0
    %3502 = vmatprep.subr.mxu0 0.0
    %3503 = vmatpush1.msra.mxu0 0.0
    %3504 = vmatprep.subr.mxu0 0.0
    %3505 = vmatpush1.msra.mxu0 0.0
    %3506 = vmatprep.subr.mxu0 0.0
    %3507 = vmatpush1.msra.mxu0 0.0
    %3508 = vmatprep.subr.mxu0 0.0
    %3509 = vmatpush1.msra.mxu0 0.0
    %3510 = vmatprep.subr.mxu0 0.0
    %3511 = vmatpush1.msra.mxu0 0.0
    %3512 = vmatprep.subr.mxu0 0.0
    %3513 = vmatpush1.msra.mxu0 0.0
    %3514 = vmatprep.subr.mxu0 0.0
    %3515 = vmatpush1.msra.mxu0 0.0
    %3516 = vmatprep.subr.mxu0 0.0
    %3517 = vmatpush1.msra.mxu0 0.0
    %3518 = vmatprep.subr.mxu0 0.0
    %3519 = vmatpush1.msra.mxu0 0.0
    %3520 = vmatprep.mubr.f32.mxu0 0.0
    %3521 = vmatmul.mubr.f32.gmra.mrb[0].mxu0 %v2834
    %v3522 = vpop.f32.mrb[0].mxu0
    %v3523 = vadd.f32 %v3453, %v3522
    %v3524 = vpop.f32.mrb[0].mxu0
    %3525 = vdwg.mxu0
    %v3526 = vmax.f32 %v3240, 0.0
    %v3527 = vmax.f32 %v3242, 0.0
    %v3528 = vmax.f32 %v3382, 0.0
    %v3529 = vmax.f32 %v3384, 0.0
    %v3530 = vmax.f32 %v3523, 0.0
    %v3531 = vld [vmem:[#allocation14] sm:$0xff]
    %v3532 = vld [vmem:[#allocation14 + $0x8] sm:$0xff]
    %v3533 = vld [vmem:[#allocation14 + $0x10] sm:$0xff]
    %v3534 = vld [vmem:[#allocation14 + $0x18] sm:$0xff]
    %v3535 = vld [vmem:[#allocation14 + $0x20] sm:$0xff]
    %v3536 = vld [vmem:[#allocation14 + $0x28] sm:$0xff]
    %v3537 = vld [vmem:[#allocation14 + $0x30] sm:$0xff]
    %v3538 = vld [vmem:[#allocation14 + $0x38] sm:$0xff]
    %v3539 = vld [vmem:[#allocation14 + $0x40] sm:$0xff]
    %v3540 = vld [vmem:[#allocation14 + $0x48] sm:$0xff]
    %v3541 = vld [vmem:[#allocation14 + $0x50] sm:$0xff]
    %v3542 = vld [vmem:[#allocation14 + $0x58] sm:$0xff]
    %v3543 = vld [vmem:[#allocation14 + $0x60] sm:$0xff]
    %v3544 = vld [vmem:[#allocation14 + $0x68] sm:$0xff]
    %v3545 = vld [vmem:[#allocation14 + $0x70] sm:$0xff]
    %v3546 = vld [vmem:[#allocation14 + $0x78] sm:$0xff]
    %v3547 = vld [vmem:[#allocation14 + $0x80] sm:$0xff]
    %v3548 = vld [vmem:[#allocation14 + $0x88] sm:$0xff]
    %v3549 = vld [vmem:[#allocation14 + $0x90] sm:$0xff]
    %v3550 = vld [vmem:[#allocation14 + $0x98] sm:$0xff]
    %v3551 = vld [vmem:[#allocation14 + $0xa0] sm:$0xff]
    %v3552 = vld [vmem:[#allocation14 + $0xa8] sm:$0xff]
    %v3553 = vld [vmem:[#allocation14 + $0xb0] sm:$0xff]
    %v3554 = vld [vmem:[#allocation14 + $0xb8] sm:$0xff]
    %v3555 = vld [vmem:[#allocation14 + $0xc0] sm:$0xff]
    %v3556 = vld [vmem:[#allocation14 + $0xc8] sm:$0xff]
    %v3557 = vld [vmem:[#allocation14 + $0xd0] sm:$0xff]
    %v3558 = vld [vmem:[#allocation14 + $0xd8] sm:$0xff]
    %v3559 = vld [vmem:[#allocation14 + $0xe0] sm:$0xff]
    %v3560 = vld [vmem:[#allocation14 + $0xe8] sm:$0xff]
    %v3561 = vld [vmem:[#allocation14 + $0xf0] sm:$0xff]
    %v3562 = vld [vmem:[#allocation14 + $0xf8] sm:$0xff]
    %v3563 = vld [vmem:[#allocation14 + $0x100] sm:$0xff]
    %v3564 = vld [vmem:[#allocation14 + $0x108] sm:$0xff]
    %v3565 = vld [vmem:[#allocation14 + $0x110] sm:$0xff]
    %v3566 = vld [vmem:[#allocation14 + $0x118] sm:$0xff]
    %v3567 = vld [vmem:[#allocation14 + $0x120] sm:$0xff]
    %v3568 = vld [vmem:[#allocation14 + $0x128] sm:$0xff]
    %v3569 = vld [vmem:[#allocation14 + $0x130] sm:$0xff]
    %v3570 = vld [vmem:[#allocation14 + $0x138] sm:$0xff]
    %v3571 = vld [vmem:[#allocation14 + $0x140] sm:$0xff]
    %v3572 = vld [vmem:[#allocation14 + $0x148] sm:$0xff]
    %v3573 = vld [vmem:[#allocation14 + $0x150] sm:$0xff]
    %v3574 = vld [vmem:[#allocation14 + $0x158] sm:$0xff]
    %v3575 = vld [vmem:[#allocation14 + $0x160] sm:$0xff]
    %v3576 = vld [vmem:[#allocation14 + $0x168] sm:$0xff]
    %v3577 = vld [vmem:[#allocation14 + $0x170] sm:$0xff]
    %v3578 = vld [vmem:[#allocation14 + $0x178] sm:$0xff]
    %v3579 = vld [vmem:[#allocation14 + $0x180] sm:$0xff]
    %v3580 = vld [vmem:[#allocation14 + $0x188] sm:$0xff]
    %v3581 = vld [vmem:[#allocation14 + $0x190] sm:$0xff]
    %v3582 = vld [vmem:[#allocation14 + $0x198] sm:$0xff]
    %v3583 = vld [vmem:[#allocation14 + $0x1a0] sm:$0xff]
    %v3584 = vld [vmem:[#allocation14 + $0x1a8] sm:$0xff]
    %v3585 = vld [vmem:[#allocation14 + $0x1b0] sm:$0xff]
    %v3586 = vld [vmem:[#allocation14 + $0x1b8] sm:$0xff]
    %v3587 = vld [vmem:[#allocation14 + $0x1c0] sm:$0xff]
    %v3588 = vld [vmem:[#allocation14 + $0x1c8] sm:$0xff]
    %v3589 = vld [vmem:[#allocation14 + $0x1d0] sm:$0xff]
    %v3590 = vld [vmem:[#allocation14 + $0x1d8] sm:$0xff]
    %v3591 = vld [vmem:[#allocation14 + $0x1e0] sm:$0xff]
    %v3592 = vld [vmem:[#allocation14 + $0x1e8] sm:$0xff]
    %v3593 = vld [vmem:[#allocation14 + $0x1f0] sm:$0xff]
    %v3594 = vld [vmem:[#allocation14 + $0x1f8] sm:$0xff]
    %v3595 = vld [vmem:[#allocation14 + $0x200] sm:$0xff]
    %v3596 = vld [vmem:[#allocation14 + $0x208] sm:$0xff]
    %v3597 = vld [vmem:[#allocation14 + $0x210] sm:$0xff]
    %v3598 = vld [vmem:[#allocation14 + $0x218] sm:$0xff]
    %v3599 = vld [vmem:[#allocation14 + $0x220] sm:$0xff]
    %v3600 = vld [vmem:[#allocation14 + $0x228] sm:$0xff]
    %v3601 = vld [vmem:[#allocation14 + $0x230] sm:$0xff]
    %v3602 = vld [vmem:[#allocation14 + $0x238] sm:$0xff]
    %v3603 = vld [vmem:[#allocation14 + $0x240] sm:$0xff]
    %v3604 = vld [vmem:[#allocation14 + $0x248] sm:$0xff]
    %v3605 = vld [vmem:[#allocation14 + $0x250] sm:$0xff]
    %v3606 = vld [vmem:[#allocation14 + $0x258] sm:$0xff]
    %v3607 = vld [vmem:[#allocation14 + $0x260] sm:$0xff]
    %v3608 = vld [vmem:[#allocation14 + $0x268] sm:$0xff]
    %v3609 = vld [vmem:[#allocation14 + $0x270] sm:$0xff]
    %v3610 = vld [vmem:[#allocation14 + $0x278] sm:$0xff]
    %v3611 = vld [vmem:[#allocation14 + $0x280] sm:$0xff]
    %v3612 = vld [vmem:[#allocation14 + $0x288] sm:$0xff]
    %v3613 = vld [vmem:[#allocation14 + $0x290] sm:$0xff]
    %v3614 = vld [vmem:[#allocation14 + $0x298] sm:$0xff]
    %v3615 = vld [vmem:[#allocation14 + $0x2a0] sm:$0xff]
    %v3616 = vld [vmem:[#allocation14 + $0x2a8] sm:$0xff]
    %v3617 = vld [vmem:[#allocation14 + $0x2b0] sm:$0xff]
    %v3618 = vld [vmem:[#allocation14 + $0x2b8] sm:$0xff]
    %v3619 = vld [vmem:[#allocation14 + $0x2c0] sm:$0xff]
    %v3620 = vld [vmem:[#allocation14 + $0x2c8] sm:$0xff]
    %v3621 = vld [vmem:[#allocation14 + $0x2d0] sm:$0xff]
    %v3622 = vld [vmem:[#allocation14 + $0x2d8] sm:$0xff]
    %v3623 = vld [vmem:[#allocation14 + $0x2e0] sm:$0xff]
    %v3624 = vld [vmem:[#allocation14 + $0x2e8] sm:$0xff]
    %v3625 = vld [vmem:[#allocation14 + $0x2f0] sm:$0xff]
    %v3626 = vld [vmem:[#allocation14 + $0x2f8] sm:$0xff]
    %v3627 = vld [vmem:[#allocation14 + $0x300] sm:$0xff]
    %v3628 = vld [vmem:[#allocation14 + $0x308] sm:$0xff]
    %v3629 = vld [vmem:[#allocation14 + $0x310] sm:$0xff]
    %v3630 = vld [vmem:[#allocation14 + $0x318] sm:$0xff]
    %v3631 = vld [vmem:[#allocation14 + $0x320] sm:$0xff]
    %v3632 = vld [vmem:[#allocation14 + $0x328] sm:$0xff]
    %v3633 = vld [vmem:[#allocation14 + $0x330] sm:$0xff]
    %v3634 = vld [vmem:[#allocation14 + $0x338] sm:$0xff]
    %v3635 = vld [vmem:[#allocation14 + $0x340] sm:$0xff]
    %v3636 = vld [vmem:[#allocation14 + $0x348] sm:$0xff]
    %v3637 = vld [vmem:[#allocation14 + $0x350] sm:$0xff]
    %v3638 = vld [vmem:[#allocation14 + $0x358] sm:$0xff]
    %v3639 = vld [vmem:[#allocation14 + $0x360] sm:$0xff]
    %v3640 = vld [vmem:[#allocation14 + $0x368] sm:$0xff]
    %v3641 = vld [vmem:[#allocation14 + $0x370] sm:$0xff]
    %v3642 = vld [vmem:[#allocation14 + $0x378] sm:$0xff]
    %v3643 = vld [vmem:[#allocation14 + $0x380] sm:$0xff]
    %v3644 = vld [vmem:[#allocation14 + $0x388] sm:$0xff]
    %v3645 = vld [vmem:[#allocation14 + $0x390] sm:$0xff]
    %v3646 = vld [vmem:[#allocation14 + $0x398] sm:$0xff]
    %v3647 = vld [vmem:[#allocation14 + $0x3a0] sm:$0xff]
    %v3648 = vld [vmem:[#allocation14 + $0x3a8] sm:$0xff]
    %v3649 = vld [vmem:[#allocation14 + $0x3b0] sm:$0xff]
    %v3650 = vld [vmem:[#allocation14 + $0x3b8] sm:$0xff]
    %v3651 = vld [vmem:[#allocation14 + $0x3c0] sm:$0xff]
    %v3652 = vld [vmem:[#allocation14 + $0x3c8] sm:$0xff]
    %v3653 = vld [vmem:[#allocation14 + $0x3d0] sm:$0xff]
    %v3654 = vld [vmem:[#allocation14 + $0x3d8] sm:$0xff]
    %v3655 = vld [vmem:[#allocation14 + $0x3e0] sm:$0xff]
    %v3656 = vld [vmem:[#allocation14 + $0x3e8] sm:$0xff]
    %v3657 = vld [vmem:[#allocation14 + $0x3f0] sm:$0xff]
    %v3658 = vld [vmem:[#allocation14 + $0x3f8] sm:$0xff]
    %v3659 = vld [vmem:[#allocation14 + $0x400] sm:$0xff]
    %v3660 = vld [vmem:[#allocation14 + $0x408] sm:$0xff]
    %v3661 = vld [vmem:[#allocation14 + $0x410] sm:$0xff]
    %v3662 = vld [vmem:[#allocation14 + $0x418] sm:$0xff]
    %v3663 = vld [vmem:[#allocation14 + $0x420] sm:$0xff]
    %v3664 = vld [vmem:[#allocation14 + $0x428] sm:$0xff]
    %v3665 = vld [vmem:[#allocation14 + $0x430] sm:$0xff]
    %v3666 = vld [vmem:[#allocation14 + $0x438] sm:$0xff]
    %v3667 = vld [vmem:[#allocation14 + $0x440] sm:$0xff]
    %v3668 = vld [vmem:[#allocation14 + $0x448] sm:$0xff]
    %v3669 = vld [vmem:[#allocation14 + $0x450] sm:$0xff]
    %v3670 = vld [vmem:[#allocation14 + $0x458] sm:$0xff]
    %v3671 = vld [vmem:[#allocation14 + $0x460] sm:$0xff]
    %v3672 = vld [vmem:[#allocation14 + $0x468] sm:$0xff]
    %v3673 = vld [vmem:[#allocation14 + $0x470] sm:$0xff]
    %v3674 = vld [vmem:[#allocation14 + $0x478] sm:$0xff]
    %v3675 = vld [vmem:[#allocation14 + $0x480] sm:$0xff]
    %v3676 = vld [vmem:[#allocation14 + $0x488] sm:$0xff]
    %v3677 = vld [vmem:[#allocation14 + $0x490] sm:$0xff]
    %v3678 = vld [vmem:[#allocation14 + $0x498] sm:$0xff]
    %v3679 = vld [vmem:[#allocation14 + $0x4a0] sm:$0xff]
    %v3680 = vld [vmem:[#allocation14 + $0x4a8] sm:$0xff]
    %v3681 = vld [vmem:[#allocation14 + $0x4b0] sm:$0xff]
    %v3682 = vld [vmem:[#allocation14 + $0x4b8] sm:$0xff]
    %v3683 = vld [vmem:[#allocation14 + $0x4c0] sm:$0xff]
    %v3684 = vld [vmem:[#allocation14 + $0x4c8] sm:$0xff]
    %v3685 = vld [vmem:[#allocation14 + $0x4d0] sm:$0xff]
    %v3686 = vld [vmem:[#allocation14 + $0x4d8] sm:$0xff]
    %v3687 = vld [vmem:[#allocation14 + $0x4e0] sm:$0xff]
    %v3688 = vld [vmem:[#allocation14 + $0x4e8] sm:$0xff]
    %v3689 = vld [vmem:[#allocation14 + $0x4f0] sm:$0xff]
    %v3690 = vld [vmem:[#allocation14 + $0x4f8] sm:$0xff]
    %v3691 = vld [vmem:[#allocation14 + $0x500] sm:$0xff]
    %v3692 = vld [vmem:[#allocation14 + $0x508] sm:$0xff]
    %v3693 = vld [vmem:[#allocation14 + $0x510] sm:$0xff]
    %v3694 = vld [vmem:[#allocation14 + $0x518] sm:$0xff]
    %v3695 = vld [vmem:[#allocation14 + $0x520] sm:$0xff]
    %v3696 = vld [vmem:[#allocation14 + $0x528] sm:$0xff]
    %v3697 = vld [vmem:[#allocation14 + $0x530] sm:$0xff]
    %v3698 = vld [vmem:[#allocation14 + $0x538] sm:$0xff]
    %v3699 = vld [vmem:[#allocation14 + $0x540] sm:$0xff]
    %v3700 = vld [vmem:[#allocation14 + $0x548] sm:$0xff]
    %v3701 = vld [vmem:[#allocation14 + $0x550] sm:$0xff]
    %v3702 = vld [vmem:[#allocation14 + $0x558] sm:$0xff]
    %v3703 = vld [vmem:[#allocation14 + $0x560] sm:$0xff]
    %v3704 = vld [vmem:[#allocation14 + $0x568] sm:$0xff]
    %v3705 = vld [vmem:[#allocation14 + $0x570] sm:$0xff]
    %v3706 = vld [vmem:[#allocation14 + $0x578] sm:$0xff]
    %v3707 = vld [vmem:[#allocation14 + $0x580] sm:$0xff]
    %v3708 = vld [vmem:[#allocation14 + $0x588] sm:$0xff]
    %v3709 = vld [vmem:[#allocation14 + $0x590] sm:$0xff]
    %v3710 = vld [vmem:[#allocation14 + $0x598] sm:$0xff]
    %v3711 = vld [vmem:[#allocation14 + $0x5a0] sm:$0xff]
    %v3712 = vld [vmem:[#allocation14 + $0x5a8] sm:$0xff]
    %v3713 = vld [vmem:[#allocation14 + $0x5b0] sm:$0xff]
    %v3714 = vld [vmem:[#allocation14 + $0x5b8] sm:$0xff]
    %v3715 = vld [vmem:[#allocation14 + $0x5c0] sm:$0xff]
    %v3716 = vld [vmem:[#allocation14 + $0x5c8] sm:$0xff]
    %v3717 = vld [vmem:[#allocation14 + $0x5d0] sm:$0xff]
    %v3718 = vld [vmem:[#allocation14 + $0x5d8] sm:$0xff]
    %v3719 = vld [vmem:[#allocation14 + $0x5e0] sm:$0xff]
    %v3720 = vld [vmem:[#allocation14 + $0x5e8] sm:$0xff]
    %v3721 = vld [vmem:[#allocation14 + $0x5f0] sm:$0xff]
    %v3722 = vld [vmem:[#allocation14 + $0x5f8] sm:$0xff]
    %v3723 = vld [vmem:[#allocation14 + $0x600] sm:$0xff]
    %v3724 = vld [vmem:[#allocation14 + $0x608] sm:$0xff]
    %v3725 = vld [vmem:[#allocation14 + $0x610] sm:$0xff]
    %v3726 = vld [vmem:[#allocation14 + $0x618] sm:$0xff]
    %v3727 = vld [vmem:[#allocation14 + $0x620] sm:$0xff]
    %v3728 = vld [vmem:[#allocation14 + $0x628] sm:$0xff]
    %v3729 = vld [vmem:[#allocation14 + $0x630] sm:$0xff]
    %v3730 = vld [vmem:[#allocation14 + $0x638] sm:$0xff]
    %v3731 = vld [vmem:[#allocation14 + $0x640] sm:$0xff]
    %v3732 = vld [vmem:[#allocation14 + $0x648] sm:$0xff]
    %v3733 = vld [vmem:[#allocation14 + $0x650] sm:$0xff]
    %v3734 = vld [vmem:[#allocation14 + $0x658] sm:$0xff]
    %v3735 = vld [vmem:[#allocation14 + $0x660] sm:$0xff]
    %v3736 = vld [vmem:[#allocation14 + $0x668] sm:$0xff]
    %v3737 = vld [vmem:[#allocation14 + $0x670] sm:$0xff]
    %v3738 = vld [vmem:[#allocation14 + $0x678] sm:$0xff]
    %v3739 = vld [vmem:[#allocation14 + $0x680] sm:$0xff]
    %v3740 = vld [vmem:[#allocation14 + $0x688] sm:$0xff]
    %v3741 = vld [vmem:[#allocation14 + $0x690] sm:$0xff]
    %v3742 = vld [vmem:[#allocation14 + $0x698] sm:$0xff]
    %v3743 = vld [vmem:[#allocation14 + $0x6a0] sm:$0xff]
    %v3744 = vld [vmem:[#allocation14 + $0x6a8] sm:$0xff]
    %v3745 = vld [vmem:[#allocation14 + $0x6b0] sm:$0xff]
    %v3746 = vld [vmem:[#allocation14 + $0x6b8] sm:$0xff]
    %v3747 = vld [vmem:[#allocation14 + $0x6c0] sm:$0xff]
    %v3748 = vld [vmem:[#allocation14 + $0x6c8] sm:$0xff]
    %v3749 = vld [vmem:[#allocation14 + $0x6d0] sm:$0xff]
    %v3750 = vld [vmem:[#allocation14 + $0x6d8] sm:$0xff]
    %v3751 = vld [vmem:[#allocation14 + $0x6e0] sm:$0xff]
    %v3752 = vld [vmem:[#allocation14 + $0x6e8] sm:$0xff]
    %v3753 = vld [vmem:[#allocation14 + $0x6f0] sm:$0xff]
    %v3754 = vld [vmem:[#allocation14 + $0x6f8] sm:$0xff]
    %v3755 = vld [vmem:[#allocation14 + $0x700] sm:$0xff]
    %v3756 = vld [vmem:[#allocation14 + $0x708] sm:$0xff]
    %v3757 = vld [vmem:[#allocation14 + $0x710] sm:$0xff]
    %v3758 = vld [vmem:[#allocation14 + $0x718] sm:$0xff]
    %v3759 = vld [vmem:[#allocation14 + $0x720] sm:$0xff]
    %v3760 = vld [vmem:[#allocation14 + $0x728] sm:$0xff]
    %v3761 = vld [vmem:[#allocation14 + $0x730] sm:$0xff]
    %v3762 = vld [vmem:[#allocation14 + $0x738] sm:$0xff]
    %v3763 = vld [vmem:[#allocation14 + $0x740] sm:$0xff]
    %v3764 = vld [vmem:[#allocation14 + $0x748] sm:$0xff]
    %v3765 = vld [vmem:[#allocation14 + $0x750] sm:$0xff]
    %v3766 = vld [vmem:[#allocation14 + $0x758] sm:$0xff]
    %v3767 = vld [vmem:[#allocation14 + $0x760] sm:$0xff]
    %v3768 = vld [vmem:[#allocation14 + $0x768] sm:$0xff]
    %v3769 = vld [vmem:[#allocation14 + $0x770] sm:$0xff]
    %v3770 = vld [vmem:[#allocation14 + $0x778] sm:$0xff]
    %v3771 = vld [vmem:[#allocation14 + $0x780] sm:$0xff]
    %v3772 = vld [vmem:[#allocation14 + $0x788] sm:$0xff]
    %v3773 = vld [vmem:[#allocation14 + $0x790] sm:$0xff]
    %v3774 = vld [vmem:[#allocation14 + $0x798] sm:$0xff]
    %v3775 = vld [vmem:[#allocation14 + $0x7a0] sm:$0xff]
    %v3776 = vld [vmem:[#allocation14 + $0x7a8] sm:$0xff]
    %v3777 = vld [vmem:[#allocation14 + $0x7b0] sm:$0xff]
    %v3778 = vld [vmem:[#allocation14 + $0x7b8] sm:$0xff]
    %v3779 = vld [vmem:[#allocation14 + $0x7c0] sm:$0xff]
    %v3780 = vld [vmem:[#allocation14 + $0x7c8] sm:$0xff]
    %v3781 = vld [vmem:[#allocation14 + $0x7d0] sm:$0xff]
    %v3782 = vld [vmem:[#allocation14 + $0x7d8] sm:$0xff]
    %v3783 = vld [vmem:[#allocation14 + $0x7e0] sm:$0xff]
    %v3784 = vld [vmem:[#allocation14 + $0x7e8] sm:$0xff]
    %v3785 = vld [vmem:[#allocation14 + $0x7f0] sm:$0xff]
    %v3786 = vld [vmem:[#allocation14 + $0x7f8] sm:$0xff]
    %v3787 = vld [vmem:[#allocation14 + $0x800] sm:$0xff]
    %v3788 = vld [vmem:[#allocation14 + $0x808] sm:$0xff]
    %v3789 = vld [vmem:[#allocation14 + $0x810] sm:$0xff]
    %v3790 = vld [vmem:[#allocation14 + $0x818] sm:$0xff]
    %v3791 = vld [vmem:[#allocation14 + $0x820] sm:$0xff]
    %v3792 = vld [vmem:[#allocation14 + $0x828] sm:$0xff]
    %v3793 = vld [vmem:[#allocation14 + $0x830] sm:$0xff]
    %v3794 = vld [vmem:[#allocation14 + $0x838] sm:$0xff]
    %v3795 = vld [vmem:[#allocation14 + $0x840] sm:$0xff]
    %v3796 = vld [vmem:[#allocation14 + $0x848] sm:$0xff]
    %v3797 = vld [vmem:[#allocation14 + $0x850] sm:$0xff]
    %v3798 = vld [vmem:[#allocation14 + $0x858] sm:$0xff]
    %v3799 = vld [vmem:[#allocation14 + $0x860] sm:$0xff]
    %v3800 = vld [vmem:[#allocation14 + $0x868] sm:$0xff]
    %v3801 = vld [vmem:[#allocation14 + $0x870] sm:$0xff]
    %v3802 = vld [vmem:[#allocation14 + $0x878] sm:$0xff]
    %v3803 = vld [vmem:[#allocation14 + $0x880] sm:$0xff]
    %v3804 = vld [vmem:[#allocation14 + $0x888] sm:$0xff]
    %v3805 = vld [vmem:[#allocation14 + $0x890] sm:$0xff]
    %v3806 = vld [vmem:[#allocation14 + $0x898] sm:$0xff]
    %v3807 = vld [vmem:[#allocation14 + $0x8a0] sm:$0xff]
    %v3808 = vld [vmem:[#allocation14 + $0x8a8] sm:$0xff]
    %v3809 = vld [vmem:[#allocation14 + $0x8b0] sm:$0xff]
    %v3810 = vld [vmem:[#allocation14 + $0x8b8] sm:$0xff]
    %v3811 = vld [vmem:[#allocation14 + $0x8c0] sm:$0xff]
    %v3812 = vld [vmem:[#allocation14 + $0x8c8] sm:$0xff]
    %v3813 = vld [vmem:[#allocation14 + $0x8d0] sm:$0xff]
    %v3814 = vld [vmem:[#allocation14 + $0x8d8] sm:$0xff]
    %v3815 = vld [vmem:[#allocation14 + $0x8e0] sm:$0xff]
    %v3816 = vld [vmem:[#allocation14 + $0x8e8] sm:$0xff]
    %v3817 = vld [vmem:[#allocation14 + $0x8f0] sm:$0xff]
    %v3818 = vld [vmem:[#allocation14 + $0x8f8] sm:$0xff]
    %v3819 = vld [vmem:[#allocation14 + $0x900] sm:$0xff]
    %v3820 = vld [vmem:[#allocation14 + $0x908] sm:$0xff]
    %v3821 = vld [vmem:[#allocation14 + $0x910] sm:$0xff]
    %v3822 = vld [vmem:[#allocation14 + $0x918] sm:$0xff]
    %v3823 = vld [vmem:[#allocation14 + $0x920] sm:$0xff]
    %v3824 = vld [vmem:[#allocation14 + $0x928] sm:$0xff]
    %v3825 = vld [vmem:[#allocation14 + $0x930] sm:$0xff]
    %v3826 = vld [vmem:[#allocation14 + $0x938] sm:$0xff]
    %v3827 = vld [vmem:[#allocation14 + $0x940] sm:$0xff]
    %v3828 = vld [vmem:[#allocation14 + $0x948] sm:$0xff]
    %v3829 = vld [vmem:[#allocation14 + $0x950] sm:$0xff]
    %v3830 = vld [vmem:[#allocation14 + $0x958] sm:$0xff]
    %v3831 = vld [vmem:[#allocation14 + $0x960] sm:$0xff]
    %v3832 = vld [vmem:[#allocation14 + $0x968] sm:$0xff]
    %v3833 = vld [vmem:[#allocation14 + $0x970] sm:$0xff]
    %v3834 = vld [vmem:[#allocation14 + $0x978] sm:$0xff]
    %v3835 = vld [vmem:[#allocation14 + $0x980] sm:$0xff]
    %v3836 = vld [vmem:[#allocation14 + $0x988] sm:$0xff]
    %v3837 = vld [vmem:[#allocation14 + $0x990] sm:$0xff]
    %v3838 = vld [vmem:[#allocation14 + $0x998] sm:$0xff]
    %v3839 = vld [vmem:[#allocation14 + $0x9a0] sm:$0xff]
    %v3840 = vld [vmem:[#allocation14 + $0x9a8] sm:$0xff]
    %v3841 = vld [vmem:[#allocation14 + $0x9b0] sm:$0xff]
    %v3842 = vld [vmem:[#allocation14 + $0x9b8] sm:$0xff]
    %v3843 = vld [vmem:[#allocation14 + $0x9c0] sm:$0xff]
    %v3844 = vld [vmem:[#allocation14 + $0x9c8] sm:$0xff]
    %v3845 = vld [vmem:[#allocation14 + $0x9d0] sm:$0xff]
    %v3846 = vld [vmem:[#allocation14 + $0x9d8] sm:$0xff]
    %v3847 = vld [vmem:[#allocation14 + $0x9e0] sm:$0xff]
    %v3848 = vld [vmem:[#allocation14 + $0x9e8] sm:$0xff]
    %v3849 = vld [vmem:[#allocation14 + $0x9f0] sm:$0xff]
    %v3850 = vld [vmem:[#allocation14 + $0x9f8] sm:$0xff]
    %v3851 = vld [vmem:[#allocation14 + $0xa00] sm:$0xff]
    %v3852 = vld [vmem:[#allocation14 + $0xa08] sm:$0xff]
    %v3853 = vld [vmem:[#allocation14 + $0xa10] sm:$0xff]
    %v3854 = vld [vmem:[#allocation14 + $0xa18] sm:$0xff]
    %v3855 = vld [vmem:[#allocation14 + $0xa20] sm:$0xff]
    %v3856 = vld [vmem:[#allocation14 + $0xa28] sm:$0xff]
    %v3857 = vld [vmem:[#allocation14 + $0xa30] sm:$0xff]
    %v3858 = vld [vmem:[#allocation14 + $0xa38] sm:$0xff]
    %v3859 = vld [vmem:[#allocation14 + $0xa40] sm:$0xff]
    %v3860 = vld [vmem:[#allocation14 + $0xa48] sm:$0xff]
    %v3861 = vld [vmem:[#allocation14 + $0xa50] sm:$0xff]
    %v3862 = vld [vmem:[#allocation14 + $0xa58] sm:$0xff]
    %v3863 = vld [vmem:[#allocation14 + $0xa60] sm:$0xff]
    %v3864 = vld [vmem:[#allocation14 + $0xa68] sm:$0xff]
    %v3865 = vld [vmem:[#allocation14 + $0xa70] sm:$0xff]
    %v3866 = vld [vmem:[#allocation14 + $0xa78] sm:$0xff]
    %v3867 = vld [vmem:[#allocation14 + $0xa80] sm:$0xff]
    %v3868 = vld [vmem:[#allocation14 + $0xa88] sm:$0xff]
    %v3869 = vld [vmem:[#allocation14 + $0xa90] sm:$0xff]
    %v3870 = vld [vmem:[#allocation14 + $0xa98] sm:$0xff]
    %v3871 = vld [vmem:[#allocation14 + $0xaa0] sm:$0xff]
    %v3872 = vld [vmem:[#allocation14 + $0xaa8] sm:$0xff]
    %v3873 = vld [vmem:[#allocation14 + $0xab0] sm:$0xff]
    %v3874 = vld [vmem:[#allocation14 + $0xab8] sm:$0xff]
    %v3875 = vld [vmem:[#allocation14 + $0xac0] sm:$0xff]
    %v3876 = vld [vmem:[#allocation14 + $0xac8] sm:$0xff]
    %v3877 = vld [vmem:[#allocation14 + $0xad0] sm:$0xff]
    %v3878 = vld [vmem:[#allocation14 + $0xad8] sm:$0xff]
    %v3879 = vld [vmem:[#allocation14 + $0xae0] sm:$0xff]
    %v3880 = vld [vmem:[#allocation14 + $0xae8] sm:$0xff]
    %v3881 = vld [vmem:[#allocation14 + $0xaf0] sm:$0xff]
    %v3882 = vld [vmem:[#allocation14 + $0xaf8] sm:$0xff]
    %v3883 = vld [vmem:[#allocation14 + $0xb00] sm:$0xff]
    %v3884 = vld [vmem:[#allocation14 + $0xb08] sm:$0xff]
    %v3885 = vld [vmem:[#allocation14 + $0xb10] sm:$0xff]
    %v3886 = vld [vmem:[#allocation14 + $0xb18] sm:$0xff]
    %v3887 = vld [vmem:[#allocation14 + $0xb20] sm:$0xff]
    %v3888 = vld [vmem:[#allocation14 + $0xb28] sm:$0xff]
    %v3889 = vld [vmem:[#allocation14 + $0xb30] sm:$0xff]
    %v3890 = vld [vmem:[#allocation14 + $0xb38] sm:$0xff]
    %v3891 = vld [vmem:[#allocation14 + $0xb40] sm:$0xff]
    %v3892 = vld [vmem:[#allocation14 + $0xb48] sm:$0xff]
    %v3893 = vld [vmem:[#allocation14 + $0xb50] sm:$0xff]
    %v3894 = vld [vmem:[#allocation14 + $0xb58] sm:$0xff]
    %v3895 = vld [vmem:[#allocation14 + $0xb60] sm:$0xff]
    %v3896 = vld [vmem:[#allocation14 + $0xb68] sm:$0xff]
    %v3897 = vld [vmem:[#allocation14 + $0xb70] sm:$0xff]
    %v3898 = vld [vmem:[#allocation14 + $0xb78] sm:$0xff]
    %v3899 = vld [vmem:[#allocation14 + $0xb80] sm:$0xff]
    %v3900 = vld [vmem:[#allocation14 + $0xb88] sm:$0xff]
    %v3901 = vld [vmem:[#allocation14 + $0xb90] sm:$0xff]
    %v3902 = vld [vmem:[#allocation14 + $0xb98] sm:$0xff]
    %v3903 = vld [vmem:[#allocation14 + $0xba0] sm:$0xff]
    %v3904 = vld [vmem:[#allocation14 + $0xba8] sm:$0xff]
    %v3905 = vld [vmem:[#allocation14 + $0xbb0] sm:$0xff]
    %v3906 = vld [vmem:[#allocation14 + $0xbb8] sm:$0xff]
    %v3907 = vld [vmem:[#allocation14 + $0xbc0] sm:$0xff]
    %v3908 = vld [vmem:[#allocation14 + $0xbc8] sm:$0xff]
    %v3909 = vld [vmem:[#allocation14 + $0xbd0] sm:$0xff]
    %v3910 = vld [vmem:[#allocation14 + $0xbd8] sm:$0xff]
    %v3911 = vld [vmem:[#allocation14 + $0xbe0] sm:$0xff]
    %v3912 = vld [vmem:[#allocation14 + $0xbe8] sm:$0xff]
    %v3913 = vld [vmem:[#allocation14 + $0xbf0] sm:$0xff]
    %v3914 = vld [vmem:[#allocation14 + $0xbf8] sm:$0xff]
    %v3915 = vld [vmem:[#allocation14 + $0xc00] sm:$0xff]
    %v3916 = vld [vmem:[#allocation14 + $0xc08] sm:$0xff]
    %v3917 = vld [vmem:[#allocation14 + $0xc10] sm:$0xff]
    %v3918 = vld [vmem:[#allocation14 + $0xc18] sm:$0xff]
    %v3919 = vld [vmem:[#allocation14 + $0xc20] sm:$0xff]
    %v3920 = vld [vmem:[#allocation14 + $0xc28] sm:$0xff]
    %v3921 = vld [vmem:[#allocation14 + $0xc30] sm:$0xff]
    %v3922 = vld [vmem:[#allocation14 + $0xc38] sm:$0xff]
    %v3923 = vld [vmem:[#allocation14 + $0xc40] sm:$0xff]
    %v3924 = vld [vmem:[#allocation14 + $0xc48] sm:$0xff]
    %v3925 = vld [vmem:[#allocation14 + $0xc50] sm:$0xff]
    %v3926 = vld [vmem:[#allocation14 + $0xc58] sm:$0xff]
    %v3927 = vld [vmem:[#allocation14 + $0xc60] sm:$0xff]
    %v3928 = vld [vmem:[#allocation14 + $0xc68] sm:$0xff]
    %v3929 = vld [vmem:[#allocation14 + $0xc70] sm:$0xff]
    %v3930 = vld [vmem:[#allocation14 + $0xc78] sm:$0xff]
    %v3931 = vld [vmem:[#allocation26] sm:$0x1f]
    %v3933 = vlaneseq
    %v3934 = vshrl.u32 %v3933, 7
    %v3935 = vsub.s32 0, %v3934
    %v3936 = vrot.slane %v3931, %v3935
    %v3937 = vlaneseq
    %v3938 = vshrl.u32 %v3937, 7
    %v3939 = vsub.s32 1, %v3938
    %v3940 = vrot.slane %v3931, %v3939
    %v3941 = vlaneseq
    %v3942 = vshrl.u32 %v3941, 7
    %v3943 = vsub.s32 2, %v3942
    %v3944 = vrot.slane %v3931, %v3943
    %v3945 = vlaneseq
    %v3946 = vshrl.u32 %v3945, 7
    %v3947 = vsub.s32 3, %v3946
    %v3948 = vrot.slane %v3931, %v3947
    %v3949 = vlaneseq
    %v3950 = vshrl.u32 %v3949, 7
    %v3951 = vsub.s32 4, %v3950
    %v3952 = vrot.slane %v3931, %v3951
    %3958 = vmatprep.subr.mxu0 %v3532
    %3959 = vmatpush1.msra.mxu0 %v3531
    %3960 = vmatprep.subr.mxu0 %v3537
    %3961 = vmatpush1.msra.mxu0 %v3536
    %3962 = vmatprep.subr.mxu0 %v3542
    %3963 = vmatpush1.msra.mxu0 %v3541
    %3964 = vmatprep.subr.mxu0 %v3547
    %3965 = vmatpush1.msra.mxu0 %v3546
    %3966 = vmatprep.subr.mxu0 %v3552
    %3967 = vmatpush1.msra.mxu0 %v3551
    %3968 = vmatprep.subr.mxu0 %v3557
    %3969 = vmatpush1.msra.mxu0 %v3556
    %3970 = vmatprep.subr.mxu0 %v3562
    %3971 = vmatpush1.msra.mxu0 %v3561
    %3972 = vmatprep.subr.mxu0 %v3567
    %3973 = vmatpush1.msra.mxu0 %v3566
    %3974 = vmatprep.subr.mxu0 %v3572
    %3975 = vmatpush1.msra.mxu0 %v3571
    %3976 = vmatprep.subr.mxu0 %v3577
    %3977 = vmatpush1.msra.mxu0 %v3576
    %3978 = vmatprep.subr.mxu0 %v3582
    %3979 = vmatpush1.msra.mxu0 %v3581
    %3980 = vmatprep.subr.mxu0 %v3587
    %3981 = vmatpush1.msra.mxu0 %v3586
    %3982 = vmatprep.subr.mxu0 %v3592
    %3983 = vmatpush1.msra.mxu0 %v3591
    %3984 = vmatprep.subr.mxu0 %v3597
    %3985 = vmatpush1.msra.mxu0 %v3596
    %3986 = vmatprep.subr.mxu0 %v3602
    %3987 = vmatpush1.msra.mxu0 %v3601
    %3988 = vmatprep.subr.mxu0 %v3607
    %3989 = vmatpush1.msra.mxu0 %v3606
    %3990 = vmatprep.subr.mxu0 %v3612
    %3991 = vmatpush1.msra.mxu0 %v3611
    %3992 = vmatprep.subr.mxu0 %v3617
    %3993 = vmatpush1.msra.mxu0 %v3616
    %3994 = vmatprep.subr.mxu0 %v3622
    %3995 = vmatpush1.msra.mxu0 %v3621
    %3996 = vmatprep.subr.mxu0 %v3627
    %3997 = vmatpush1.msra.mxu0 %v3626
    %3998 = vmatprep.subr.mxu0 %v3632
    %3999 = vmatpush1.msra.mxu0 %v3631
    %4000 = vmatprep.subr.mxu0 %v3637
    %4001 = vmatpush1.msra.mxu0 %v3636
    %4002 = vmatprep.subr.mxu0 %v3642
    %4003 = vmatpush1.msra.mxu0 %v3641
    %4004 = vmatprep.subr.mxu0 %v3647
    %4005 = vmatpush1.msra.mxu0 %v3646
    %4006 = vmatprep.subr.mxu0 %v3652
    %4007 = vmatpush1.msra.mxu0 %v3651
    %4008 = vmatprep.subr.mxu0 %v3657
    %4009 = vmatpush1.msra.mxu0 %v3656
    %4010 = vmatprep.subr.mxu0 %v3662
    %4011 = vmatpush1.msra.mxu0 %v3661
    %4012 = vmatprep.subr.mxu0 %v3667
    %4013 = vmatpush1.msra.mxu0 %v3666
    %4014 = vmatprep.subr.mxu0 %v3672
    %4015 = vmatpush1.msra.mxu0 %v3671
    %4016 = vmatprep.subr.mxu0 %v3677
    %4017 = vmatpush1.msra.mxu0 %v3676
    %4018 = vmatprep.subr.mxu0 %v3682
    %4019 = vmatpush1.msra.mxu0 %v3681
    %4020 = vmatprep.subr.mxu0 %v3687
    %4021 = vmatpush1.msra.mxu0 %v3686
    %4022 = vmatprep.mubr.f32.mxu0 %v3527
    %4023 = vmatmul.mubr.f32.gmra.mrb[0].mxu0 %v3526
    %v4024 = vpop.f32.mrb[0].mxu0
    %v4025 = vadd.f32 %v3936, %v4024
    %v4026 = vpop.f32.mrb[0].mxu0
    %v4027 = vadd.f32 %v3940, %v4026
    %4028 = vdwg.mxu0
    %4029 = vmatprep.subr.mxu0 %v3692
    %4030 = vmatpush1.msra.mxu0 %v3691
    %4031 = vmatprep.subr.mxu0 %v3697
    %4032 = vmatpush1.msra.mxu0 %v3696
    %4033 = vmatprep.subr.mxu0 %v3702
    %4034 = vmatpush1.msra.mxu0 %v3701
    %4035 = vmatprep.subr.mxu0 %v3707
    %4036 = vmatpush1.msra.mxu0 %v3706
    %4037 = vmatprep.subr.mxu0 %v3712
    %4038 = vmatpush1.msra.mxu0 %v3711
    %4039 = vmatprep.subr.mxu0 %v3717
    %4040 = vmatpush1.msra.mxu0 %v3716
    %4041 = vmatprep.subr.mxu0 %v3722
    %4042 = vmatpush1.msra.mxu0 %v3721
    %4043 = vmatprep.subr.mxu0 %v3727
    %4044 = vmatpush1.msra.mxu0 %v3726
    %4045 = vmatprep.subr.mxu0 %v3732
    %4046 = vmatpush1.msra.mxu0 %v3731
    %4047 = vmatprep.subr.mxu0 %v3737
    %4048 = vmatpush1.msra.mxu0 %v3736
    %4049 = vmatprep.subr.mxu0 %v3742
    %4050 = vmatpush1.msra.mxu0 %v3741
    %4051 = vmatprep.subr.mxu0 %v3747
    %4052 = vmatpush1.msra.mxu0 %v3746
    %4053 = vmatprep.subr.mxu0 %v3752
    %4054 = vmatpush1.msra.mxu0 %v3751
    %4055 = vmatprep.subr.mxu0 %v3757
    %4056 = vmatpush1.msra.mxu0 %v3756
    %4057 = vmatprep.subr.mxu0 %v3762
    %4058 = vmatpush1.msra.mxu0 %v3761
    %4059 = vmatprep.subr.mxu0 %v3767
    %4060 = vmatpush1.msra.mxu0 %v3766
    %4061 = vmatprep.subr.mxu0 %v3772
    %4062 = vmatpush1.msra.mxu0 %v3771
    %4063 = vmatprep.subr.mxu0 %v3777
    %4064 = vmatpush1.msra.mxu0 %v3776
    %4065 = vmatprep.subr.mxu0 %v3782
    %4066 = vmatpush1.msra.mxu0 %v3781
    %4067 = vmatprep.subr.mxu0 %v3787
    %4068 = vmatpush1.msra.mxu0 %v3786
    %4069 = vmatprep.subr.mxu0 %v3792
    %4070 = vmatpush1.msra.mxu0 %v3791
    %4071 = vmatprep.subr.mxu0 %v3797
    %4072 = vmatpush1.msra.mxu0 %v3796
    %4073 = vmatprep.subr.mxu0 %v3802
    %4074 = vmatpush1.msra.mxu0 %v3801
    %4075 = vmatprep.subr.mxu0 %v3807
    %4076 = vmatpush1.msra.mxu0 %v3806
    %4077 = vmatprep.subr.mxu0 %v3812
    %4078 = vmatpush1.msra.mxu0 %v3811
    %4079 = vmatprep.subr.mxu0 %v3817
    %4080 = vmatpush1.msra.mxu0 %v3816
    %4081 = vmatprep.subr.mxu0 %v3822
    %4082 = vmatpush1.msra.mxu0 %v3821
    %4083 = vmatprep.subr.mxu0 %v3827
    %4084 = vmatpush1.msra.mxu0 %v3826
    %4085 = vmatprep.subr.mxu0 %v3832
    %4086 = vmatpush1.msra.mxu0 %v3831
    %4087 = vmatprep.subr.mxu0 %v3837
    %4088 = vmatpush1.msra.mxu0 %v3836
    %4089 = vmatprep.subr.mxu0 %v3842
    %4090 = vmatpush1.msra.mxu0 %v3841
    %4091 = vmatprep.subr.mxu0 %v3847
    %4092 = vmatpush1.msra.mxu0 %v3846
    %4093 = vmatprep.mubr.f32.mxu0 %v3529
    %4094 = vmatmul.mubr.f32.gmra.mrb[0].mxu0 %v3528
    %v4095 = vpop.f32.mrb[0].mxu0
    %v4096 = vadd.f32 %v4025, %v4095
    %v4097 = vpop.f32.mrb[0].mxu0
    %v4098 = vadd.f32 %v4027, %v4097
    %4099 = vdwg.mxu0
    %4100 = vmatprep.subr.mxu0 %v3852
    %4101 = vmatpush1.msra.mxu0 %v3851
    %4102 = vmatprep.subr.mxu0 %v3857
    %4103 = vmatpush1.msra.mxu0 %v3856
    %4104 = vmatprep.subr.mxu0 %v3862
    %4105 = vmatpush1.msra.mxu0 %v3861
    %4106 = vmatprep.subr.mxu0 %v3867
    %4107 = vmatpush1.msra.mxu0 %v3866
    %4108 = vmatprep.subr.mxu0 %v3872
    %4109 = vmatpush1.msra.mxu0 %v3871
    %4110 = vmatprep.subr.mxu0 %v3877
    %4111 = vmatpush1.msra.mxu0 %v3876
    %4112 = vmatprep.subr.mxu0 %v3882
    %4113 = vmatpush1.msra.mxu0 %v3881
    %4114 = vmatprep.subr.mxu0 %v3887
    %4115 = vmatpush1.msra.mxu0 %v3886
    %4116 = vmatprep.subr.mxu0 %v3892
    %4117 = vmatpush1.msra.mxu0 %v3891
    %4118 = vmatprep.subr.mxu0 %v3897
    %4119 = vmatpush1.msra.mxu0 %v3896
    %4120 = vmatprep.subr.mxu0 %v3902
    %4121 = vmatpush1.msra.mxu0 %v3901
    %4122 = vmatprep.subr.mxu0 %v3907
    %4123 = vmatpush1.msra.mxu0 %v3906
    %4124 = vmatprep.subr.mxu0 %v3912
    %4125 = vmatpush1.msra.mxu0 %v3911
    %4126 = vmatprep.subr.mxu0 %v3917
    %4127 = vmatpush1.msra.mxu0 %v3916
    %4128 = vmatprep.subr.mxu0 %v3922
    %4129 = vmatpush1.msra.mxu0 %v3921
    %4130 = vmatprep.subr.mxu0 %v3927
    %4131 = vmatpush1.msra.mxu0 %v3926
    %4132 = vmatprep.subr.mxu0 0.0
    %4133 = vmatpush1.msra.mxu0 0.0
    %4134 = vmatprep.subr.mxu0 0.0
    %4135 = vmatpush1.msra.mxu0 0.0
    %4136 = vmatprep.subr.mxu0 0.0
    %4137 = vmatpush1.msra.mxu0 0.0
    %4138 = vmatprep.subr.mxu0 0.0
    %4139 = vmatpush1.msra.mxu0 0.0
    %4140 = vmatprep.subr.mxu0 0.0
    %4141 = vmatpush1.msra.mxu0 0.0
    %4142 = vmatprep.subr.mxu0 0.0
    %4143 = vmatpush1.msra.mxu0 0.0
    %4144 = vmatprep.subr.mxu0 0.0
    %4145 = vmatpush1.msra.mxu0 0.0
    %4146 = vmatprep.subr.mxu0 0.0
    %4147 = vmatpush1.msra.mxu0 0.0
    %4148 = vmatprep.subr.mxu0 0.0
    %4149 = vmatpush1.msra.mxu0 0.0
    %4150 = vmatprep.subr.mxu0 0.0
    %4151 = vmatpush1.msra.mxu0 0.0
    %4152 = vmatprep.subr.mxu0 0.0
    %4153 = vmatpush1.msra.mxu0 0.0
    %4154 = vmatprep.subr.mxu0 0.0
    %4155 = vmatpush1.msra.mxu0 0.0
    %4156 = vmatprep.subr.mxu0 0.0
    %4157 = vmatpush1.msra.mxu0 0.0
    %4158 = vmatprep.subr.mxu0 0.0
    %4159 = vmatpush1.msra.mxu0 0.0
    %4160 = vmatprep.subr.mxu0 0.0
    %4161 = vmatpush1.msra.mxu0 0.0
    %4162 = vmatprep.subr.mxu0 0.0
    %4163 = vmatpush1.msra.mxu0 0.0
    %4164 = vmatprep.mubr.f32.mxu0 0.0
    %4165 = vmatmul.mubr.f32.gmra.mrb[0].mxu0 %v3530
    %v4166 = vpop.f32.mrb[0].mxu0
    %v4167 = vadd.f32 %v4096, %v4166
    %v4168 = vpop.f32.mrb[0].mxu0
    %v4169 = vadd.f32 %v4098, %v4168
    %4170 = vdwg.mxu0
    %4171 = vmatprep.subr.mxu0 %v3534
    %4172 = vmatpush1.msra.mxu0 %v3533
    %4173 = vmatprep.subr.mxu0 %v3539
    %4174 = vmatpush1.msra.mxu0 %v3538
    %4175 = vmatprep.subr.mxu0 %v3544
    %4176 = vmatpush1.msra.mxu0 %v3543
    %4177 = vmatprep.subr.mxu0 %v3549
    %4178 = vmatpush1.msra.mxu0 %v3548
    %4179 = vmatprep.subr.mxu0 %v3554
    %4180 = vmatpush1.msra.mxu0 %v3553
    %4181 = vmatprep.subr.mxu0 %v3559
    %4182 = vmatpush1.msra.mxu0 %v3558
    %4183 = vmatprep.subr.mxu0 %v3564
    %4184 = vmatpush1.msra.mxu0 %v3563
    %4185 = vmatprep.subr.mxu0 %v3569
    %4186 = vmatpush1.msra.mxu0 %v3568
    %4187 = vmatprep.subr.mxu0 %v3574
    %4188 = vmatpush1.msra.mxu0 %v3573
    %4189 = vmatprep.subr.mxu0 %v3579
    %4190 = vmatpush1.msra.mxu0 %v3578
    %4191 = vmatprep.subr.mxu0 %v3584
    %4192 = vmatpush1.msra.mxu0 %v3583
    %4193 = vmatprep.subr.mxu0 %v3589
    %4194 = vmatpush1.msra.mxu0 %v3588
    %4195 = vmatprep.subr.mxu0 %v3594
    %4196 = vmatpush1.msra.mxu0 %v3593
    %4197 = vmatprep.subr.mxu0 %v3599
    %4198 = vmatpush1.msra.mxu0 %v3598
    %4199 = vmatprep.subr.mxu0 %v3604
    %4200 = vmatpush1.msra.mxu0 %v3603
    %4201 = vmatprep.subr.mxu0 %v3609
    %4202 = vmatpush1.msra.mxu0 %v3608
    %4203 = vmatprep.subr.mxu0 %v3614
    %4204 = vmatpush1.msra.mxu0 %v3613
    %4205 = vmatprep.subr.mxu0 %v3619
    %4206 = vmatpush1.msra.mxu0 %v3618
    %4207 = vmatprep.subr.mxu0 %v3624
    %4208 = vmatpush1.msra.mxu0 %v3623
    %4209 = vmatprep.subr.mxu0 %v3629
    %4210 = vmatpush1.msra.mxu0 %v3628
    %4211 = vmatprep.subr.mxu0 %v3634
    %4212 = vmatpush1.msra.mxu0 %v3633
    %4213 = vmatprep.subr.mxu0 %v3639
    %4214 = vmatpush1.msra.mxu0 %v3638
    %4215 = vmatprep.subr.mxu0 %v3644
    %4216 = vmatpush1.msra.mxu0 %v3643
    %4217 = vmatprep.subr.mxu0 %v3649
    %4218 = vmatpush1.msra.mxu0 %v3648
    %4219 = vmatprep.subr.mxu0 %v3654
    %4220 = vmatpush1.msra.mxu0 %v3653
    %4221 = vmatprep.subr.mxu0 %v3659
    %4222 = vmatpush1.msra.mxu0 %v3658
    %4223 = vmatprep.subr.mxu0 %v3664
    %4224 = vmatpush1.msra.mxu0 %v3663
    %4225 = vmatprep.subr.mxu0 %v3669
    %4226 = vmatpush1.msra.mxu0 %v3668
    %4227 = vmatprep.subr.mxu0 %v3674
    %4228 = vmatpush1.msra.mxu0 %v3673
    %4229 = vmatprep.subr.mxu0 %v3679
    %4230 = vmatpush1.msra.mxu0 %v3678
    %4231 = vmatprep.subr.mxu0 %v3684
    %4232 = vmatpush1.msra.mxu0 %v3683
    %4233 = vmatprep.subr.mxu0 %v3689
    %4234 = vmatpush1.msra.mxu0 %v3688
    %4235 = vmatprep.mubr.f32.mxu0 %v3527
    %4236 = vmatmul.mubr.f32.gmra.mrb[0].mxu0 %v3526
    %v4237 = vpop.f32.mrb[0].mxu0
    %v4238 = vadd.f32 %v3944, %v4237
    %v4239 = vpop.f32.mrb[0].mxu0
    %v4240 = vadd.f32 %v3948, %v4239
    %4241 = vdwg.mxu0
    %4242 = vmatprep.subr.mxu0 %v3694
    %4243 = vmatpush1.msra.mxu0 %v3693
    %4244 = vmatprep.subr.mxu0 %v3699
    %4245 = vmatpush1.msra.mxu0 %v3698
    %4246 = vmatprep.subr.mxu0 %v3704
    %4247 = vmatpush1.msra.mxu0 %v3703
    %4248 = vmatprep.subr.mxu0 %v3709
    %4249 = vmatpush1.msra.mxu0 %v3708
    %4250 = vmatprep.subr.mxu0 %v3714
    %4251 = vmatpush1.msra.mxu0 %v3713
    %4252 = vmatprep.subr.mxu0 %v3719
    %4253 = vmatpush1.msra.mxu0 %v3718
    %4254 = vmatprep.subr.mxu0 %v3724
    %4255 = vmatpush1.msra.mxu0 %v3723
    %4256 = vmatprep.subr.mxu0 %v3729
    %4257 = vmatpush1.msra.mxu0 %v3728
    %4258 = vmatprep.subr.mxu0 %v3734
    %4259 = vmatpush1.msra.mxu0 %v3733
    %4260 = vmatprep.subr.mxu0 %v3739
    %4261 = vmatpush1.msra.mxu0 %v3738
    %4262 = vmatprep.subr.mxu0 %v3744
    %4263 = vmatpush1.msra.mxu0 %v3743
    %4264 = vmatprep.subr.mxu0 %v3749
    %4265 = vmatpush1.msra.mxu0 %v3748
    %4266 = vmatprep.subr.mxu0 %v3754
    %4267 = vmatpush1.msra.mxu0 %v3753
    %4268 = vmatprep.subr.mxu0 %v3759
    %4269 = vmatpush1.msra.mxu0 %v3758
    %4270 = vmatprep.subr.mxu0 %v3764
    %4271 = vmatpush1.msra.mxu0 %v3763
    %4272 = vmatprep.subr.mxu0 %v3769
    %4273 = vmatpush1.msra.mxu0 %v3768
    %4274 = vmatprep.subr.mxu0 %v3774
    %4275 = vmatpush1.msra.mxu0 %v3773
    %4276 = vmatprep.subr.mxu0 %v3779
    %4277 = vmatpush1.msra.mxu0 %v3778
    %4278 = vmatprep.subr.mxu0 %v3784
    %4279 = vmatpush1.msra.mxu0 %v3783
    %4280 = vmatprep.subr.mxu0 %v3789
    %4281 = vmatpush1.msra.mxu0 %v3788
    %4282 = vmatprep.subr.mxu0 %v3794
    %4283 = vmatpush1.msra.mxu0 %v3793
    %4284 = vmatprep.subr.mxu0 %v3799
    %4285 = vmatpush1.msra.mxu0 %v3798
    %4286 = vmatprep.subr.mxu0 %v3804
    %4287 = vmatpush1.msra.mxu0 %v3803
    %4288 = vmatprep.subr.mxu0 %v3809
    %4289 = vmatpush1.msra.mxu0 %v3808
    %4290 = vmatprep.subr.mxu0 %v3814
    %4291 = vmatpush1.msra.mxu0 %v3813
    %4292 = vmatprep.subr.mxu0 %v3819
    %4293 = vmatpush1.msra.mxu0 %v3818
    %4294 = vmatprep.subr.mxu0 %v3824
    %4295 = vmatpush1.msra.mxu0 %v3823
    %4296 = vmatprep.subr.mxu0 %v3829
    %4297 = vmatpush1.msra.mxu0 %v3828
    %4298 = vmatprep.subr.mxu0 %v3834
    %4299 = vmatpush1.msra.mxu0 %v3833
    %4300 = vmatprep.subr.mxu0 %v3839
    %4301 = vmatpush1.msra.mxu0 %v3838
    %4302 = vmatprep.subr.mxu0 %v3844
    %4303 = vmatpush1.msra.mxu0 %v3843
    %4304 = vmatprep.subr.mxu0 %v3849
    %4305 = vmatpush1.msra.mxu0 %v3848
    %4306 = vmatprep.mubr.f32.mxu0 %v3529
    %4307 = vmatmul.mubr.f32.gmra.mrb[0].mxu0 %v3528
    %v4308 = vpop.f32.mrb[0].mxu0
    %v4309 = vadd.f32 %v4238, %v4308
    %v4310 = vpop.f32.mrb[0].mxu0
    %v4311 = vadd.f32 %v4240, %v4310
    %4312 = vdwg.mxu0
    %4313 = vmatprep.subr.mxu0 %v3854
    %4314 = vmatpush1.msra.mxu0 %v3853
    %4315 = vmatprep.subr.mxu0 %v3859
    %4316 = vmatpush1.msra.mxu0 %v3858
    %4317 = vmatprep.subr.mxu0 %v3864
    %4318 = vmatpush1.msra.mxu0 %v3863
    %4319 = vmatprep.subr.mxu0 %v3869
    %4320 = vmatpush1.msra.mxu0 %v3868
    %4321 = vmatprep.subr.mxu0 %v3874
    %4322 = vmatpush1.msra.mxu0 %v3873
    %4323 = vmatprep.subr.mxu0 %v3879
    %4324 = vmatpush1.msra.mxu0 %v3878
    %4325 = vmatprep.subr.mxu0 %v3884
    %4326 = vmatpush1.msra.mxu0 %v3883
    %4327 = vmatprep.subr.mxu0 %v3889
    %4328 = vmatpush1.msra.mxu0 %v3888
    %4329 = vmatprep.subr.mxu0 %v3894
    %4330 = vmatpush1.msra.mxu0 %v3893
    %4331 = vmatprep.subr.mxu0 %v3899
    %4332 = vmatpush1.msra.mxu0 %v3898
    %4333 = vmatprep.subr.mxu0 %v3904
    %4334 = vmatpush1.msra.mxu0 %v3903
    %4335 = vmatprep.subr.mxu0 %v3909
    %4336 = vmatpush1.msra.mxu0 %v3908
    %4337 = vmatprep.subr.mxu0 %v3914
    %4338 = vmatpush1.msra.mxu0 %v3913
    %4339 = vmatprep.subr.mxu0 %v3919
    %4340 = vmatpush1.msra.mxu0 %v3918
    %4341 = vmatprep.subr.mxu0 %v3924
    %4342 = vmatpush1.msra.mxu0 %v3923
    %4343 = vmatprep.subr.mxu0 %v3929
    %4344 = vmatpush1.msra.mxu0 %v3928
    %4345 = vmatprep.subr.mxu0 0.0
    %4346 = vmatpush1.msra.mxu0 0.0
    %4347 = vmatprep.subr.mxu0 0.0
    %4348 = vmatpush1.msra.mxu0 0.0
    %4349 = vmatprep.subr.mxu0 0.0
    %4350 = vmatpush1.msra.mxu0 0.0
    %4351 = vmatprep.subr.mxu0 0.0
    %4352 = vmatpush1.msra.mxu0 0.0
    %4353 = vmatprep.subr.mxu0 0.0
    %4354 = vmatpush1.msra.mxu0 0.0
    %4355 = vmatprep.subr.mxu0 0.0
    %4356 = vmatpush1.msra.mxu0 0.0
    %4357 = vmatprep.subr.mxu0 0.0
    %4358 = vmatpush1.msra.mxu0 0.0
    %4359 = vmatprep.subr.mxu0 0.0
    %4360 = vmatpush1.msra.mxu0 0.0
    %4361 = vmatprep.subr.mxu0 0.0
    %4362 = vmatpush1.msra.mxu0 0.0
    %4363 = vmatprep.subr.mxu0 0.0
    %4364 = vmatpush1.msra.mxu0 0.0
    %4365 = vmatprep.subr.mxu0 0.0
    %4366 = vmatpush1.msra.mxu0 0.0
    %4367 = vmatprep.subr.mxu0 0.0
    %4368 = vmatpush1.msra.mxu0 0.0
    %4369 = vmatprep.subr.mxu0 0.0
    %4370 = vmatpush1.msra.mxu0 0.0
    %4371 = vmatprep.subr.mxu0 0.0
    %4372 = vmatpush1.msra.mxu0 0.0
    %4373 = vmatprep.subr.mxu0 0.0
    %4374 = vmatpush1.msra.mxu0 0.0
    %4375 = vmatprep.subr.mxu0 0.0
    %4376 = vmatpush1.msra.mxu0 0.0
    %4377 = vmatprep.mubr.f32.mxu0 0.0
    %4378 = vmatmul.mubr.f32.gmra.mrb[0].mxu0 %v3530
    %v4379 = vpop.f32.mrb[0].mxu0
    %v4380 = vadd.f32 %v4309, %v4379
    %v4381 = vpop.f32.mrb[0].mxu0
    %v4382 = vadd.f32 %v4311, %v4381
    %4383 = vdwg.mxu0
    %4384 = vmatprep.subr.mxu0 0.0
    %4385 = vmatpush1.msra.mxu0 %v3535
    %4386 = vmatprep.subr.mxu0 0.0
    %4387 = vmatpush1.msra.mxu0 %v3540
    %4388 = vmatprep.subr.mxu0 0.0
    %4389 = vmatpush1.msra.mxu0 %v3545
    %4390 = vmatprep.subr.mxu0 0.0
    %4391 = vmatpush1.msra.mxu0 %v3550
    %4392 = vmatprep.subr.mxu0 0.0
    %4393 = vmatpush1.msra.mxu0 %v3555
    %4394 = vmatprep.subr.mxu0 0.0
    %4395 = vmatpush1.msra.mxu0 %v3560
    %4396 = vmatprep.subr.mxu0 0.0
    %4397 = vmatpush1.msra.mxu0 %v3565
    %4398 = vmatprep.subr.mxu0 0.0
    %4399 = vmatpush1.msra.mxu0 %v3570
    %4400 = vmatprep.subr.mxu0 0.0
    %4401 = vmatpush1.msra.mxu0 %v3575
    %4402 = vmatprep.subr.mxu0 0.0
    %4403 = vmatpush1.msra.mxu0 %v3580
    %4404 = vmatprep.subr.mxu0 0.0
    %4405 = vmatpush1.msra.mxu0 %v3585
    %4406 = vmatprep.subr.mxu0 0.0
    %4407 = vmatpush1.msra.mxu0 %v3590
    %4408 = vmatprep.subr.mxu0 0.0
    %4409 = vmatpush1.msra.mxu0 %v3595
    %4410 = vmatprep.subr.mxu0 0.0
    %4411 = vmatpush1.msra.mxu0 %v3600
    %4412 = vmatprep.subr.mxu0 0.0
    %4413 = vmatpush1.msra.mxu0 %v3605
    %4414 = vmatprep.subr.mxu0 0.0
    %4415 = vmatpush1.msra.mxu0 %v3610
    %4416 = vmatprep.subr.mxu0 0.0
    %4417 = vmatpush1.msra.mxu0 %v3615
    %4418 = vmatprep.subr.mxu0 0.0
    %4419 = vmatpush1.msra.mxu0 %v3620
    %4420 = vmatprep.subr.mxu0 0.0
    %4421 = vmatpush1.msra.mxu0 %v3625
    %4422 = vmatprep.subr.mxu0 0.0
    %4423 = vmatpush1.msra.mxu0 %v3630
    %4424 = vmatprep.subr.mxu0 0.0
    %4425 = vmatpush1.msra.mxu0 %v3635
    %4426 = vmatprep.subr.mxu0 0.0
    %4427 = vmatpush1.msra.mxu0 %v3640
    %4428 = vmatprep.subr.mxu0 0.0
    %4429 = vmatpush1.msra.mxu0 %v3645
    %4430 = vmatprep.subr.mxu0 0.0
    %4431 = vmatpush1.msra.mxu0 %v3650
    %4432 = vmatprep.subr.mxu0 0.0
    %4433 = vmatpush1.msra.mxu0 %v3655
    %4434 = vmatprep.subr.mxu0 0.0
    %4435 = vmatpush1.msra.mxu0 %v3660
    %4436 = vmatprep.subr.mxu0 0.0
    %4437 = vmatpush1.msra.mxu0 %v3665
    %4438 = vmatprep.subr.mxu0 0.0
    %4439 = vmatpush1.msra.mxu0 %v3670
    %4440 = vmatprep.subr.mxu0 0.0
    %4441 = vmatpush1.msra.mxu0 %v3675
    %4442 = vmatprep.subr.mxu0 0.0
    %4443 = vmatpush1.msra.mxu0 %v3680
    %4444 = vmatprep.subr.mxu0 0.0
    %4445 = vmatpush1.msra.mxu0 %v3685
    %4446 = vmatprep.subr.mxu0 0.0
    %4447 = vmatpush1.msra.mxu0 %v3690
    %4448 = vmatprep.mubr.f32.mxu0 %v3527
    %4449 = vmatmul.mubr.f32.gmra.mrb[0].mxu0 %v3526
    %v4450 = vpop.f32.mrb[0].mxu0
    %v4451 = vadd.f32 %v3952, %v4450
    %v4452 = vpop.f32.mrb[0].mxu0
    %4453 = vdwg.mxu0
    %4454 = vmatprep.subr.mxu0 0.0
    %4455 = vmatpush1.msra.mxu0 %v3695
    %4456 = vmatprep.subr.mxu0 0.0
    %4457 = vmatpush1.msra.mxu0 %v3700
    %4458 = vmatprep.subr.mxu0 0.0
    %4459 = vmatpush1.msra.mxu0 %v3705
    %4460 = vmatprep.subr.mxu0 0.0
    %4461 = vmatpush1.msra.mxu0 %v3710
    %4462 = vmatprep.subr.mxu0 0.0
    %4463 = vmatpush1.msra.mxu0 %v3715
    %4464 = vmatprep.subr.mxu0 0.0
    %4465 = vmatpush1.msra.mxu0 %v3720
    %4466 = vmatprep.subr.mxu0 0.0
    %4467 = vmatpush1.msra.mxu0 %v3725
    %4468 = vmatprep.subr.mxu0 0.0
    %4469 = vmatpush1.msra.mxu0 %v3730
    %4470 = vmatprep.subr.mxu0 0.0
    %4471 = vmatpush1.msra.mxu0 %v3735
    %4472 = vmatprep.subr.mxu0 0.0
    %4473 = vmatpush1.msra.mxu0 %v3740
    %4474 = vmatprep.subr.mxu0 0.0
    %4475 = vmatpush1.msra.mxu0 %v3745
    %4476 = vmatprep.subr.mxu0 0.0
    %4477 = vmatpush1.msra.mxu0 %v3750
    %4478 = vmatprep.subr.mxu0 0.0
    %4479 = vmatpush1.msra.mxu0 %v3755
    %4480 = vmatprep.subr.mxu0 0.0
    %4481 = vmatpush1.msra.mxu0 %v3760
    %4482 = vmatprep.subr.mxu0 0.0
    %4483 = vmatpush1.msra.mxu0 %v3765
    %4484 = vmatprep.subr.mxu0 0.0
    %4485 = vmatpush1.msra.mxu0 %v3770
    %4486 = vmatprep.subr.mxu0 0.0
    %4487 = vmatpush1.msra.mxu0 %v3775
    %4488 = vmatprep.subr.mxu0 0.0
    %4489 = vmatpush1.msra.mxu0 %v3780
    %4490 = vmatprep.subr.mxu0 0.0
    %4491 = vmatpush1.msra.mxu0 %v3785
    %4492 = vmatprep.subr.mxu0 0.0
    %4493 = vmatpush1.msra.mxu0 %v3790
    %4494 = vmatprep.subr.mxu0 0.0
    %4495 = vmatpush1.msra.mxu0 %v3795
    %4496 = vmatprep.subr.mxu0 0.0
    %4497 = vmatpush1.msra.mxu0 %v3800
    %4498 = vmatprep.subr.mxu0 0.0
    %4499 = vmatpush1.msra.mxu0 %v3805
    %4500 = vmatprep.subr.mxu0 0.0
    %4501 = vmatpush1.msra.mxu0 %v3810
    %4502 = vmatprep.subr.mxu0 0.0
    %4503 = vmatpush1.msra.mxu0 %v3815
    %4504 = vmatprep.subr.mxu0 0.0
    %4505 = vmatpush1.msra.mxu0 %v3820
    %4506 = vmatprep.subr.mxu0 0.0
    %4507 = vmatpush1.msra.mxu0 %v3825
    %4508 = vmatprep.subr.mxu0 0.0
    %4509 = vmatpush1.msra.mxu0 %v3830
    %4510 = vmatprep.subr.mxu0 0.0
    %4511 = vmatpush1.msra.mxu0 %v3835
    %4512 = vmatprep.subr.mxu0 0.0
    %4513 = vmatpush1.msra.mxu0 %v3840
    %4514 = vmatprep.subr.mxu0 0.0
    %4515 = vmatpush1.msra.mxu0 %v3845
    %4516 = vmatprep.subr.mxu0 0.0
    %4517 = vmatpush1.msra.mxu0 %v3850
    %4518 = vmatprep.mubr.f32.mxu0 %v3529
    %4519 = vmatmul.mubr.f32.gmra.mrb[0].mxu0 %v3528
    %v4520 = vpop.f32.mrb[0].mxu0
    %v4521 = vadd.f32 %v4451, %v4520
    %v4522 = vpop.f32.mrb[0].mxu0
    %4523 = vdwg.mxu0
    %4524 = vmatprep.subr.mxu0 0.0
    %4525 = vmatpush1.msra.mxu0 %v3855
    %4526 = vmatprep.subr.mxu0 0.0
    %4527 = vmatpush1.msra.mxu0 %v3860
    %4528 = vmatprep.subr.mxu0 0.0
    %4529 = vmatpush1.msra.mxu0 %v3865
    %4530 = vmatprep.subr.mxu0 0.0
    %4531 = vmatpush1.msra.mxu0 %v3870
    %4532 = vmatprep.subr.mxu0 0.0
    %4533 = vmatpush1.msra.mxu0 %v3875
    %4534 = vmatprep.subr.mxu0 0.0
    %4535 = vmatpush1.msra.mxu0 %v3880
    %4536 = vmatprep.subr.mxu0 0.0
    %4537 = vmatpush1.msra.mxu0 %v3885
    %4538 = vmatprep.subr.mxu0 0.0
    %4539 = vmatpush1.msra.mxu0 %v3890
    %4540 = vmatprep.subr.mxu0 0.0
    %4541 = vmatpush1.msra.mxu0 %v3895
    %4542 = vmatprep.subr.mxu0 0.0
    %4543 = vmatpush1.msra.mxu0 %v3900
    %4544 = vmatprep.subr.mxu0 0.0
    %4545 = vmatpush1.msra.mxu0 %v3905
    %4546 = vmatprep.subr.mxu0 0.0
    %4547 = vmatpush1.msra.mxu0 %v3910
    %4548 = vmatprep.subr.mxu0 0.0
    %4549 = vmatpush1.msra.mxu0 %v3915
    %4550 = vmatprep.subr.mxu0 0.0
    %4551 = vmatpush1.msra.mxu0 %v3920
    %4552 = vmatprep.subr.mxu0 0.0
    %4553 = vmatpush1.msra.mxu0 %v3925
    %4554 = vmatprep.subr.mxu0 0.0
    %4555 = vmatpush1.msra.mxu0 %v3930
    %4556 = vmatprep.subr.mxu0 0.0
    %4557 = vmatpush1.msra.mxu0 0.0
    %4558 = vmatprep.subr.mxu0 0.0
    %4559 = vmatpush1.msra.mxu0 0.0
    %4560 = vmatprep.subr.mxu0 0.0
    %4561 = vmatpush1.msra.mxu0 0.0
    %4562 = vmatprep.subr.mxu0 0.0
    %4563 = vmatpush1.msra.mxu0 0.0
    %4564 = vmatprep.subr.mxu0 0.0
    %4565 = vmatpush1.msra.mxu0 0.0
    %4566 = vmatprep.subr.mxu0 0.0
    %4567 = vmatpush1.msra.mxu0 0.0
    %4568 = vmatprep.subr.mxu0 0.0
    %4569 = vmatpush1.msra.mxu0 0.0
    %4570 = vmatprep.subr.mxu0 0.0
    %4571 = vmatpush1.msra.mxu0 0.0
    %4572 = vmatprep.subr.mxu0 0.0
    %4573 = vmatpush1.msra.mxu0 0.0
    %4574 = vmatprep.subr.mxu0 0.0
    %4575 = vmatpush1.msra.mxu0 0.0
    %4576 = vmatprep.subr.mxu0 0.0
    %4577 = vmatpush1.msra.mxu0 0.0
    %4578 = vmatprep.subr.mxu0 0.0
    %4579 = vmatpush1.msra.mxu0 0.0
    %4580 = vmatprep.subr.mxu0 0.0
    %4581 = vmatpush1.msra.mxu0 0.0
    %4582 = vmatprep.subr.mxu0 0.0
    %4583 = vmatpush1.msra.mxu0 0.0
    %4584 = vmatprep.subr.mxu0 0.0
    %4585 = vmatpush1.msra.mxu0 0.0
    %4586 = vmatprep.subr.mxu0 0.0
    %4587 = vmatpush1.msra.mxu0 0.0
    %4588 = vmatprep.mubr.f32.mxu0 0.0
    %4589 = vmatmul.mubr.f32.gmra.mrb[0].mxu0 %v3530
    %v4590 = vpop.f32.mrb[0].mxu0
    %v4591 = vadd.f32 %v4521, %v4590
    %v4592 = vpop.f32.mrb[0].mxu0
    %4593 = vdwg.mxu0
    %v4594 = vmax.f32 %v4167, 0.0
    %v4595 = vmax.f32 %v4169, 0.0
    %v4596 = vmax.f32 %v4380, 0.0
    %v4597 = vmax.f32 %v4382, 0.0
    %v4598 = vmax.f32 %v4591, 0.0
    %v4599 = vld [vmem:[#allocation16] sm:$0xff]
    %v4600 = vld [vmem:[#allocation16 + $0x8] sm:$0xff]
    %v4601 = vld [vmem:[#allocation16 + $0x10] sm:$0xff]
    %v4602 = vld [vmem:[#allocation16 + $0x18] sm:$0xff]
    %v4603 = vld [vmem:[#allocation16 + $0x20] sm:$0xff]
    %v4604 = vld [vmem:[#allocation16 + $0x28] sm:$0xff]
    %v4605 = vld [vmem:[#allocation16 + $0x30] sm:$0xff]
    %v4606 = vld [vmem:[#allocation16 + $0x38] sm:$0xff]
    %v4607 = vld [vmem:[#allocation16 + $0x40] sm:$0xff]
    %v4608 = vld [vmem:[#allocation16 + $0x48] sm:$0xff]
    %v4609 = vld [vmem:[#allocation16 + $0x50] sm:$0xff]
    %v4610 = vld [vmem:[#allocation16 + $0x58] sm:$0xff]
    %v4611 = vld [vmem:[#allocation16 + $0x60] sm:$0xff]
    %v4612 = vld [vmem:[#allocation16 + $0x68] sm:$0xff]
    %v4613 = vld [vmem:[#allocation16 + $0x70] sm:$0xff]
    %v4614 = vld [vmem:[#allocation16 + $0x78] sm:$0xff]
    %v4615 = vld [vmem:[#allocation16 + $0x80] sm:$0xff]
    %v4616 = vld [vmem:[#allocation16 + $0x88] sm:$0xff]
    %v4617 = vld [vmem:[#allocation16 + $0x90] sm:$0xff]
    %v4618 = vld [vmem:[#allocation16 + $0x98] sm:$0xff]
    %v4619 = vld [vmem:[#allocation16 + $0xa0] sm:$0xff]
    %v4620 = vld [vmem:[#allocation16 + $0xa8] sm:$0xff]
    %v4621 = vld [vmem:[#allocation16 + $0xb0] sm:$0xff]
    %v4622 = vld [vmem:[#allocation16 + $0xb8] sm:$0xff]
    %v4623 = vld [vmem:[#allocation16 + $0xc0] sm:$0xff]
    %v4624 = vld [vmem:[#allocation16 + $0xc8] sm:$0xff]
    %v4625 = vld [vmem:[#allocation16 + $0xd0] sm:$0xff]
    %v4626 = vld [vmem:[#allocation16 + $0xd8] sm:$0xff]
    %v4627 = vld [vmem:[#allocation16 + $0xe0] sm:$0xff]
    %v4628 = vld [vmem:[#allocation16 + $0xe8] sm:$0xff]
    %v4629 = vld [vmem:[#allocation16 + $0xf0] sm:$0xff]
    %v4630 = vld [vmem:[#allocation16 + $0xf8] sm:$0xff]
    %v4631 = vld [vmem:[#allocation16 + $0x100] sm:$0xff]
    %v4632 = vld [vmem:[#allocation16 + $0x108] sm:$0xff]
    %v4633 = vld [vmem:[#allocation16 + $0x110] sm:$0xff]
    %v4634 = vld [vmem:[#allocation16 + $0x118] sm:$0xff]
    %v4635 = vld [vmem:[#allocation16 + $0x120] sm:$0xff]
    %v4636 = vld [vmem:[#allocation16 + $0x128] sm:$0xff]
    %v4637 = vld [vmem:[#allocation16 + $0x130] sm:$0xff]
    %v4638 = vld [vmem:[#allocation16 + $0x138] sm:$0xff]
    %v4639 = vld [vmem:[#allocation16 + $0x140] sm:$0xff]
    %v4640 = vld [vmem:[#allocation16 + $0x148] sm:$0xff]
    %v4641 = vld [vmem:[#allocation16 + $0x150] sm:$0xff]
    %v4642 = vld [vmem:[#allocation16 + $0x158] sm:$0xff]
    %v4643 = vld [vmem:[#allocation16 + $0x160] sm:$0xff]
    %v4644 = vld [vmem:[#allocation16 + $0x168] sm:$0xff]
    %v4645 = vld [vmem:[#allocation16 + $0x170] sm:$0xff]
    %v4646 = vld [vmem:[#allocation16 + $0x178] sm:$0xff]
    %v4647 = vld [vmem:[#allocation16 + $0x180] sm:$0xff]
    %v4648 = vld [vmem:[#allocation16 + $0x188] sm:$0xff]
    %v4649 = vld [vmem:[#allocation16 + $0x190] sm:$0xff]
    %v4650 = vld [vmem:[#allocation16 + $0x198] sm:$0xff]
    %v4651 = vld [vmem:[#allocation16 + $0x1a0] sm:$0xff]
    %v4652 = vld [vmem:[#allocation16 + $0x1a8] sm:$0xff]
    %v4653 = vld [vmem:[#allocation16 + $0x1b0] sm:$0xff]
    %v4654 = vld [vmem:[#allocation16 + $0x1b8] sm:$0xff]
    %v4655 = vld [vmem:[#allocation16 + $0x1c0] sm:$0xff]
    %v4656 = vld [vmem:[#allocation16 + $0x1c8] sm:$0xff]
    %v4657 = vld [vmem:[#allocation16 + $0x1d0] sm:$0xff]
    %v4658 = vld [vmem:[#allocation16 + $0x1d8] sm:$0xff]
    %v4659 = vld [vmem:[#allocation16 + $0x1e0] sm:$0xff]
    %v4660 = vld [vmem:[#allocation16 + $0x1e8] sm:$0xff]
    %v4661 = vld [vmem:[#allocation16 + $0x1f0] sm:$0xff]
    %v4662 = vld [vmem:[#allocation16 + $0x1f8] sm:$0xff]
    %v4663 = vld [vmem:[#allocation16 + $0x200] sm:$0xff]
    %v4664 = vld [vmem:[#allocation16 + $0x208] sm:$0xff]
    %v4665 = vld [vmem:[#allocation16 + $0x210] sm:$0xff]
    %v4666 = vld [vmem:[#allocation16 + $0x218] sm:$0xff]
    %v4667 = vld [vmem:[#allocation16 + $0x220] sm:$0xff]
    %v4668 = vld [vmem:[#allocation16 + $0x228] sm:$0xff]
    %v4669 = vld [vmem:[#allocation16 + $0x230] sm:$0xff]
    %v4670 = vld [vmem:[#allocation16 + $0x238] sm:$0xff]
    %v4671 = vld [vmem:[#allocation16 + $0x240] sm:$0xff]
    %v4672 = vld [vmem:[#allocation16 + $0x248] sm:$0xff]
    %v4673 = vld [vmem:[#allocation16 + $0x250] sm:$0xff]
    %v4674 = vld [vmem:[#allocation16 + $0x258] sm:$0xff]
    %v4675 = vld [vmem:[#allocation16 + $0x260] sm:$0xff]
    %v4676 = vld [vmem:[#allocation16 + $0x268] sm:$0xff]
    %v4677 = vld [vmem:[#allocation16 + $0x270] sm:$0xff]
    %v4678 = vld [vmem:[#allocation16 + $0x278] sm:$0xff]
    %v4679 = vld [vmem:[#allocation16 + $0x280] sm:$0xff]
    %v4680 = vld [vmem:[#allocation16 + $0x288] sm:$0xff]
    %v4681 = vld [vmem:[#allocation16 + $0x290] sm:$0xff]
    %v4682 = vld [vmem:[#allocation16 + $0x298] sm:$0xff]
    %v4683 = vld [vmem:[#allocation16 + $0x2a0] sm:$0xff]
    %v4684 = vld [vmem:[#allocation16 + $0x2a8] sm:$0xff]
    %v4685 = vld [vmem:[#allocation16 + $0x2b0] sm:$0xff]
    %v4686 = vld [vmem:[#allocation16 + $0x2b8] sm:$0xff]
    %v4687 = vld [vmem:[#allocation16 + $0x2c0] sm:$0xff]
    %v4688 = vld [vmem:[#allocation16 + $0x2c8] sm:$0xff]
    %v4689 = vld [vmem:[#allocation16 + $0x2d0] sm:$0xff]
    %v4690 = vld [vmem:[#allocation16 + $0x2d8] sm:$0xff]
    %v4691 = vld [vmem:[#allocation16 + $0x2e0] sm:$0xff]
    %v4692 = vld [vmem:[#allocation16 + $0x2e8] sm:$0xff]
    %v4693 = vld [vmem:[#allocation16 + $0x2f0] sm:$0xff]
    %v4694 = vld [vmem:[#allocation16 + $0x2f8] sm:$0xff]
    %v4695 = vld [vmem:[#allocation16 + $0x300] sm:$0xff]
    %v4696 = vld [vmem:[#allocation16 + $0x308] sm:$0xff]
    %v4697 = vld [vmem:[#allocation16 + $0x310] sm:$0xff]
    %v4698 = vld [vmem:[#allocation16 + $0x318] sm:$0xff]
    %v4699 = vld [vmem:[#allocation16 + $0x320] sm:$0xff]
    %v4700 = vld [vmem:[#allocation16 + $0x328] sm:$0xff]
    %v4701 = vld [vmem:[#allocation16 + $0x330] sm:$0xff]
    %v4702 = vld [vmem:[#allocation16 + $0x338] sm:$0xff]
    %v4703 = vld [vmem:[#allocation16 + $0x340] sm:$0xff]
    %v4704 = vld [vmem:[#allocation16 + $0x348] sm:$0xff]
    %v4705 = vld [vmem:[#allocation16 + $0x350] sm:$0xff]
    %v4706 = vld [vmem:[#allocation16 + $0x358] sm:$0xff]
    %v4707 = vld [vmem:[#allocation16 + $0x360] sm:$0xff]
    %v4708 = vld [vmem:[#allocation16 + $0x368] sm:$0xff]
    %v4709 = vld [vmem:[#allocation16 + $0x370] sm:$0xff]
    %v4710 = vld [vmem:[#allocation16 + $0x378] sm:$0xff]
    %v4711 = vld [vmem:[#allocation16 + $0x380] sm:$0xff]
    %v4712 = vld [vmem:[#allocation16 + $0x388] sm:$0xff]
    %v4713 = vld [vmem:[#allocation16 + $0x390] sm:$0xff]
    %v4714 = vld [vmem:[#allocation16 + $0x398] sm:$0xff]
    %v4715 = vld [vmem:[#allocation16 + $0x3a0] sm:$0xff]
    %v4716 = vld [vmem:[#allocation16 + $0x3a8] sm:$0xff]
    %v4717 = vld [vmem:[#allocation16 + $0x3b0] sm:$0xff]
    %v4718 = vld [vmem:[#allocation16 + $0x3b8] sm:$0xff]
    %v4719 = vld [vmem:[#allocation16 + $0x3c0] sm:$0xff]
    %v4720 = vld [vmem:[#allocation16 + $0x3c8] sm:$0xff]
    %v4721 = vld [vmem:[#allocation16 + $0x3d0] sm:$0xff]
    %v4722 = vld [vmem:[#allocation16 + $0x3d8] sm:$0xff]
    %v4723 = vld [vmem:[#allocation16 + $0x3e0] sm:$0xff]
    %v4724 = vld [vmem:[#allocation16 + $0x3e8] sm:$0xff]
    %v4725 = vld [vmem:[#allocation16 + $0x3f0] sm:$0xff]
    %v4726 = vld [vmem:[#allocation16 + $0x3f8] sm:$0xff]
    %v4727 = vld [vmem:[#allocation16 + $0x400] sm:$0xff]
    %v4728 = vld [vmem:[#allocation16 + $0x408] sm:$0xff]
    %v4729 = vld [vmem:[#allocation16 + $0x410] sm:$0xff]
    %v4730 = vld [vmem:[#allocation16 + $0x418] sm:$0xff]
    %v4731 = vld [vmem:[#allocation16 + $0x420] sm:$0xff]
    %v4732 = vld [vmem:[#allocation16 + $0x428] sm:$0xff]
    %v4733 = vld [vmem:[#allocation16 + $0x430] sm:$0xff]
    %v4734 = vld [vmem:[#allocation16 + $0x438] sm:$0xff]
    %v4735 = vld [vmem:[#allocation16 + $0x440] sm:$0xff]
    %v4736 = vld [vmem:[#allocation16 + $0x448] sm:$0xff]
    %v4737 = vld [vmem:[#allocation16 + $0x450] sm:$0xff]
    %v4738 = vld [vmem:[#allocation16 + $0x458] sm:$0xff]
    %v4739 = vld [vmem:[#allocation16 + $0x460] sm:$0xff]
    %v4740 = vld [vmem:[#allocation16 + $0x468] sm:$0xff]
    %v4741 = vld [vmem:[#allocation16 + $0x470] sm:$0xff]
    %v4742 = vld [vmem:[#allocation16 + $0x478] sm:$0xff]
    %v4743 = vld [vmem:[#allocation16 + $0x480] sm:$0xff]
    %v4744 = vld [vmem:[#allocation16 + $0x488] sm:$0xff]
    %v4745 = vld [vmem:[#allocation16 + $0x490] sm:$0xff]
    %v4746 = vld [vmem:[#allocation16 + $0x498] sm:$0xff]
    %v4747 = vld [vmem:[#allocation16 + $0x4a0] sm:$0xff]
    %v4748 = vld [vmem:[#allocation16 + $0x4a8] sm:$0xff]
    %v4749 = vld [vmem:[#allocation16 + $0x4b0] sm:$0xff]
    %v4750 = vld [vmem:[#allocation16 + $0x4b8] sm:$0xff]
    %v4751 = vld [vmem:[#allocation16 + $0x4c0] sm:$0xff]
    %v4752 = vld [vmem:[#allocation16 + $0x4c8] sm:$0xff]
    %v4753 = vld [vmem:[#allocation16 + $0x4d0] sm:$0xff]
    %v4754 = vld [vmem:[#allocation16 + $0x4d8] sm:$0xff]
    %v4755 = vld [vmem:[#allocation16 + $0x4e0] sm:$0xff]
    %v4756 = vld [vmem:[#allocation16 + $0x4e8] sm:$0xff]
    %v4757 = vld [vmem:[#allocation16 + $0x4f0] sm:$0xff]
    %v4758 = vld [vmem:[#allocation16 + $0x4f8] sm:$0xff]
    %v4759 = vld [vmem:[#allocation28] sm:$0x3]
    %v4761 = vlaneseq
    %v4762 = vshrl.u32 %v4761, 7
    %v4763 = vsub.s32 0, %v4762
    %v4764 = vrot.slane %v4759, %v4763
    %v4765 = vlaneseq
    %v4766 = vshrl.u32 %v4765, 7
    %v4767 = vsub.s32 1, %v4766
    %v4768 = vrot.slane %v4759, %v4767
    %4771 = vmatprep.subr.mxu0 %v4600
    %4772 = vmatpush1.msra.mxu0 %v4599
    %4773 = vmatprep.subr.mxu0 %v4602
    %4774 = vmatpush1.msra.mxu0 %v4601
    %4775 = vmatprep.subr.mxu0 %v4604
    %4776 = vmatpush1.msra.mxu0 %v4603
    %4777 = vmatprep.subr.mxu0 %v4606
    %4778 = vmatpush1.msra.mxu0 %v4605
    %4779 = vmatprep.subr.mxu0 %v4608
    %4780 = vmatpush1.msra.mxu0 %v4607
    %4781 = vmatprep.subr.mxu0 %v4610
    %4782 = vmatpush1.msra.mxu0 %v4609
    %4783 = vmatprep.subr.mxu0 %v4612
    %4784 = vmatpush1.msra.mxu0 %v4611
    %4785 = vmatprep.subr.mxu0 %v4614
    %4786 = vmatpush1.msra.mxu0 %v4613
    %4787 = vmatprep.subr.mxu0 %v4616
    %4788 = vmatpush1.msra.mxu0 %v4615
    %4789 = vmatprep.subr.mxu0 %v4618
    %4790 = vmatpush1.msra.mxu0 %v4617
    %4791 = vmatprep.subr.mxu0 %v4620
    %4792 = vmatpush1.msra.mxu0 %v4619
    %4793 = vmatprep.subr.mxu0 %v4622
    %4794 = vmatpush1.msra.mxu0 %v4621
    %4795 = vmatprep.subr.mxu0 %v4624
    %4796 = vmatpush1.msra.mxu0 %v4623
    %4797 = vmatprep.subr.mxu0 %v4626
    %4798 = vmatpush1.msra.mxu0 %v4625
    %4799 = vmatprep.subr.mxu0 %v4628
    %4800 = vmatpush1.msra.mxu0 %v4627
    %4801 = vmatprep.subr.mxu0 %v4630
    %4802 = vmatpush1.msra.mxu0 %v4629
    %4803 = vmatprep.subr.mxu0 %v4632
    %4804 = vmatpush1.msra.mxu0 %v4631
    %4805 = vmatprep.subr.mxu0 %v4634
    %4806 = vmatpush1.msra.mxu0 %v4633
    %4807 = vmatprep.subr.mxu0 %v4636
    %4808 = vmatpush1.msra.mxu0 %v4635
    %4809 = vmatprep.subr.mxu0 %v4638
    %4810 = vmatpush1.msra.mxu0 %v4637
    %4811 = vmatprep.subr.mxu0 %v4640
    %4812 = vmatpush1.msra.mxu0 %v4639
    %4813 = vmatprep.subr.mxu0 %v4642
    %4814 = vmatpush1.msra.mxu0 %v4641
    %4815 = vmatprep.subr.mxu0 %v4644
    %4816 = vmatpush1.msra.mxu0 %v4643
    %4817 = vmatprep.subr.mxu0 %v4646
    %4818 = vmatpush1.msra.mxu0 %v4645
    %4819 = vmatprep.subr.mxu0 %v4648
    %4820 = vmatpush1.msra.mxu0 %v4647
    %4821 = vmatprep.subr.mxu0 %v4650
    %4822 = vmatpush1.msra.mxu0 %v4649
    %4823 = vmatprep.subr.mxu0 %v4652
    %4824 = vmatpush1.msra.mxu0 %v4651
    %4825 = vmatprep.subr.mxu0 %v4654
    %4826 = vmatpush1.msra.mxu0 %v4653
    %4827 = vmatprep.subr.mxu0 %v4656
    %4828 = vmatpush1.msra.mxu0 %v4655
    %4829 = vmatprep.subr.mxu0 %v4658
    %4830 = vmatpush1.msra.mxu0 %v4657
    %4831 = vmatprep.subr.mxu0 %v4660
    %4832 = vmatpush1.msra.mxu0 %v4659
    %4833 = vmatprep.subr.mxu0 %v4662
    %4834 = vmatpush1.msra.mxu0 %v4661
    %4835 = vmatprep.mubr.f32.mxu0 %v4595
    %4836 = vmatmul.mubr.f32.gmra.mrb[0].mxu0 %v4594
    %v4837 = vpop.f32.mrb[0].mxu0
    %v4838 = vadd.f32 %v4764, %v4837
    %v4839 = vpop.f32.mrb[0].mxu0
    %v4840 = vadd.f32 %v4768, %v4839
    %4841 = vdwg.mxu0
    %4842 = vmatprep.subr.mxu0 %v4664
    %4843 = vmatpush1.msra.mxu0 %v4663
    %4844 = vmatprep.subr.mxu0 %v4666
    %4845 = vmatpush1.msra.mxu0 %v4665
    %4846 = vmatprep.subr.mxu0 %v4668
    %4847 = vmatpush1.msra.mxu0 %v4667
    %4848 = vmatprep.subr.mxu0 %v4670
    %4849 = vmatpush1.msra.mxu0 %v4669
    %4850 = vmatprep.subr.mxu0 %v4672
    %4851 = vmatpush1.msra.mxu0 %v4671
    %4852 = vmatprep.subr.mxu0 %v4674
    %4853 = vmatpush1.msra.mxu0 %v4673
    %4854 = vmatprep.subr.mxu0 %v4676
    %4855 = vmatpush1.msra.mxu0 %v4675
    %4856 = vmatprep.subr.mxu0 %v4678
    %4857 = vmatpush1.msra.mxu0 %v4677
    %4858 = vmatprep.subr.mxu0 %v4680
    %4859 = vmatpush1.msra.mxu0 %v4679
    %4860 = vmatprep.subr.mxu0 %v4682
    %4861 = vmatpush1.msra.mxu0 %v4681
    %4862 = vmatprep.subr.mxu0 %v4684
    %4863 = vmatpush1.msra.mxu0 %v4683
    %4864 = vmatprep.subr.mxu0 %v4686
    %4865 = vmatpush1.msra.mxu0 %v4685
    %4866 = vmatprep.subr.mxu0 %v4688
    %4867 = vmatpush1.msra.mxu0 %v4687
    %4868 = vmatprep.subr.mxu0 %v4690
    %4869 = vmatpush1.msra.mxu0 %v4689
    %4870 = vmatprep.subr.mxu0 %v4692
    %4871 = vmatpush1.msra.mxu0 %v4691
    %4872 = vmatprep.subr.mxu0 %v4694
    %4873 = vmatpush1.msra.mxu0 %v4693
    %4874 = vmatprep.subr.mxu0 %v4696
    %4875 = vmatpush1.msra.mxu0 %v4695
    %4876 = vmatprep.subr.mxu0 %v4698
    %4877 = vmatpush1.msra.mxu0 %v4697
    %4878 = vmatprep.subr.mxu0 %v4700
    %4879 = vmatpush1.msra.mxu0 %v4699
    %4880 = vmatprep.subr.mxu0 %v4702
    %4881 = vmatpush1.msra.mxu0 %v4701
    %4882 = vmatprep.subr.mxu0 %v4704
    %4883 = vmatpush1.msra.mxu0 %v4703
    %4884 = vmatprep.subr.mxu0 %v4706
    %4885 = vmatpush1.msra.mxu0 %v4705
    %4886 = vmatprep.subr.mxu0 %v4708
    %4887 = vmatpush1.msra.mxu0 %v4707
    %4888 = vmatprep.subr.mxu0 %v4710
    %4889 = vmatpush1.msra.mxu0 %v4709
    %4890 = vmatprep.subr.mxu0 %v4712
    %4891 = vmatpush1.msra.mxu0 %v4711
    %4892 = vmatprep.subr.mxu0 %v4714
    %4893 = vmatpush1.msra.mxu0 %v4713
    %4894 = vmatprep.subr.mxu0 %v4716
    %4895 = vmatpush1.msra.mxu0 %v4715
    %4896 = vmatprep.subr.mxu0 %v4718
    %4897 = vmatpush1.msra.mxu0 %v4717
    %4898 = vmatprep.subr.mxu0 %v4720
    %4899 = vmatpush1.msra.mxu0 %v4719
    %4900 = vmatprep.subr.mxu0 %v4722
    %4901 = vmatpush1.msra.mxu0 %v4721
    %4902 = vmatprep.subr.mxu0 %v4724
    %4903 = vmatpush1.msra.mxu0 %v4723
    %4904 = vmatprep.subr.mxu0 %v4726
    %4905 = vmatpush1.msra.mxu0 %v4725
    %4906 = vmatprep.mubr.f32.mxu0 %v4597
    %4907 = vmatmul.mubr.f32.gmra.mrb[0].mxu0 %v4596
    %v4908 = vpop.f32.mrb[0].mxu0
    %v4909 = vadd.f32 %v4838, %v4908
    %v4910 = vpop.f32.mrb[0].mxu0
    %v4911 = vadd.f32 %v4840, %v4910
    %4912 = vdwg.mxu0
    %4913 = vmatprep.subr.mxu0 %v4728
    %4914 = vmatpush1.msra.mxu0 %v4727
    %4915 = vmatprep.subr.mxu0 %v4730
    %4916 = vmatpush1.msra.mxu0 %v4729
    %4917 = vmatprep.subr.mxu0 %v4732
    %4918 = vmatpush1.msra.mxu0 %v4731
    %4919 = vmatprep.subr.mxu0 %v4734
    %4920 = vmatpush1.msra.mxu0 %v4733
    %4921 = vmatprep.subr.mxu0 %v4736
    %4922 = vmatpush1.msra.mxu0 %v4735
    %4923 = vmatprep.subr.mxu0 %v4738
    %4924 = vmatpush1.msra.mxu0 %v4737
    %4925 = vmatprep.subr.mxu0 %v4740
    %4926 = vmatpush1.msra.mxu0 %v4739
    %4927 = vmatprep.subr.mxu0 %v4742
    %4928 = vmatpush1.msra.mxu0 %v4741
    %4929 = vmatprep.subr.mxu0 %v4744
    %4930 = vmatpush1.msra.mxu0 %v4743
    %4931 = vmatprep.subr.mxu0 %v4746
    %4932 = vmatpush1.msra.mxu0 %v4745
    %4933 = vmatprep.subr.mxu0 %v4748
    %4934 = vmatpush1.msra.mxu0 %v4747
    %4935 = vmatprep.subr.mxu0 %v4750
    %4936 = vmatpush1.msra.mxu0 %v4749
    %4937 = vmatprep.subr.mxu0 %v4752
    %4938 = vmatpush1.msra.mxu0 %v4751
    %4939 = vmatprep.subr.mxu0 %v4754
    %4940 = vmatpush1.msra.mxu0 %v4753
    %4941 = vmatprep.subr.mxu0 %v4756
    %4942 = vmatpush1.msra.mxu0 %v4755
    %4943 = vmatprep.subr.mxu0 %v4758
    %4944 = vmatpush1.msra.mxu0 %v4757
    %4945 = vmatprep.subr.mxu0 0.0
    %4946 = vmatpush1.msra.mxu0 0.0
    %4947 = vmatprep.subr.mxu0 0.0
    %4948 = vmatpush1.msra.mxu0 0.0
    %4949 = vmatprep.subr.mxu0 0.0
    %4950 = vmatpush1.msra.mxu0 0.0
    %4951 = vmatprep.subr.mxu0 0.0
    %4952 = vmatpush1.msra.mxu0 0.0
    %4953 = vmatprep.subr.mxu0 0.0
    %4954 = vmatpush1.msra.mxu0 0.0
    %4955 = vmatprep.subr.mxu0 0.0
    %4956 = vmatpush1.msra.mxu0 0.0
    %4957 = vmatprep.subr.mxu0 0.0
    %4958 = vmatpush1.msra.mxu0 0.0
    %4959 = vmatprep.subr.mxu0 0.0
    %4960 = vmatpush1.msra.mxu0 0.0
    %4961 = vmatprep.subr.mxu0 0.0
    %4962 = vmatpush1.msra.mxu0 0.0
    %4963 = vmatprep.subr.mxu0 0.0
    %4964 = vmatpush1.msra.mxu0 0.0
    %4965 = vmatprep.subr.mxu0 0.0
    %4966 = vmatpush1.msra.mxu0 0.0
    %4967 = vmatprep.subr.mxu0 0.0
    %4968 = vmatpush1.msra.mxu0 0.0
    %4969 = vmatprep.subr.mxu0 0.0
    %4970 = vmatpush1.msra.mxu0 0.0
    %4971 = vmatprep.subr.mxu0 0.0
    %4972 = vmatpush1.msra.mxu0 0.0
    %4973 = vmatprep.subr.mxu0 0.0
    %4974 = vmatpush1.msra.mxu0 0.0
    %4975 = vmatprep.subr.mxu0 0.0
    %4976 = vmatpush1.msra.mxu0 0.0
    %4977 = vmatprep.mubr.f32.mxu0 0.0
    %4978 = vmatmul.mubr.f32.gmra.mrb[0].mxu0 %v4598
    %v4979 = vpop.f32.mrb[0].mxu0
    %v4980 = vadd.f32 %v4909, %v4979
    %v4981 = vpop.f32.mrb[0].mxu0
    %v4982 = vadd.f32 %v4911, %v4981
    %4983 = vdwg.mxu0
    %v4984 = vmax.f32 %v4980, 0.0
    %v4985 = vmax.f32 %v4982, 0.0
    %4986 = vst [vmem:[#allocation30] sm:$0xff] %v4984
    %4987 = vst [vmem:[#allocation30 + $0x8] sm:$0xff] %v4985
    // Predicated region
    $region138: #{tpu_custom_call.1} parent=1 // pred_check
      _
    $region139: #{tpu_custom_call.1} parent=1 // pred_check_branch
      %4989 = sbr.rel (0) target = $region141
    $region140: #{tpu_custom_call.1} parent=1 // pred_region
      %s4991 = ssub.s32 128, 128
      %4992 = vsyncadd [#allocation4], %s4991
      %s4994 = sshll.u32 [#allocation29], 4
      %s4995 = int_to_ptr.vmem [resolvable:$true] %s4994
      %4997 = dma.vmem_to_hbm [thread:$0]  %s4995, 128, %s17, [#allocation4]
    $region141: #{tpu_custom_call.1} parent=1 // pred_fallthru
      _
    // Predicated region
    $region142: #{tpu_custom_call.1} parent=1 // pred_check
      _
    $region143: #{tpu_custom_call.1} parent=1 // pred_check_branch
      %4999 = sbr.rel (0) target = $region145
    $region144: #{tpu_custom_call.1} parent=1 // pred_region
      %s5001 = ssub.s32 256, 256
      %5002 = vsyncadd [#allocation31], %s5001
      %s5004 = sshll.u32 [#allocation30], 4
      %s5005 = int_to_ptr.vmem [resolvable:$true] %s5004
      %5007 = dma.vmem_to_hbm [thread:$0]  %s5005, 256, %s18, [#allocation31]
    $region145: #{tpu_custom_call.1} parent=1 // pred_fallthru
      _
    // Predicated region
    $region146: #{tpu_custom_call.1} parent=1 // pred_check
      _
    $region147: #{tpu_custom_call.1} parent=1 // pred_check_branch
      %5009 = sbr.rel (0) target = $region149
    $region148: #{tpu_custom_call.1} parent=1 // pred_region
      %5010 = dma.done [#allocation4], 128
    $region149: #{tpu_custom_call.1} parent=1 // pred_fallthru
      _
    // Predicated region
    $region150: #{tpu_custom_call.1} parent=1 // pred_check
      _
    $region151: #{tpu_custom_call.1} parent=1 // pred_check_branch
      %5012 = sbr.rel (0) target = $region153
    $region152: #{tpu_custom_call.1} parent=1 // pred_region
      %5013 = dma.done [#allocation31], 256
    $region153: #{tpu_custom_call.1} parent=1 // pred_fallthru
      _
    %5014 = vsyncpa [#allocation3], 1
    %5015 = vsyncpa [#allocation6], 1
    %5016 = vsyncpa [#allocation9], 1
    %5017 = vsyncpa [#allocation12], 1
    %5018 = vsyncpa [#allocation15], 1
    %5019 = vsyncpa [#allocation18], 1
    %5020 = vsyncpa [#allocation21], 1
    %5021 = vsyncpa [#allocation24], 1
    %5022 = vsyncpa [#allocation27], 1
    %5023 = vsyncpa [#allocation4], 1
    %5024 = vsyncpa [#allocation31], 1

</llo_original>
